<compile_context>
chip_gen: v5e
topology: v5e:2x2
jax: 0.10.0
libtpu: 0.0.40
codegen_flags: <defaults>
</compile_context>

<pallas_src>
import functools

import jax
import jax.numpy as jnp
from jax.experimental import pallas as pl
from jax.experimental.pallas import tpu as pltpu


def _vmem_limit_bytes():
    """Per-generation scoped-VMEM limit: ~96 MiB on 128-MiB chips (v5e/v6e),
    ~48 MiB on v7x (64 MiB / TensorCore).  Safe fallback: 48 MiB."""
    try:
        cap = pltpu.get_tpu_info().vmem_capacity_bytes
    except Exception:
        cap = 64 * 1024 * 1024
    return min(int(cap) * 3 // 4, 100 * 1024 * 1024)


def _pick_tile_h(H, W, Cin, Cout, budget_bytes):
    """Largest H-tile dividing H whose per-grid-step VMEM footprint fits budget."""
    candidates = [c for c in (512, 256, 128, 64, 32, 16, 8) if H % c == 0]
    for th in candidates:
        est = 4 * (
            2 * th * W * Cin           # double-buffered body input
            + 4 * W * Cin              # halo rows (2 streams x 2 buffers)
            + 2 * 9 * Cin * Cout       # double-buffered weight
            + 2 * th * W * Cout        # double-buffered conv output
            + 4 * (th + 2) * W * Cin   # xb + two W-shifted copies (temporaries)
            + 2 * th * W * Cout        # accumulator + output cast temp
        )
        if est <= budget_bytes:
            return th
    return candidates[-1] if candidates else H


# -----------------------------------------------------------------------------
# Kernel 1: [optional fused BN+ReLU on the input] -> 3x3 conv (no bias) as nine
# accumulated per-tap MXU matmuls -> per-tile partial batch statistics.
# -----------------------------------------------------------------------------
def _conv3x3_kernel(*refs, TH, W, Cin, Cout, fuse_in_bn_relu, compute_dtype):
    if fuse_in_bn_relu:
        top_ref, mid_ref, bot_ref, w_ref, sc_ref, sh_ref, y_ref, st_ref = refs
    else:
        top_ref, mid_ref, bot_ref, w_ref, y_ref, st_ref = refs
        sc_ref = sh_ref = None

    i = pl.program_id(1)
    last = pl.num_programs(1) - 1

    def prologue(v):
        v = v.astype(jnp.float32)
        if fuse_in_bn_relu:            # fold previous layer's BN + ReLU into the load path
            scale = sc_ref[...].reshape(1, 1, Cin)
            shift = sh_ref[...].reshape(1, 1, Cin)
            v = jnp.maximum(v * scale + shift, 0.0)
        return v

    mid = prologue(mid_ref[0])                                     # (TH, W, Cin)
    # Halo rows are real activation rows (BN/ReLU first), then zeroed when they
    # correspond to the conv's zero padding at the image border.
    top = prologue(top_ref[0]) * (i > 0).astype(jnp.float32)       # (1, W, Cin)
    bot = prologue(bot_ref[0]) * (i < last).astype(jnp.float32)    # (1, W, Cin)
    xb = jnp.concatenate([top, mid, bot], axis=0)                  # (TH+2, W, Cin)

    # Two W-shifted copies for the dx=0 / dx=2 taps ("same" padding in W).
    # (pltpu.roll + border mask is the XLU alternative; slices keep it simple.)
    zc = jnp.zeros((TH + 2, 1, Cin), jnp.float32)
    x_m1 = jnp.concatenate([zc, xb[:, :W - 1, :]], axis=1)         # x[h, w-1], 0 @ w=0
    x_p1 = jnp.concatenate([xb[:, 1:, :], zc], axis=1)             # x[h, w+1], 0 @ w=W-1
    flat = [s.reshape((TH + 2) * W, Cin).astype(compute_dtype)
            for s in (x_m1, xb, x_p1)]                             # dx = 0, 1, 2

    # Nine accumulated MXU matmuls (K = Cin each, f32 accumulation).  The dy
    # shift is an 8-aligned row slice of the flattened tile (W % 8 == 0 case).
    acc = jnp.zeros((TH * W, Cout), jnp.float32)
    for dy in range(3):
        for dx in range(3):
            tap = flat[dx][dy * W: dy * W + TH * W]                # (TH*W, Cin)
            acc = acc + jnp.dot(tap, w_ref[3 * dy + dx].astype(compute_dtype),
                                preferred_element_type=jnp.float32)

    # Partial BatchNorm statistics (reduced across the grid in the wrapper).
    st_ref[0, 0, 0:1, :] = jnp.sum(acc, axis=0, keepdims=True)       # (1, Cout)
    st_ref[0, 0, 1:2, :] = jnp.sum(acc * acc, axis=0, keepdims=True)  # (1, Cout)

    y_ref[0] = acc.reshape(TH, W, Cout).astype(y_ref.dtype)


def _conv3x3(x, w9, scale=None, shift=None, *, tile_h, vmem_limit,
             out_dtype=jnp.float32, compute_dtype=jnp.float32):
    """y = conv3x3(optionally BN+ReLU(x)); also returns per-tile (sum, sumsq) stats."""
    N, H, W, Cin = x.shape
    Cout = w9.shape[-1]
    TH = tile_h
    assert H % TH == 0, (H, TH)
    n_tiles = H // TH
    fuse = scale is not None

    kern = functools.partial(
        _conv3x3_kernel, TH=TH, W=W, Cin=Cin, Cout=Cout,
        fuse_in_bn_relu=fuse, compute_dtype=compute_dtype)

    def top_map(n, i):   # last row of the tile above (clamped; masked in-kernel)
        return (n, jnp.maximum(i * TH - 1, 0), 0, 0)

    def bot_map(n, i):   # first row of the tile below (clamped; masked in-kernel)
        return (n, jnp.minimum(i * TH + TH, H - 1), 0, 0)

    in_specs = [
        pl.BlockSpec((1, 1, W, Cin), top_map),                      # H-halo (top)
        pl.BlockSpec((1, TH, W, Cin), lambda n, i: (n, i, 0, 0)),   # tile body
        pl.BlockSpec((1, 1, W, Cin), bot_map),                      # H-halo (bottom)
        pl.BlockSpec((9, Cin, Cout), lambda n, i: (0, 0, 0)),       # per-tap weights
    ]
    args = [x, x, x, w9]
    if fuse:                       # conv1 variant skips these two per-step DMAs
        in_specs += [pl.BlockSpec((1, Cin), lambda n, i: (0, 0)),   # fused BN scale
                     pl.BlockSpec((1, Cin), lambda n, i: (0, 0))]   # fused BN shift
        args += [scale, shift]

    return pl.pallas_call(
        kern,
        out_shape=(
            jax.ShapeDtypeStruct((N, H, W, Cout), out_dtype),
            jax.ShapeDtypeStruct((N, n_tiles, 2, Cout), jnp.float32),
        ),
        grid=(N, n_tiles),
        in_specs=in_specs,
        out_specs=(
            pl.BlockSpec((1, TH, W, Cout), lambda n, i: (n, i, 0, 0)),
            pl.BlockSpec((1, 1, 2, Cout), lambda n, i: (n, i, 0, 0)),
        ),
        compiler_params=pltpu.CompilerParams(
            dimension_semantics=("parallel", "parallel"),
            vmem_limit_bytes=vmem_limit),
    )(*args)


# -----------------------------------------------------------------------------
# Kernel 2: final BatchNorm (precomputed scale/shift) + ReLU, tiled & pipelined.
# -----------------------------------------------------------------------------
def _bn_relu_kernel(y_ref, sc_ref, sh_ref, o_ref):
    C = y_ref.shape[-1]
    y = y_ref[...].astype(jnp.float32)                   # (1, TH, W, C)
    scale = sc_ref[...].reshape(1, 1, 1, C)
    shift = sh_ref[...].reshape(1, 1, 1, C)
    o_ref[...] = jnp.maximum(y * scale + shift, 0.0).astype(o_ref.dtype)


def _bn_relu(y, scale, shift, *, tile_h, vmem_limit):
    N, H, W, C = y.shape
    TH = tile_h
    assert H % TH == 0, (H, TH)
    n_tiles = H // TH
    return pl.pallas_call(
        _bn_relu_kernel,
        out_shape=jax.ShapeDtypeStruct((N, H, W, C), jnp.float32),
        grid=(N, n_tiles),
        in_specs=[
            pl.BlockSpec((1, TH, W, C), lambda n, i: (n, i, 0, 0)),
            pl.BlockSpec((1, C), lambda n, i: (0, 0)),
            pl.BlockSpec((1, C), lambda n, i: (0, 0)),
        ],
        out_specs=pl.BlockSpec((1, TH, W, C), lambda n, i: (n, i, 0, 0)),
        compiler_params=pltpu.CompilerParams(
            dimension_semantics=("parallel", "parallel"),
            vmem_limit_bytes=vmem_limit),
    )(y, scale, shift)


def _bn_scale_shift(stats, count, gamma, beta, eps):
    """Fold per-tile (sum, sumsq) into per-channel BN scale/shift (train-mode, biased var)."""
    # TODO(synk): sum/sumsq in f32 can lose precision for huge N*H*W; a shifted
    # (per-tile-mean-centered) accumulation would tighten tolerances if needed.
    s = jnp.sum(stats, axis=(0, 1))                      # (2, C): [sum, sumsq]
    mean = s[0] / count
    var = s[1] / count - mean * mean                     # biased variance
    scale = gamma.astype(jnp.float32) * jax.lax.rsqrt(var + eps)
    shift = beta.astype(jnp.float32) - mean * scale
    return scale.reshape(1, -1), shift.reshape(1, -1)


# -----------------------------------------------------------------------------
# UnetConvBlock forward: conv -> BN -> ReLU -> conv -> BN -> ReLU  (NCHW in/out)
# -----------------------------------------------------------------------------
def unet_conv_block(x_nchw, params, eps=1e-5, *,
                    compute_dtype=jnp.float32,        # bf16 for v6e/v7x throughput
                    intermediate_dtype=jnp.float32):  # bf16 halves y1 HBM traffic
    x = jnp.transpose(x_nchw, (0, 2, 3, 1)).astype(jnp.float32)    # NCHW -> NHWC
    N, H, W, Cin = x.shape
    Cout = params["w1"].shape[-1]
    count = jnp.float32(N * H * W)

    vmem_limit = _vmem_limit_bytes()
    budget = vmem_limit // 2
    th1 = _pick_tile_h(H, W, Cin, Cout, budget)
    th2 = _pick_tile_h(H, W, Cout, Cout, budget)

    # HWIO -> per-tap weight layout (9, Cin, Cout); tiny host/XLA-side reshape.
    w_store = compute_dtype if compute_dtype != jnp.float32 else jnp.float32
    w1 = params["w1"].astype(w_store).reshape(9, Cin, Cout)
    w2 = params["w2"].astype(w_store).reshape(9, Cout, Cout)

    # conv1 (+ fused partial BN1 statistics); no dummy scale/shift inputs.
    y1, st1 = _conv3x3(x, w1, tile_h=th1, vmem_limit=vmem_limit,
                       out_dtype=intermediate_dtype, compute_dtype=compute_dtype)
    sc1, sh1 = _bn_scale_shift(st1, count, params["g1"], params["b1"], eps)

    # BN1 + ReLU1 folded into conv2's load path (no standalone full-tensor BN1
    # pass); conv2 again emits partial BN2 statistics.
    y2, st2 = _conv3x3(y1, w2, sc1, sh1, tile_h=th2, vmem_limit=vmem_limit,
                       out_dtype=jnp.float32, compute_dtype=compute_dtype)
    sc2, sh2 = _bn_scale_shift(st2, count, params["g2"], params["b2"], eps)

    # Final BN2 + ReLU2 (tiled, pipelined elementwise pass).
    out = _bn_relu(y2, sc2, sh2, tile_h=th2, vmem_limit=vmem_limit)
    return jnp.transpose(out, (0, 3, 1, 2))                         # NHWC -> NCHW


# -----------------------------------------------------------------------------
# Pure-JAX reference (correctness check only)
# -----------------------------------------------------------------------------
def _reference(x_nchw, params, eps=1e-5):
    x = jnp.transpose(x_nchw, (0, 2, 3, 1))

    def conv(v, w):
        return jax.lax.conv_general_dilated(
            v, w, (1, 1), "SAME", dimension_numbers=("NHWC", "HWIO", "NHWC"))

    def bn_relu(v, g, b):
        mean = jnp.mean(v, axis=(0, 1, 2), keepdims=True)
        var = jnp.mean((v - mean) ** 2, axis=(0, 1, 2), keepdims=True)
        return jnp.maximum((v - mean) * jax.lax.rsqrt(var + eps) * g + b, 0.0)

    y = bn_relu(conv(x, params["w1"]), params["g1"], params["b1"])
    y = bn_relu(conv(y, params["w2"]), params["g2"], params["b2"])
    return jnp.transpose(y, (0, 3, 1, 2))


if __name__ == "__main__":
    key = jax.random.PRNGKey(0)
    N, Cin, Cout, H, W = 2, 4, 8, 16, 16

    k_x, k_w1, k_w2 = jax.random.split(key, 3)
    x = jax.random.normal(k_x, (N, Cin, H, W), jnp.float32)

    # Deterministic conv weight init (kaiming-uniform-like scale), HWIO layout.
    bound1 = 1.0 / jnp.sqrt(jnp.float32(Cin * 9))
    w1 = jax.random.uniform(k_w1, (3, 3, Cin, Cout), jnp.float32, -bound1, bound1)
    bound2 = 1.0 / jnp.sqrt(jnp.float32(Cout * 9))
    w2 = jax.random.uniform(k_w2, (3, 3, Cout, Cout), jnp.float32, -bound2, bound2)

    params = dict(
        w1=w1, g1=jnp.ones((Cout,), jnp.float32), b1=jnp.zeros((Cout,), jnp.float32),
        w2=w2, g2=jnp.ones((Cout,), jnp.float32), b2=jnp.zeros((Cout,), jnp.float32),
    )

    out = jax.jit(unet_conv_block)(x, params)
    out = jax.block_until_ready(out)

    ref = _reference(x, params)
    assert out.shape == (N, Cout, H, W)
    assert jnp.allclose(out, ref, atol=1e-4, rtol=1e-4), "mismatch vs JAX reference"

    print("KERNEL_OK")
</pallas_src>

<mosaic_0001>
module attributes {stable_mosaic.version = 11 : i64} {
  func.func @_conv3x3_kernel(%arg0: i32, %arg1: i32, %arg2: memref<1x1x16x8xf32, #tpu.memory_space<vmem>>, %arg3: memref<1x16x16x8xf32, #tpu.memory_space<vmem>>, %arg4: memref<1x1x16x8xf32, #tpu.memory_space<vmem>>, %arg5: memref<9x8x8xf32, #tpu.memory_space<vmem>>, %arg6: memref<1x8xf32, #tpu.memory_space<vmem>>, %arg7: memref<1x8xf32, #tpu.memory_space<vmem>>, %arg8: memref<1x16x16x8xf32, #tpu.memory_space<vmem>>, %arg9: memref<1x1x2x8xf32, #tpu.memory_space<vmem>>) attributes {dimension_semantics = [#tpu.dimension_semantics<parallel>, #tpu.dimension_semantics<parallel>], iteration_bounds = array<i64: 2, 1>, scalar_prefetch = 0 : i64, scratch_operands = 0 : i64, tpu.core_type = #tpu.core_type<tc>, window_params = [{transform_indices = @transform_0, window_bounds = array<i64: 1, 1, 16, 8>}, {transform_indices = @transform_1, window_bounds = array<i64: 1, 16, 16, 8>}, {transform_indices = @transform_2, window_bounds = array<i64: 1, 1, 16, 8>}, {pipeline_mode = #tpu.pipeline_mode<synchronous>, transform_indices = @transform_3, window_bounds = array<i64: 9, 8, 8>}, {pipeline_mode = #tpu.pipeline_mode<synchronous>, transform_indices = @transform_4, window_bounds = array<i64: 1, 8>}, {pipeline_mode = #tpu.pipeline_mode<synchronous>, transform_indices = @transform_5, window_bounds = array<i64: 1, 8>}, {transform_indices = @transform_6, window_bounds = array<i64: 1, 16, 16, 8>}, {transform_indices = @transform_7, window_bounds = array<i64: 1, 1, 2, 8>}]} {
    %c0 = arith.constant 0 : index
    %c0_0 = arith.constant 0 : index
    %c0_1 = arith.constant 0 : index
    %c0_2 = arith.constant 0 : index
    %0 = vector.load %arg3[%c0, %c0_0, %c0_1, %c0_2] : memref<1x16x16x8xf32, #tpu.memory_space<vmem>>, vector<1x16x16x8xf32>
    %1 = vector.shape_cast %0 : vector<1x16x16x8xf32> to vector<16x16x8xf32>
    %c0_3 = arith.constant 0 : index
    %c0_4 = arith.constant 0 : index
    %2 = vector.load %arg6[%c0_3, %c0_4] : memref<1x8xf32, #tpu.memory_space<vmem>>, vector<1x8xf32>
    %3 = vector.shape_cast %2 : vector<1x8xf32> to vector<1x1x8xf32>
    %c0_5 = arith.constant 0 : index
    %c0_6 = arith.constant 0 : index
    %4 = vector.load %arg7[%c0_5, %c0_6] : memref<1x8xf32, #tpu.memory_space<vmem>>, vector<1x8xf32>
    %5 = vector.shape_cast %4 : vector<1x8xf32> to vector<1x1x8xf32>
    %6 = vector.broadcast %3 : vector<1x1x8xf32> to vector<16x16x8xf32>
    %7 = arith.mulf %1, %6 : vector<16x16x8xf32>
    %8 = vector.broadcast %5 : vector<1x1x8xf32> to vector<16x16x8xf32>
    %9 = arith.addf %7, %8 : vector<16x16x8xf32>
    %cst = arith.constant 0.000000e+00 : f32
    %10 = vector.broadcast %cst : f32 to vector<16x16x8xf32>
    %11 = arith.maximumf %9, %10 : vector<16x16x8xf32>
    %c0_7 = arith.constant 0 : index
    %c0_8 = arith.constant 0 : index
    %c0_9 = arith.constant 0 : index
    %c0_10 = arith.constant 0 : index
    %12 = vector.load %arg2[%c0_7, %c0_8, %c0_9, %c0_10] : memref<1x1x16x8xf32, #tpu.memory_space<vmem>>, vector<1x1x16x8xf32>
    %13 = vector.shape_cast %12 : vector<1x1x16x8xf32> to vector<1x16x8xf32>
    %c0_11 = arith.constant 0 : index
    %c0_12 = arith.constant 0 : index
    %14 = vector.load %arg6[%c0_11, %c0_12] : memref<1x8xf32, #tpu.memory_space<vmem>>, vector<1x8xf32>
    %15 = vector.shape_cast %14 : vector<1x8xf32> to vector<1x1x8xf32>
    %c0_13 = arith.constant 0 : index
    %c0_14 = arith.constant 0 : index
    %16 = vector.load %arg7[%c0_13, %c0_14] : memref<1x8xf32, #tpu.memory_space<vmem>>, vector<1x8xf32>
    %17 = vector.shape_cast %16 : vector<1x8xf32> to vector<1x1x8xf32>
    %18 = vector.broadcast %15 : vector<1x1x8xf32> to vector<1x16x8xf32>
    %19 = arith.mulf %13, %18 : vector<1x16x8xf32>
    %20 = vector.broadcast %17 : vector<1x1x8xf32> to vector<1x16x8xf32>
    %21 = arith.addf %19, %20 : vector<1x16x8xf32>
    %cst_15 = arith.constant 0.000000e+00 : f32
    %22 = vector.broadcast %cst_15 : f32 to vector<1x16x8xf32>
    %23 = arith.maximumf %21, %22 : vector<1x16x8xf32>
    %c0_i32 = arith.constant 0 : i32
    %24 = arith.cmpi sgt, %arg1, %c0_i32 : i32
    %25 = arith.extui %24 : i1 to i32
    %26 = arith.sitofp %25 : i32 to f32
    %27 = vector.broadcast %26 : f32 to vector<1x16x8xf32>
    %28 = arith.mulf %23, %27 : vector<1x16x8xf32>
    %c0_16 = arith.constant 0 : index
    %c0_17 = arith.constant 0 : index
    %c0_18 = arith.constant 0 : index
    %c0_19 = arith.constant 0 : index
    %29 = vector.load %arg4[%c0_16, %c0_17, %c0_18, %c0_19] : memref<1x1x16x8xf32, #tpu.memory_space<vmem>>, vector<1x1x16x8xf32>
    %30 = vector.shape_cast %29 : vector<1x1x16x8xf32> to vector<1x16x8xf32>
    %c0_20 = arith.constant 0 : index
    %c0_21 = arith.constant 0 : index
    %31 = vector.load %arg6[%c0_20, %c0_21] : memref<1x8xf32, #tpu.memory_space<vmem>>, vector<1x8xf32>
    %32 = vector.shape_cast %31 : vector<1x8xf32> to vector<1x1x8xf32>
    %c0_22 = arith.constant 0 : index
    %c0_23 = arith.constant 0 : index
    %33 = vector.load %arg7[%c0_22, %c0_23] : memref<1x8xf32, #tpu.memory_space<vmem>>, vector<1x8xf32>
    %34 = vector.shape_cast %33 : vector<1x8xf32> to vector<1x1x8xf32>
    %35 = vector.broadcast %32 : vector<1x1x8xf32> to vector<1x16x8xf32>
    %36 = arith.mulf %30, %35 : vector<1x16x8xf32>
    %37 = vector.broadcast %34 : vector<1x1x8xf32> to vector<1x16x8xf32>
    %38 = arith.addf %36, %37 : vector<1x16x8xf32>
    %cst_24 = arith.constant 0.000000e+00 : f32
    %39 = vector.broadcast %cst_24 : f32 to vector<1x16x8xf32>
    %40 = arith.maximumf %38, %39 : vector<1x16x8xf32>
    %c0_i32_25 = arith.constant 0 : i32
    %41 = arith.cmpi slt, %arg1, %c0_i32_25 : i32
    %42 = arith.extui %41 : i1 to i32
    %43 = arith.sitofp %42 : i32 to f32
    %44 = vector.broadcast %43 : f32 to vector<1x16x8xf32>
    %45 = arith.mulf %40, %44 : vector<1x16x8xf32>
    %46 = tpu.concatenate %28, %11, %45 in 0 : vector<1x16x8xf32>, vector<16x16x8xf32>, vector<1x16x8xf32> -> vector<18x16x8xf32>
    %cst_26 = arith.constant 0.000000e+00 : f32
    %47 = vector.broadcast %cst_26 : f32 to vector<18x1x8xf32>
    %48 = vector.extract_strided_slice %46 {offsets = [0, 0, 0], sizes = [18, 15, 8], strides = [1, 1, 1]} : vector<18x16x8xf32> to vector<18x15x8xf32>
    %49 = tpu.concatenate %47, %48 in 1 : vector<18x1x8xf32>, vector<18x15x8xf32> -> vector<18x16x8xf32>
    %50 = vector.extract_strided_slice %46 {offsets = [0, 1, 0], sizes = [18, 15, 8], strides = [1, 1, 1]} : vector<18x16x8xf32> to vector<18x15x8xf32>
    %51 = tpu.concatenate %50, %47 in 1 : vector<18x15x8xf32>, vector<18x1x8xf32> -> vector<18x16x8xf32>
    %52 = vector.shape_cast %49 : vector<18x16x8xf32> to vector<288x8xf32>
    %53 = vector.shape_cast %46 : vector<18x16x8xf32> to vector<288x8xf32>
    %54 = vector.shape_cast %51 : vector<18x16x8xf32> to vector<288x8xf32>
    %cst_27 = arith.constant 0.000000e+00 : f32
    %55 = vector.broadcast %cst_27 : f32 to vector<256x8xf32>
    %56 = vector.extract_strided_slice %52 {offsets = [0, 0], sizes = [256, 8], strides = [1, 1]} : vector<288x8xf32> to vector<256x8xf32>
    %c0_28 = arith.constant 0 : index
    %c0_29 = arith.constant 0 : index
    %c0_30 = arith.constant 0 : index
    %57 = vector.load %arg5[%c0_28, %c0_29, %c0_30] : memref<9x8x8xf32, #tpu.memory_space<vmem>>, vector<1x8x8xf32>
    %58 = vector.shape_cast %57 : vector<1x8x8xf32> to vector<8x8xf32>
    %cst_31 = arith.constant dense<0.000000e+00> : vector<256x8xf32>
    %59 = tpu.matmul %56, %58, %cst_31 {dimension_numbers = #tpu.dot_dimension_numbers<[1], [0], [0], [1], [0, 0, 1, 1], [], []>} : vector<256x8xf32>, vector<8x8xf32>, vector<256x8xf32> -> vector<256x8xf32>
    %60 = arith.addf %55, %59 : vector<256x8xf32>
    %61 = vector.extract_strided_slice %53 {offsets = [0, 0], sizes = [256, 8], strides = [1, 1]} : vector<288x8xf32> to vector<256x8xf32>
    %c1 = arith.constant 1 : index
    %c0_32 = arith.constant 0 : index
    %c0_33 = arith.constant 0 : index
    %62 = vector.load %arg5[%c1, %c0_32, %c0_33] : memref<9x8x8xf32, #tpu.memory_space<vmem>>, vector<1x8x8xf32>
    %63 = vector.shape_cast %62 : vector<1x8x8xf32> to vector<8x8xf32>
    %cst_34 = arith.constant dense<0.000000e+00> : vector<256x8xf32>
    %64 = tpu.matmul %61, %63, %cst_34 {dimension_numbers = #tpu.dot_dimension_numbers<[1], [0], [0], [1], [0, 0, 1, 1], [], []>} : vector<256x8xf32>, vector<8x8xf32>, vector<256x8xf32> -> vector<256x8xf32>
    %65 = arith.addf %60, %64 : vector<256x8xf32>
    %66 = vector.extract_strided_slice %54 {offsets = [0, 0], sizes = [256, 8], strides = [1, 1]} : vector<288x8xf32> to vector<256x8xf32>
    %c2 = arith.constant 2 : index
    %c0_35 = arith.constant 0 : index
    %c0_36 = arith.constant 0 : index
    %67 = vector.load %arg5[%c2, %c0_35, %c0_36] : memref<9x8x8xf32, #tpu.memory_space<vmem>>, vector<1x8x8xf32>
    %68 = vector.shape_cast %67 : vector<1x8x8xf32> to vector<8x8xf32>
    %cst_37 = arith.constant dense<0.000000e+00> : vector<256x8xf32>
    %69 = tpu.matmul %66, %68, %cst_37 {dimension_numbers = #tpu.dot_dimension_numbers<[1], [0], [0], [1], [0, 0, 1, 1], [], []>} : vector<256x8xf32>, vector<8x8xf32>, vector<256x8xf32> -> vector<256x8xf32>
    %70 = arith.addf %65, %69 : vector<256x8xf32>
    %71 = vector.extract_strided_slice %52 {offsets = [16, 0], sizes = [256, 8], strides = [1, 1]} : vector<288x8xf32> to vector<256x8xf32>
    %c3 = arith.constant 3 : index
    %c0_38 = arith.constant 0 : index
    %c0_39 = arith.constant 0 : index
    %72 = vector.load %arg5[%c3, %c0_38, %c0_39] : memref<9x8x8xf32, #tpu.memory_space<vmem>>, vector<1x8x8xf32>
    %73 = vector.shape_cast %72 : vector<1x8x8xf32> to vector<8x8xf32>
    %cst_40 = arith.constant dense<0.000000e+00> : vector<256x8xf32>
    %74 = tpu.matmul %71, %73, %cst_40 {dimension_numbers = #tpu.dot_dimension_numbers<[1], [0], [0], [1], [0, 0, 1, 1], [], []>} : vector<256x8xf32>, vector<8x8xf32>, vector<256x8xf32> -> vector<256x8xf32>
    %75 = arith.addf %70, %74 : vector<256x8xf32>
    %76 = vector.extract_strided_slice %53 {offsets = [16, 0], sizes = [256, 8], strides = [1, 1]} : vector<288x8xf32> to vector<256x8xf32>
    %c4 = arith.constant 4 : index
    %c0_41 = arith.constant 0 : index
    %c0_42 = arith.constant 0 : index
    %77 = vector.load %arg5[%c4, %c0_41, %c0_42] : memref<9x8x8xf32, #tpu.memory_space<vmem>>, vector<1x8x8xf32>
    %78 = vector.shape_cast %77 : vector<1x8x8xf32> to vector<8x8xf32>
    %cst_43 = arith.constant dense<0.000000e+00> : vector<256x8xf32>
    %79 = tpu.matmul %76, %78, %cst_43 {dimension_numbers = #tpu.dot_dimension_numbers<[1], [0], [0], [1], [0, 0, 1, 1], [], []>} : vector<256x8xf32>, vector<8x8xf32>, vector<256x8xf32> -> vector<256x8xf32>
    %80 = arith.addf %75, %79 : vector<256x8xf32>
    %81 = vector.extract_strided_slice %54 {offsets = [16, 0], sizes = [256, 8], strides = [1, 1]} : vector<288x8xf32> to vector<256x8xf32>
    %c5 = arith.constant 5 : index
    %c0_44 = arith.constant 0 : index
    %c0_45 = arith.constant 0 : index
    %82 = vector.load %arg5[%c5, %c0_44, %c0_45] : memref<9x8x8xf32, #tpu.memory_space<vmem>>, vector<1x8x8xf32>
    %83 = vector.shape_cast %82 : vector<1x8x8xf32> to vector<8x8xf32>
    %cst_46 = arith.constant dense<0.000000e+00> : vector<256x8xf32>
    %84 = tpu.matmul %81, %83, %cst_46 {dimension_numbers = #tpu.dot_dimension_numbers<[1], [0], [0], [1], [0, 0, 1, 1], [], []>} : vector<256x8xf32>, vector<8x8xf32>, vector<256x8xf32> -> vector<256x8xf32>
    %85 = arith.addf %80, %84 : vector<256x8xf32>
    %86 = vector.extract_strided_slice %52 {offsets = [32, 0], sizes = [256, 8], strides = [1, 1]} : vector<288x8xf32> to vector<256x8xf32>
    %c6 = arith.constant 6 : index
    %c0_47 = arith.constant 0 : index
    %c0_48 = arith.constant 0 : index
    %87 = vector.load %arg5[%c6, %c0_47, %c0_48] : memref<9x8x8xf32, #tpu.memory_space<vmem>>, vector<1x8x8xf32>
    %88 = vector.shape_cast %87 : vector<1x8x8xf32> to vector<8x8xf32>
    %cst_49 = arith.constant dense<0.000000e+00> : vector<256x8xf32>
    %89 = tpu.matmul %86, %88, %cst_49 {dimension_numbers = #tpu.dot_dimension_numbers<[1], [0], [0], [1], [0, 0, 1, 1], [], []>} : vector<256x8xf32>, vector<8x8xf32>, vector<256x8xf32> -> vector<256x8xf32>
    %90 = arith.addf %85, %89 : vector<256x8xf32>
    %91 = vector.extract_strided_slice %53 {offsets = [32, 0], sizes = [256, 8], strides = [1, 1]} : vector<288x8xf32> to vector<256x8xf32>
    %c7 = arith.constant 7 : index
    %c0_50 = arith.constant 0 : index
    %c0_51 = arith.constant 0 : index
    %92 = vector.load %arg5[%c7, %c0_50, %c0_51] : memref<9x8x8xf32, #tpu.memory_space<vmem>>, vector<1x8x8xf32>
    %93 = vector.shape_cast %92 : vector<1x8x8xf32> to vector<8x8xf32>
    %cst_52 = arith.constant dense<0.000000e+00> : vector<256x8xf32>
    %94 = tpu.matmul %91, %93, %cst_52 {dimension_numbers = #tpu.dot_dimension_numbers<[1], [0], [0], [1], [0, 0, 1, 1], [], []>} : vector<256x8xf32>, vector<8x8xf32>, vector<256x8xf32> -> vector<256x8xf32>
    %95 = arith.addf %90, %94 : vector<256x8xf32>
    %96 = vector.extract_strided_slice %54 {offsets = [32, 0], sizes = [256, 8], strides = [1, 1]} : vector<288x8xf32> to vector<256x8xf32>
    %c8 = arith.constant 8 : index
    %c0_53 = arith.constant 0 : index
    %c0_54 = arith.constant 0 : index
    %97 = vector.load %arg5[%c8, %c0_53, %c0_54] : memref<9x8x8xf32, #tpu.memory_space<vmem>>, vector<1x8x8xf32>
    %98 = vector.shape_cast %97 : vector<1x8x8xf32> to vector<8x8xf32>
    %cst_55 = arith.constant dense<0.000000e+00> : vector<256x8xf32>
    %99 = tpu.matmul %96, %98, %cst_55 {dimension_numbers = #tpu.dot_dimension_numbers<[1], [0], [0], [1], [0, 0, 1, 1], [], []>} : vector<256x8xf32>, vector<8x8xf32>, vector<256x8xf32> -> vector<256x8xf32>
    %100 = arith.addf %95, %99 : vector<256x8xf32>
    %cst_56 = arith.constant dense<0.000000e+00> : vector<8xf32>
    %101 = vector.multi_reduction <add>, %100, %cst_56 [0] : vector<256x8xf32> to vector<8xf32>
    %102 = vector.shape_cast %101 : vector<8xf32> to vector<1x8xf32>
    %c0_57 = arith.constant 0 : index
    %c0_58 = arith.constant 0 : index
    %c0_59 = arith.constant 0 : index
    %c0_60 = arith.constant 0 : index
    %103 = vector.load %arg9[%c0_57, %c0_58, %c0_59, %c0_60] : memref<1x1x2x8xf32, #tpu.memory_space<vmem>>, vector<1x1x1x8xf32>
    %104 = vector.shape_cast %103 : vector<1x1x1x8xf32> to vector<1x8xf32>
    %105 = vector.shape_cast %102 : vector<1x8xf32> to vector<1x1x1x8xf32>
    tpu.vector_store %arg9[%c0_57, %c0_58, %c0_59, %c0_60], %105 {strides = array<i32>} : memref<1x1x2x8xf32, #tpu.memory_space<vmem>>, vector<1x1x1x8xf32>,
    %106 = arith.mulf %100, %100 : vector<256x8xf32>
    %cst_61 = arith.constant dense<0.000000e+00> : vector<8xf32>
    %107 = vector.multi_reduction <add>, %106, %cst_61 [0] : vector<256x8xf32> to vector<8xf32>
    %108 = vector.shape_cast %107 : vector<8xf32> to vector<1x8xf32>
    %c0_62 = arith.constant 0 : index
    %c0_63 = arith.constant 0 : index
    %c1_64 = arith.constant 1 : index
    %c0_65 = arith.constant 0 : index
    %109 = vector.load %arg9[%c0_62, %c0_63, %c1_64, %c0_65] : memref<1x1x2x8xf32, #tpu.memory_space<vmem>>, vector<1x1x1x8xf32>
    %110 = vector.shape_cast %109 : vector<1x1x1x8xf32> to vector<1x8xf32>
    %111 = vector.shape_cast %108 : vector<1x8xf32> to vector<1x1x1x8xf32>
    tpu.vector_store %arg9[%c0_62, %c0_63, %c1_64, %c0_65], %111 {strides = array<i32>} : memref<1x1x2x8xf32, #tpu.memory_space<vmem>>, vector<1x1x1x8xf32>,
    %112 = vector.shape_cast %100 : vector<256x8xf32> to vector<16x16x8xf32>
    %c0_66 = arith.constant 0 : index
    %c0_67 = arith.constant 0 : index
    %c0_68 = arith.constant 0 : index
    %c0_69 = arith.constant 0 : index
    %113 = vector.load %arg8[%c0_66, %c0_67, %c0_68, %c0_69] : memref<1x16x16x8xf32, #tpu.memory_space<vmem>>, vector<1x16x16x8xf32>
    %114 = vector.shape_cast %113 : vector<1x16x16x8xf32> to vector<16x16x8xf32>
    %115 = vector.shape_cast %112 : vector<16x16x8xf32> to vector<1x16x16x8xf32>
    tpu.vector_store %arg8[%c0_66, %c0_67, %c0_68, %c0_69], %115 {strides = array<i32>} : memref<1x16x16x8xf32, #tpu.memory_space<vmem>>, vector<1x16x16x8xf32>,
    return
  }
  func.func @transform_0(%arg0: i32, %arg1: i32) -> (i32, i32, i32, i32) {
    %c16_i32 = arith.constant 16 : i32
    %0 = arith.muli %arg1, %c16_i32 : i32
    %c1_i32 = arith.constant 1 : i32
    %1 = arith.subi %0, %c1_i32 : i32
    %c0_i32 = arith.constant 0 : i32
    %2 = arith.maxsi %1, %c0_i32 : i32
    %c0_i32_0 = arith.constant 0 : i32
    %c0_i32_1 = arith.constant 0 : i32
    %c0_i32_2 = arith.constant 0 : i32
    return %arg0, %2, %c0_i32_0, %c0_i32_1 : i32, i32, i32, i32
  }
  func.func @transform_1(%arg0: i32, %arg1: i32) -> (i32, i32, i32, i32) {
    %c0_i32 = arith.constant 0 : i32
    %c0_i32_0 = arith.constant 0 : i32
    %c0_i32_1 = arith.constant 0 : i32
    return %arg0, %arg1, %c0_i32, %c0_i32_0 : i32, i32, i32, i32
  }
  func.func @transform_2(%arg0: i32, %arg1: i32) -> (i32, i32, i32, i32) {
    %c16_i32 = arith.constant 16 : i32
    %0 = arith.muli %arg1, %c16_i32 : i32
    %c16_i32_0 = arith.constant 16 : i32
    %1 = arith.addi %0, %c16_i32_0 : i32
    %c15_i32 = arith.constant 15 : i32
    %2 = arith.minsi %1, %c15_i32 : i32
    %c0_i32 = arith.constant 0 : i32
    %c0_i32_1 = arith.constant 0 : i32
    %c0_i32_2 = arith.constant 0 : i32
    return %arg0, %2, %c0_i32, %c0_i32_1 : i32, i32, i32, i32
  }
  func.func @transform_3(%arg0: i32, %arg1: i32) -> (i32, i32, i32) {
    %c0_i32 = arith.constant 0 : i32
    %c0_i32_0 = arith.constant 0 : i32
    %c0_i32_1 = arith.constant 0 : i32
    %c0_i32_2 = arith.constant 0 : i32
    return %c0_i32, %c0_i32_0, %c0_i32_1 : i32, i32, i32
  }
  func.func @transform_4(%arg0: i32, %arg1: i32) -> (i32, i32) {
    %c0_i32 = arith.constant 0 : i32
    %c0_i32_0 = arith.constant 0 : i32
    %c0_i32_1 = arith.constant 0 : i32
    return %c0_i32, %c0_i32_0 : i32, i32
  }
  func.func @transform_5(%arg0: i32, %arg1: i32) -> (i32, i32) {
    %c0_i32 = arith.constant 0 : i32
    %c0_i32_0 = arith.constant 0 : i32
    %c0_i32_1 = arith.constant 0 : i32
    return %c0_i32, %c0_i32_0 : i32, i32
  }
  func.func @transform_6(%arg0: i32, %arg1: i32) -> (i32, i32, i32, i32) {
    %c0_i32 = arith.constant 0 : i32
    %c0_i32_0 = arith.constant 0 : i32
    %c0_i32_1 = arith.constant 0 : i32
    return %arg0, %arg1, %c0_i32, %c0_i32_0 : i32, i32, i32, i32
  }
  func.func @transform_7(%arg0: i32, %arg1: i32) -> (i32, i32, i32, i32) {
    %c0_i32 = arith.constant 0 : i32
    %c0_i32_0 = arith.constant 0 : i32
    %c0_i32_1 = arith.constant 0 : i32
    return %arg0, %arg1, %c0_i32, %c0_i32_0 : i32, i32, i32, i32
  }
}

module attributes {stable_mosaic.version = 11 : i64} {
  func.func @_conv3x3_kernel(%arg0: i32, %arg1: i32, %arg2: memref<1x1x16x4xf32, #tpu.memory_space<vmem>>, %arg3: memref<1x16x16x4xf32, #tpu.memory_space<vmem>>, %arg4: memref<1x1x16x4xf32, #tpu.memory_space<vmem>>, %arg5: memref<9x4x8xf32, #tpu.memory_space<vmem>>, %arg6: memref<1x16x16x8xf32, #tpu.memory_space<vmem>>, %arg7: memref<1x1x2x8xf32, #tpu.memory_space<vmem>>) attributes {dimension_semantics = [#tpu.dimension_semantics<parallel>, #tpu.dimension_semantics<parallel>], iteration_bounds = array<i64: 2, 1>, scalar_prefetch = 0 : i64, scratch_operands = 0 : i64, tpu.core_type = #tpu.core_type<tc>, window_params = [{transform_indices = @transform_0, window_bounds = array<i64: 1, 1, 16, 4>}, {transform_indices = @transform_1, window_bounds = array<i64: 1, 16, 16, 4>}, {transform_indices = @transform_2, window_bounds = array<i64: 1, 1, 16, 4>}, {pipeline_mode = #tpu.pipeline_mode<synchronous>, transform_indices = @transform_3, window_bounds = array<i64: 9, 4, 8>}, {transform_indices = @transform_4, window_bounds = array<i64: 1, 16, 16, 8>}, {transform_indices = @transform_5, window_bounds = array<i64: 1, 1, 2, 8>}]} {
    %c0 = arith.constant 0 : index
    %c0_0 = arith.constant 0 : index
    %c0_1 = arith.constant 0 : index
    %c0_2 = arith.constant 0 : index
    %0 = vector.load %arg3[%c0, %c0_0, %c0_1, %c0_2] : memref<1x16x16x4xf32, #tpu.memory_space<vmem>>, vector<1x16x16x4xf32>
    %1 = vector.shape_cast %0 : vector<1x16x16x4xf32> to vector<16x16x4xf32>
    %c0_3 = arith.constant 0 : index
    %c0_4 = arith.constant 0 : index
    %c0_5 = arith.constant 0 : index
    %c0_6 = arith.constant 0 : index
    %2 = vector.load %arg2[%c0_3, %c0_4, %c0_5, %c0_6] : memref<1x1x16x4xf32, #tpu.memory_space<vmem>>, vector<1x1x16x4xf32>
    %3 = vector.shape_cast %2 : vector<1x1x16x4xf32> to vector<1x16x4xf32>
    %c0_i32 = arith.constant 0 : i32
    %4 = arith.cmpi sgt, %arg1, %c0_i32 : i32
    %5 = arith.extui %4 : i1 to i32
    %6 = arith.sitofp %5 : i32 to f32
    %7 = vector.broadcast %6 : f32 to vector<1x16x4xf32>
    %8 = arith.mulf %3, %7 : vector<1x16x4xf32>
    %c0_7 = arith.constant 0 : index
    %c0_8 = arith.constant 0 : index
    %c0_9 = arith.constant 0 : index
    %c0_10 = arith.constant 0 : index
    %9 = vector.load %arg4[%c0_7, %c0_8, %c0_9, %c0_10] : memref<1x1x16x4xf32, #tpu.memory_space<vmem>>, vector<1x1x16x4xf32>
    %10 = vector.shape_cast %9 : vector<1x1x16x4xf32> to vector<1x16x4xf32>
    %c0_i32_11 = arith.constant 0 : i32
    %11 = arith.cmpi slt, %arg1, %c0_i32_11 : i32
    %12 = arith.extui %11 : i1 to i32
    %13 = arith.sitofp %12 : i32 to f32
    %14 = vector.broadcast %13 : f32 to vector<1x16x4xf32>
    %15 = arith.mulf %10, %14 : vector<1x16x4xf32>
    %16 = tpu.concatenate %8, %1, %15 in 0 : vector<1x16x4xf32>, vector<16x16x4xf32>, vector<1x16x4xf32> -> vector<18x16x4xf32>
    %cst = arith.constant 0.000000e+00 : f32
    %17 = vector.broadcast %cst : f32 to vector<18x1x4xf32>
    %18 = vector.extract_strided_slice %16 {offsets = [0, 0, 0], sizes = [18, 15, 4], strides = [1, 1, 1]} : vector<18x16x4xf32> to vector<18x15x4xf32>
    %19 = tpu.concatenate %17, %18 in 1 : vector<18x1x4xf32>, vector<18x15x4xf32> -> vector<18x16x4xf32>
    %20 = vector.extract_strided_slice %16 {offsets = [0, 1, 0], sizes = [18, 15, 4], strides = [1, 1, 1]} : vector<18x16x4xf32> to vector<18x15x4xf32>
    %21 = tpu.concatenate %20, %17 in 1 : vector<18x15x4xf32>, vector<18x1x4xf32> -> vector<18x16x4xf32>
    %22 = vector.shape_cast %19 : vector<18x16x4xf32> to vector<288x4xf32>
    %23 = vector.shape_cast %16 : vector<18x16x4xf32> to vector<288x4xf32>
    %24 = vector.shape_cast %21 : vector<18x16x4xf32> to vector<288x4xf32>
    %cst_12 = arith.constant 0.000000e+00 : f32
    %25 = vector.broadcast %cst_12 : f32 to vector<256x8xf32>
    %26 = vector.extract_strided_slice %22 {offsets = [0, 0], sizes = [256, 4], strides = [1, 1]} : vector<288x4xf32> to vector<256x4xf32>
    %c0_13 = arith.constant 0 : index
    %c0_14 = arith.constant 0 : index
    %c0_15 = arith.constant 0 : index
    %27 = vector.load %arg5[%c0_13, %c0_14, %c0_15] : memref<9x4x8xf32, #tpu.memory_space<vmem>>, vector<1x4x8xf32>
    %28 = vector.shape_cast %27 : vector<1x4x8xf32> to vector<4x8xf32>
    %cst_16 = arith.constant dense<0.000000e+00> : vector<256x8xf32>
    %29 = tpu.matmul %26, %28, %cst_16 {dimension_numbers = #tpu.dot_dimension_numbers<[1], [0], [0], [1], [0, 0, 1, 1], [], []>} : vector<256x4xf32>, vector<4x8xf32>, vector<256x8xf32> -> vector<256x8xf32>
    %30 = arith.addf %25, %29 : vector<256x8xf32>
    %31 = vector.extract_strided_slice %23 {offsets = [0, 0], sizes = [256, 4], strides = [1, 1]} : vector<288x4xf32> to vector<256x4xf32>
    %c1 = arith.constant 1 : index
    %c0_17 = arith.constant 0 : index
    %c0_18 = arith.constant 0 : index
    %32 = vector.load %arg5[%c1, %c0_17, %c0_18] : memref<9x4x8xf32, #tpu.memory_space<vmem>>, vector<1x4x8xf32>
    %33 = vector.shape_cast %32 : vector<1x4x8xf32> to vector<4x8xf32>
    %cst_19 = arith.constant dense<0.000000e+00> : vector<256x8xf32>
    %34 = tpu.matmul %31, %33, %cst_19 {dimension_numbers = #tpu.dot_dimension_numbers<[1], [0], [0], [1], [0, 0, 1, 1], [], []>} : vector<256x4xf32>, vector<4x8xf32>, vector<256x8xf32> -> vector<256x8xf32>
    %35 = arith.addf %30, %34 : vector<256x8xf32>
    %36 = vector.extract_strided_slice %24 {offsets = [0, 0], sizes = [256, 4], strides = [1, 1]} : vector<288x4xf32> to vector<256x4xf32>
    %c2 = arith.constant 2 : index
    %c0_20 = arith.constant 0 : index
    %c0_21 = arith.constant 0 : index
    %37 = vector.load %arg5[%c2, %c0_20, %c0_21] : memref<9x4x8xf32, #tpu.memory_space<vmem>>, vector<1x4x8xf32>
    %38 = vector.shape_cast %37 : vector<1x4x8xf32> to vector<4x8xf32>
    %cst_22 = arith.constant dense<0.000000e+00> : vector<256x8xf32>
    %39 = tpu.matmul %36, %38, %cst_22 {dimension_numbers = #tpu.dot_dimension_numbers<[1], [0], [0], [1], [0, 0, 1, 1], [], []>} : vector<256x4xf32>, vector<4x8xf32>, vector<256x8xf32> -> vector<256x8xf32>
    %40 = arith.addf %35, %39 : vector<256x8xf32>
    %41 = vector.extract_strided_slice %22 {offsets = [16, 0], sizes = [256, 4], strides = [1, 1]} : vector<288x4xf32> to vector<256x4xf32>
    %c3 = arith.constant 3 : index
    %c0_23 = arith.constant 0 : index
    %c0_24 = arith.constant 0 : index
    %42 = vector.load %arg5[%c3, %c0_23, %c0_24] : memref<9x4x8xf32, #tpu.memory_space<vmem>>, vector<1x4x8xf32>
    %43 = vector.shape_cast %42 : vector<1x4x8xf32> to vector<4x8xf32>
    %cst_25 = arith.constant dense<0.000000e+00> : vector<256x8xf32>
    %44 = tpu.matmul %41, %43, %cst_25 {dimension_numbers = #tpu.dot_dimension_numbers<[1], [0], [0], [1], [0, 0, 1, 1], [], []>} : vector<256x4xf32>, vector<4x8xf32>, vector<256x8xf32> -> vector<256x8xf32>
    %45 = arith.addf %40, %44 : vector<256x8xf32>
    %46 = vector.extract_strided_slice %23 {offsets = [16, 0], sizes = [256, 4], strides = [1, 1]} : vector<288x4xf32> to vector<256x4xf32>
    %c4 = arith.constant 4 : index
    %c0_26 = arith.constant 0 : index
    %c0_27 = arith.constant 0 : index
    %47 = vector.load %arg5[%c4, %c0_26, %c0_27] : memref<9x4x8xf32, #tpu.memory_space<vmem>>, vector<1x4x8xf32>
    %48 = vector.shape_cast %47 : vector<1x4x8xf32> to vector<4x8xf32>
    %cst_28 = arith.constant dense<0.000000e+00> : vector<256x8xf32>
    %49 = tpu.matmul %46, %48, %cst_28 {dimension_numbers = #tpu.dot_dimension_numbers<[1], [0], [0], [1], [0, 0, 1, 1], [], []>} : vector<256x4xf32>, vector<4x8xf32>, vector<256x8xf32> -> vector<256x8xf32>
    %50 = arith.addf %45, %49 : vector<256x8xf32>
    %51 = vector.extract_strided_slice %24 {offsets = [16, 0], sizes = [256, 4], strides = [1, 1]} : vector<288x4xf32> to vector<256x4xf32>
    %c5 = arith.constant 5 : index
    %c0_29 = arith.constant 0 : index
    %c0_30 = arith.constant 0 : index
    %52 = vector.load %arg5[%c5, %c0_29, %c0_30] : memref<9x4x8xf32, #tpu.memory_space<vmem>>, vector<1x4x8xf32>
    %53 = vector.shape_cast %52 : vector<1x4x8xf32> to vector<4x8xf32>
    %cst_31 = arith.constant dense<0.000000e+00> : vector<256x8xf32>
    %54 = tpu.matmul %51, %53, %cst_31 {dimension_numbers = #tpu.dot_dimension_numbers<[1], [0], [0], [1], [0, 0, 1, 1], [], []>} : vector<256x4xf32>, vector<4x8xf32>, vector<256x8xf32> -> vector<256x8xf32>
    %55 = arith.addf %50, %54 : vector<256x8xf32>
    %56 = vector.extract_strided_slice %22 {offsets = [32, 0], sizes = [256, 4], strides = [1, 1]} : vector<288x4xf32> to vector<256x4xf32>
    %c6 = arith.constant 6 : index
    %c0_32 = arith.constant 0 : index
    %c0_33 = arith.constant 0 : index
    %57 = vector.load %arg5[%c6, %c0_32, %c0_33] : memref<9x4x8xf32, #tpu.memory_space<vmem>>, vector<1x4x8xf32>
    %58 = vector.shape_cast %57 : vector<1x4x8xf32> to vector<4x8xf32>
    %cst_34 = arith.constant dense<0.000000e+00> : vector<256x8xf32>
    %59 = tpu.matmul %56, %58, %cst_34 {dimension_numbers = #tpu.dot_dimension_numbers<[1], [0], [0], [1], [0, 0, 1, 1], [], []>} : vector<256x4xf32>, vector<4x8xf32>, vector<256x8xf32> -> vector<256x8xf32>
    %60 = arith.addf %55, %59 : vector<256x8xf32>
    %61 = vector.extract_strided_slice %23 {offsets = [32, 0], sizes = [256, 4], strides = [1, 1]} : vector<288x4xf32> to vector<256x4xf32>
    %c7 = arith.constant 7 : index
    %c0_35 = arith.constant 0 : index
    %c0_36 = arith.constant 0 : index
    %62 = vector.load %arg5[%c7, %c0_35, %c0_36] : memref<9x4x8xf32, #tpu.memory_space<vmem>>, vector<1x4x8xf32>
    %63 = vector.shape_cast %62 : vector<1x4x8xf32> to vector<4x8xf32>
    %cst_37 = arith.constant dense<0.000000e+00> : vector<256x8xf32>
    %64 = tpu.matmul %61, %63, %cst_37 {dimension_numbers = #tpu.dot_dimension_numbers<[1], [0], [0], [1], [0, 0, 1, 1], [], []>} : vector<256x4xf32>, vector<4x8xf32>, vector<256x8xf32> -> vector<256x8xf32>
    %65 = arith.addf %60, %64 : vector<256x8xf32>
    %66 = vector.extract_strided_slice %24 {offsets = [32, 0], sizes = [256, 4], strides = [1, 1]} : vector<288x4xf32> to vector<256x4xf32>
    %c8 = arith.constant 8 : index
    %c0_38 = arith.constant 0 : index
    %c0_39 = arith.constant 0 : index
    %67 = vector.load %arg5[%c8, %c0_38, %c0_39] : memref<9x4x8xf32, #tpu.memory_space<vmem>>, vector<1x4x8xf32>
    %68 = vector.shape_cast %67 : vector<1x4x8xf32> to vector<4x8xf32>
    %cst_40 = arith.constant dense<0.000000e+00> : vector<256x8xf32>
    %69 = tpu.matmul %66, %68, %cst_40 {dimension_numbers = #tpu.dot_dimension_numbers<[1], [0], [0], [1], [0, 0, 1, 1], [], []>} : vector<256x4xf32>, vector<4x8xf32>, vector<256x8xf32> -> vector<256x8xf32>
    %70 = arith.addf %65, %69 : vector<256x8xf32>
    %cst_41 = arith.constant dense<0.000000e+00> : vector<8xf32>
    %71 = vector.multi_reduction <add>, %70, %cst_41 [0] : vector<256x8xf32> to vector<8xf32>
    %72 = vector.shape_cast %71 : vector<8xf32> to vector<1x8xf32>
    %c0_42 = arith.constant 0 : index
    %c0_43 = arith.constant 0 : index
    %c0_44 = arith.constant 0 : index
    %c0_45 = arith.constant 0 : index
    %73 = vector.load %arg7[%c0_42, %c0_43, %c0_44, %c0_45] : memref<1x1x2x8xf32, #tpu.memory_space<vmem>>, vector<1x1x1x8xf32>
    %74 = vector.shape_cast %73 : vector<1x1x1x8xf32> to vector<1x8xf32>
    %75 = vector.shape_cast %72 : vector<1x8xf32> to vector<1x1x1x8xf32>
    tpu.vector_store %arg7[%c0_42, %c0_43, %c0_44, %c0_45], %75 {strides = array<i32>} : memref<1x1x2x8xf32, #tpu.memory_space<vmem>>, vector<1x1x1x8xf32>,
    %76 = arith.mulf %70, %70 : vector<256x8xf32>
    %cst_46 = arith.constant dense<0.000000e+00> : vector<8xf32>
    %77 = vector.multi_reduction <add>, %76, %cst_46 [0] : vector<256x8xf32> to vector<8xf32>
    %78 = vector.shape_cast %77 : vector<8xf32> to vector<1x8xf32>
    %c0_47 = arith.constant 0 : index
    %c0_48 = arith.constant 0 : index
    %c1_49 = arith.constant 1 : index
    %c0_50 = arith.constant 0 : index
    %79 = vector.load %arg7[%c0_47, %c0_48, %c1_49, %c0_50] : memref<1x1x2x8xf32, #tpu.memory_space<vmem>>, vector<1x1x1x8xf32>
    %80 = vector.shape_cast %79 : vector<1x1x1x8xf32> to vector<1x8xf32>
    %81 = vector.shape_cast %78 : vector<1x8xf32> to vector<1x1x1x8xf32>
    tpu.vector_store %arg7[%c0_47, %c0_48, %c1_49, %c0_50], %81 {strides = array<i32>} : memref<1x1x2x8xf32, #tpu.memory_space<vmem>>, vector<1x1x1x8xf32>,
    %82 = vector.shape_cast %70 : vector<256x8xf32> to vector<16x16x8xf32>
    %c0_51 = arith.constant 0 : index
    %c0_52 = arith.constant 0 : index
    %c0_53 = arith.constant 0 : index
    %c0_54 = arith.constant 0 : index
    %83 = vector.load %arg6[%c0_51, %c0_52, %c0_53, %c0_54] : memref<1x16x16x8xf32, #tpu.memory_space<vmem>>, vector<1x16x16x8xf32>
    %84 = vector.shape_cast %83 : vector<1x16x16x8xf32> to vector<16x16x8xf32>
    %85 = vector.shape_cast %82 : vector<16x16x8xf32> to vector<1x16x16x8xf32>
    tpu.vector_store %arg6[%c0_51, %c0_52, %c0_53, %c0_54], %85 {strides = array<i32>} : memref<1x16x16x8xf32, #tpu.memory_space<vmem>>, vector<1x16x16x8xf32>,
    return
  }
  func.func @transform_0(%arg0: i32, %arg1: i32) -> (i32, i32, i32, i32) {
    %c16_i32 = arith.constant 16 : i32
    %0 = arith.muli %arg1, %c16_i32 : i32
    %c1_i32 = arith.constant 1 : i32
    %1 = arith.subi %0, %c1_i32 : i32
    %c0_i32 = arith.constant 0 : i32
    %2 = arith.maxsi %1, %c0_i32 : i32
    %c0_i32_0 = arith.constant 0 : i32
    %c0_i32_1 = arith.constant 0 : i32
    %c0_i32_2 = arith.constant 0 : i32
    return %arg0, %2, %c0_i32_0, %c0_i32_1 : i32, i32, i32, i32
  }
  func.func @transform_1(%arg0: i32, %arg1: i32) -> (i32, i32, i32, i32) {
    %c0_i32 = arith.constant 0 : i32
    %c0_i32_0 = arith.constant 0 : i32
    %c0_i32_1 = arith.constant 0 : i32
    return %arg0, %arg1, %c0_i32, %c0_i32_0 : i32, i32, i32, i32
  }
  func.func @transform_2(%arg0: i32, %arg1: i32) -> (i32, i32, i32, i32) {
    %c16_i32 = arith.constant 16 : i32
    %0 = arith.muli %arg1, %c16_i32 : i32
    %c16_i32_0 = arith.constant 16 : i32
    %1 = arith.addi %0, %c16_i32_0 : i32
    %c15_i32 = arith.constant 15 : i32
    %2 = arith.minsi %1, %c15_i32 : i32
    %c0_i32 = arith.constant 0 : i32
    %c0_i32_1 = arith.constant 0 : i32
    %c0_i32_2 = arith.constant 0 : i32
    return %arg0, %2, %c0_i32, %c0_i32_1 : i32, i32, i32, i32
  }
  func.func @transform_3(%arg0: i32, %arg1: i32) -> (i32, i32, i32) {
    %c0_i32 = arith.constant 0 : i32
    %c0_i32_0 = arith.constant 0 : i32
    %c0_i32_1 = arith.constant 0 : i32
    %c0_i32_2 = arith.constant 0 : i32
    return %c0_i32, %c0_i32_0, %c0_i32_1 : i32, i32, i32
  }
  func.func @transform_4(%arg0: i32, %arg1: i32) -> (i32, i32, i32, i32) {
    %c0_i32 = arith.constant 0 : i32
    %c0_i32_0 = arith.constant 0 : i32
    %c0_i32_1 = arith.constant 0 : i32
    return %arg0, %arg1, %c0_i32, %c0_i32_0 : i32, i32, i32, i32
  }
  func.func @transform_5(%arg0: i32, %arg1: i32) -> (i32, i32, i32, i32) {
    %c0_i32 = arith.constant 0 : i32
    %c0_i32_0 = arith.constant 0 : i32
    %c0_i32_1 = arith.constant 0 : i32
    return %arg0, %arg1, %c0_i32, %c0_i32_0 : i32, i32, i32, i32
  }
}

module attributes {stable_mosaic.version = 11 : i64} {
  func.func @_bn_relu_kernel(%arg0: i32, %arg1: i32, %arg2: memref<1x16x16x8xf32, #tpu.memory_space<vmem>>, %arg3: memref<1x8xf32, #tpu.memory_space<vmem>>, %arg4: memref<1x8xf32, #tpu.memory_space<vmem>>, %arg5: memref<1x16x16x8xf32, #tpu.memory_space<vmem>>) attributes {dimension_semantics = [#tpu.dimension_semantics<parallel>, #tpu.dimension_semantics<parallel>], iteration_bounds = array<i64: 2, 1>, scalar_prefetch = 0 : i64, scratch_operands = 0 : i64, tpu.core_type = #tpu.core_type<tc>, window_params = [{transform_indices = @transform_0, window_bounds = array<i64: 1, 16, 16, 8>}, {pipeline_mode = #tpu.pipeline_mode<synchronous>, transform_indices = @transform_1, window_bounds = array<i64: 1, 8>}, {pipeline_mode = #tpu.pipeline_mode<synchronous>, transform_indices = @transform_2, window_bounds = array<i64: 1, 8>}, {transform_indices = @transform_3, window_bounds = array<i64: 1, 16, 16, 8>}]} {
    %c0 = arith.constant 0 : index
    %c0_0 = arith.constant 0 : index
    %c0_1 = arith.constant 0 : index
    %c0_2 = arith.constant 0 : index
    %0 = vector.load %arg2[%c0, %c0_0, %c0_1, %c0_2] : memref<1x16x16x8xf32, #tpu.memory_space<vmem>>, vector<1x16x16x8xf32>
    %c0_3 = arith.constant 0 : index
    %c0_4 = arith.constant 0 : index
    %1 = vector.load %arg3[%c0_3, %c0_4] : memref<1x8xf32, #tpu.memory_space<vmem>>, vector<1x8xf32>
    %2 = vector.shape_cast %1 : vector<1x8xf32> to vector<1x1x1x8xf32>
    %c0_5 = arith.constant 0 : index
    %c0_6 = arith.constant 0 : index
    %3 = vector.load %arg4[%c0_5, %c0_6] : memref<1x8xf32, #tpu.memory_space<vmem>>, vector<1x8xf32>
    %4 = vector.shape_cast %3 : vector<1x8xf32> to vector<1x1x1x8xf32>
    %5 = vector.broadcast %2 : vector<1x1x1x8xf32> to vector<1x16x16x8xf32>
    %6 = arith.mulf %0, %5 : vector<1x16x16x8xf32>
    %7 = vector.broadcast %4 : vector<1x1x1x8xf32> to vector<1x16x16x8xf32>
    %8 = arith.addf %6, %7 : vector<1x16x16x8xf32>
    %cst = arith.constant 0.000000e+00 : f32
    %9 = vector.broadcast %cst : f32 to vector<1x16x16x8xf32>
    %10 = arith.maximumf %8, %9 : vector<1x16x16x8xf32>
    %c0_7 = arith.constant 0 : index
    %c0_8 = arith.constant 0 : index
    %c0_9 = arith.constant 0 : index
    %c0_10 = arith.constant 0 : index
    %11 = vector.load %arg5[%c0_7, %c0_8, %c0_9, %c0_10] : memref<1x16x16x8xf32, #tpu.memory_space<vmem>>, vector<1x16x16x8xf32>
    tpu.vector_store %arg5[%c0_7, %c0_8, %c0_9, %c0_10], %10 {strides = array<i32>} : memref<1x16x16x8xf32, #tpu.memory_space<vmem>>, vector<1x16x16x8xf32>,
    return
  }
  func.func @transform_0(%arg0: i32, %arg1: i32) -> (i32, i32, i32, i32) {
    %c0_i32 = arith.constant 0 : i32
    %c0_i32_0 = arith.constant 0 : i32
    %c0_i32_1 = arith.constant 0 : i32
    return %arg0, %arg1, %c0_i32, %c0_i32_0 : i32, i32, i32, i32
  }
  func.func @transform_1(%arg0: i32, %arg1: i32) -> (i32, i32) {
    %c0_i32 = arith.constant 0 : i32
    %c0_i32_0 = arith.constant 0 : i32
    %c0_i32_1 = arith.constant 0 : i32
    return %c0_i32, %c0_i32_0 : i32, i32
  }
  func.func @transform_2(%arg0: i32, %arg1: i32) -> (i32, i32) {
    %c0_i32 = arith.constant 0 : i32
    %c0_i32_0 = arith.constant 0 : i32
    %c0_i32_1 = arith.constant 0 : i32
    return %c0_i32, %c0_i32_0 : i32, i32
  }
  func.func @transform_3(%arg0: i32, %arg1: i32) -> (i32, i32, i32, i32) {
    %c0_i32 = arith.constant 0 : i32
    %c0_i32_0 = arith.constant 0 : i32
    %c0_i32_1 = arith.constant 0 : i32
    return %arg0, %arg1, %c0_i32, %c0_i32_0 : i32, i32, i32, i32
  }
}

</mosaic_0001>

<llo_original>
// kernel: unet_conv_block.5
$region0: #{unet_conv_block.5}
  #allocation0 [shape = 'u32[]', space=smem, size = 0x4, offset = 0x4, fixed_abs, tag = 'smem constant byte address 0x4 - core index']
  #allocation1 [shape = 'u32[72,128]{1,0:T(1,128)}', space=vmem, size = 0x9000, scoped, tag = 'internal scratch']
  %s0 = inlined_call_operand.vmem [shape: f32[2,16,16,8], index: 0, kind: input, shape index: {}]
  %s1 = inlined_call_operand.vmem [shape: f32[1,8], index: 1, kind: input, shape index: {}]
  %s2 = inlined_call_operand.vmem [shape: f32[1,8], index: 2, kind: input, shape index: {}]
  %s3 = inlined_call_operand.vmem [shape: f32[2,16,16,8], index: 3, kind: output, shape index: {}]
  %s4 = sld [smem:[#allocation0]]
  $region45: #{unet_conv_block.5} parent=0
    _
  %s6 = ssub.s32 1, %s4
  %s7 = scalar_select 0, %s6, %s4
  loop: start=0, step=1, limit=4
  $region2: #{unet_conv_block.5} parent=0 // loop_pre_header
    _
  $region3: #{unet_conv_block.5} parent=0 // loop_header
    %s9 = sphi 0, %s13
    %p10 = scmp.ge.s32.totalorder %s9, 4
    %s16 = sphi 0, %s28
    %s17 = sphi 0, %s24
    %s18 = sphi 0, %s16
    %s19 = sphi 0, %s17
    %s20 = sphi 0, %s18
    %s21 = sphi 0, %s19
    %s33 = sphi 0, %s35
    %s36 = sphi 0, %s33
    %s37 = sphi 0, %s36
    %s53 = sphi 0, %s37
    %s57 = sphi 0, %s57
    %s59 = sphi 0, %s57
    %s60 = sphi 0, %s59
    %s74 = sphi 0, %s60
    %s78 = sphi 0, %s78
    %s80 = sphi 0, %s78
    %s81 = sphi 0, %s80
    %s95 = sphi 0, %s81
    %s103 = sphi 0, %s105
    %s106 = sphi 0, %s103
    %s107 = sphi 0, %s106
    %s123 = sphi 0, %s107
  $region4: #{unet_conv_block.5} parent=0 // loop_header_branch
    %12 = sbr.rel (%p10) target = $region8
  $region5: #{unet_conv_block.5} parent=0 // loop_body
    %s14 = ssub.s32 %s9, 1
    %s15 = ssub.s32 %s9, 2
    %s22 = sadd.s32 1, %s17
    %p23 = scmp.ge.s32.totalorder %s22, 1
    %s24 = scalar_select %p23, 0, %s22
    %s25 = sadd.s32 1, %s16
    %s26 = scalar_select %p23, %s25, %s16
    %p27 = scmp.ge.s32.totalorder %s26, 2
    %s28 = scalar_select %p27, 0, %s26
    %s29 = ssub.s32 %s16, %s28
    %s30 = ssub.s32 %s17, %s24
    %s31 = sor.u32 %s29, %s30
    %p32 = scmp.eq.s32.totalorder %s31, 0
    %s34 = sadd.s32 %s33, 1
    %s35 = scalar_select %p32, %s33, %s34
    %p38 = pneg %p32
    %p39 = scmp.eq.s32.totalorder %s9, 1
    %p40 = por %p38, %p39
    %p41 = scmp.ne.s32.totalorder %s33, %s36
    %p42 = scmp.eq.s32.totalorder %s9, 0
    %p43 = por %p41, %p42
    %p44 = scmp.ne.s32.totalorder %s33, %s36
    %p45 = scmp.eq.s32.totalorder %s14, 1
    %p46 = por %p44, %p45
    %p47 = scmp.ne.s32.totalorder %s36, %s37
    %p48 = scmp.eq.s32.totalorder %s14, 0
    %p49 = por %p47, %p48
    %p50 = scmp.ne.s32.totalorder %s36, %s37
    %p51 = scmp.eq.s32.totalorder %s15, 1
    %p52 = por %p50, %p51
    %p54 = scmp.ne.s32.totalorder %s37, %s53
    %p55 = scmp.eq.s32.totalorder %s15, 0
    %p56 = por %p54, %p55
    %s58 = sadd.s32 %s57, 1
    %p61 = scmp.eq.s32.totalorder %s9, 1
    %p62 = scmp.ne.s32.totalorder %s57, %s59
    %p63 = scmp.eq.s32.totalorder %s9, 0
    %p64 = por %p62, %p63
    %p65 = scmp.ne.s32.totalorder %s57, %s59
    %p66 = scmp.eq.s32.totalorder %s14, 1
    %p67 = por %p65, %p66
    %p68 = scmp.ne.s32.totalorder %s59, %s60
    %p69 = scmp.eq.s32.totalorder %s14, 0
    %p70 = por %p68, %p69
    %p71 = scmp.ne.s32.totalorder %s59, %s60
    %p72 = scmp.eq.s32.totalorder %s15, 1
    %p73 = por %p71, %p72
    %p75 = scmp.ne.s32.totalorder %s60, %s74
    %p76 = scmp.eq.s32.totalorder %s15, 0
    %p77 = por %p75, %p76
    %s79 = sadd.s32 %s78, 1
    %p82 = scmp.eq.s32.totalorder %s9, 1
    %p83 = scmp.ne.s32.totalorder %s78, %s80
    %p84 = scmp.eq.s32.totalorder %s9, 0
    %p85 = por %p83, %p84
    %p86 = scmp.ne.s32.totalorder %s78, %s80
    %p87 = scmp.eq.s32.totalorder %s14, 1
    %p88 = por %p86, %p87
    %p89 = scmp.ne.s32.totalorder %s80, %s81
    %p90 = scmp.eq.s32.totalorder %s14, 0
    %p91 = por %p89, %p90
    %p92 = scmp.ne.s32.totalorder %s80, %s81
    %p93 = scmp.eq.s32.totalorder %s15, 1
    %p94 = por %p92, %p93
    %p96 = scmp.ne.s32.totalorder %s81, %s95
    %p97 = scmp.eq.s32.totalorder %s15, 0
    %p98 = por %p96, %p97
    %s99 = ssub.s32 %s16, %s28
    %s100 = ssub.s32 %s17, %s24
    %s101 = sor.u32 %s99, %s100
    %p102 = scmp.eq.s32.totalorder %s101, 0
    %s104 = sadd.s32 %s103, 1
    %s105 = scalar_select %p102, %s103, %s104
    %p108 = pneg %p102
    %p109 = scmp.eq.s32.totalorder %s9, 1
    %p110 = por %p108, %p109
    %p111 = scmp.ne.s32.totalorder %s103, %s106
    %p112 = scmp.eq.s32.totalorder %s9, 0
    %p113 = por %p111, %p112
    %p114 = scmp.ne.s32.totalorder %s103, %s106
    %p115 = scmp.eq.s32.totalorder %s14, 1
    %p116 = por %p114, %p115
    %p117 = scmp.ne.s32.totalorder %s106, %s107
    %p118 = scmp.eq.s32.totalorder %s14, 0
    %p119 = por %p117, %p118
    %p120 = scmp.ne.s32.totalorder %s106, %s107
    %p121 = scmp.eq.s32.totalorder %s15, 1
    %p122 = por %p120, %p121
    %p124 = scmp.ne.s32.totalorder %s107, %s123
    %p125 = scmp.eq.s32.totalorder %s15, 0
    %p126 = por %p124, %p125
    %p127 = scmp.le.s32.totalorder 1, %s9
    %p128 = scmp.lt.s32.totalorder %s9, 3
    %p129 = pnand %p127, %p128
    %p130 = pneg %p129
    // Predicated region
    $region9: #{unet_conv_block.5} parent=5 // pred_check
      _
    $region10: #{unet_conv_block.5} parent=5 // pred_check_branch
      %132 = sbr.rel (%p129) target = $region12
    $region11: #{unet_conv_block.5} parent=5 // pred_region
      %s133 = ssub.s32 %s9, 1
      // Predicated region
      $region13: #{unet_conv_block.5} parent=11 // pred_check
        %p134 = pneg %p70
      $region14: #{unet_conv_block.5} parent=11 // pred_check_branch
        %136 = sbr.rel (%p134) target = $region16
      $region15: #{unet_conv_block.5} parent=11 // pred_region
        _
      $region16: #{unet_conv_block.5} parent=11 // pred_fallthru
        _
      // Predicated region
      $region17: #{unet_conv_block.5} parent=11 // pred_check
        %p137 = pneg %p91
      $region18: #{unet_conv_block.5} parent=11 // pred_check_branch
        %139 = sbr.rel (%p137) target = $region20
      $region19: #{unet_conv_block.5} parent=11 // pred_region
        _
      $region20: #{unet_conv_block.5} parent=11 // pred_fallthru
        _
    $region12: #{unet_conv_block.5} parent=5 // pred_fallthru
      _
    %p140 = scmp.lt.s32.totalorder %s9, 2
    // Predicated region
    $region21: #{unet_conv_block.5} parent=5 // pred_check
      %p141 = pneg %p140
    $region22: #{unet_conv_block.5} parent=5 // pred_check_branch
      %143 = sbr.rel (%p141) target = $region24
    $region23: #{unet_conv_block.5} parent=5 // pred_region
      // Predicated region
      $region25: #{unet_conv_block.5} parent=23 // pred_check
        %p144 = pneg %p43
      $region26: #{unet_conv_block.5} parent=23 // pred_check_branch
        %146 = sbr.rel (%p144) target = $region28
      $region27: #{unet_conv_block.5} parent=23 // pred_region
        %s147 = smul.u32 16, %s17
        %p148 = scmp.lt.s32.totalorder %s16, 1
        %s149 = scalar_select %p148, %s16, 1
        %p150 = scmp.lt.s32.totalorder %s147, 15
        %s151 = scalar_select %p150, %s147, 15
        %s152 = smul.addr %s151, 2
        %s153 = smul.addr %s149, 32
        %s154 = sadd.s32 %s152, %s153
        %s155 = smul.addr %s154, 8
        %s156 = scalar_lea.vmem %s0, %s155
        %s157 = smul.u32 16, %s17
      $region28: #{unet_conv_block.5} parent=23 // pred_fallthru
        _
    $region24: #{unet_conv_block.5} parent=5 // pred_fallthru
      _
    %p158 = scmp.le.s32.totalorder 1, %s9
    %p159 = scmp.lt.s32.totalorder %s9, 3
    %p160 = pnand %p158, %p159
    %p161 = pneg %p160
    // Predicated region
    $region29: #{unet_conv_block.5} parent=5 // pred_check
      _
    $region30: #{unet_conv_block.5} parent=5 // pred_check_branch
      %163 = sbr.rel (%p160) target = $region32
    $region31: #{unet_conv_block.5} parent=5 // pred_region
      %s164 = ssub.s32 %s9, 1
      %s165 = smul.u32 16, %s19
      %p166 = scmp.lt.s32.totalorder %s18, 1
      %s167 = scalar_select %p166, %s18, 1
      %p168 = scmp.lt.s32.totalorder %s165, 15
      %s169 = scalar_select %p168, %s165, 15
      %s170 = smul.addr %s169, 2
      %s171 = smul.addr %s167, 32
      %s172 = sadd.s32 %s170, %s171
      %s173 = smul.addr %s172, 8
      %s174 = scalar_lea.vmem %s0, %s173
      %p175 = pneg %p49
      %p176 = pneg %p46
      %p177 = pneg %p70
      %p178 = pneg %p67
      %p179 = pneg %p91
      %p180 = pneg %p88
      %p181 = pneg %p119
      %p182 = pneg %p116
      %s183 = smul.u32 16, %s19
      %p184 = scmp.lt.s32.totalorder %s18, 1
      %s185 = scalar_select %p184, %s18, 1
      %p186 = scmp.lt.s32.totalorder %s183, 15
      %s187 = scalar_select %p186, %s183, 15
      %s188 = smul.addr %s187, 2
      %s189 = smul.addr %s185, 32
      %s190 = sadd.s32 %s188, %s189
      %s191 = smul.addr %s190, 8
      %s192 = scalar_lea.vmem %s3, %s191
      %s193 = smul.u32 16, %s19
      %p194 = scmp.lt.s32.totalorder %s18, 1
      %s195 = scalar_select %p194, %s18, 1
      %p196 = scmp.lt.s32.totalorder %s193, 15
      %s197 = scalar_select %p196, %s193, 15
      %s198 = smul.addr %s197, 2
      %s199 = smul.addr %s195, 32
      %s200 = sadd.s32 %s198, %s199
      %s201 = smul.addr %s200, 8
      %s202 = scalar_lea.vmem %s0, %s201
      %s203 = smul.u32 16, %s19
      %s204 = smul.u32 16, %s19
      %p205 = scmp.lt.s32.totalorder %s18, 1
      %s206 = scalar_select %p205, %s18, 1
      %p207 = scmp.lt.s32.totalorder %s204, 15
      %s208 = scalar_select %p207, %s204, 15
      %s209 = smul.addr %s208, 2
      %s210 = smul.addr %s206, 32
      %s211 = sadd.s32 %s209, %s210
      %s212 = smul.addr %s211, 8
      %s213 = scalar_lea.vmem %s3, %s212
      %s214 = smul.u32 16, %s19
      %v215 = vld [vmem:[%s202] sm:$0xff]
      %v216 = vld [vmem:[%s202 + $0x8] sm:$0xff]
      %v217 = vld [vmem:[%s202 + $0x10] sm:$0xff]
      %v218 = vld [vmem:[%s202 + $0x18] sm:$0xff]
      %v219 = vld [vmem:[%s202 + $0x20] sm:$0xff]
      %v220 = vld [vmem:[%s202 + $0x28] sm:$0xff]
      %v221 = vld [vmem:[%s202 + $0x30] sm:$0xff]
      %v222 = vld [vmem:[%s202 + $0x38] sm:$0xff]
      %v223 = vld [vmem:[%s202 + $0x40] sm:$0xff]
      %v224 = vld [vmem:[%s202 + $0x48] sm:$0xff]
      %v225 = vld [vmem:[%s202 + $0x50] sm:$0xff]
      %v226 = vld [vmem:[%s202 + $0x58] sm:$0xff]
      %v227 = vld [vmem:[%s202 + $0x60] sm:$0xff]
      %v228 = vld [vmem:[%s202 + $0x68] sm:$0xff]
      %v229 = vld [vmem:[%s202 + $0x70] sm:$0xff]
      %v230 = vld [vmem:[%s202 + $0x78] sm:$0xff]
      %v231 = vld [vmem:[%s202 + $0x80] sm:$0xff]
      %v232 = vld [vmem:[%s202 + $0x88] sm:$0xff]
      %v233 = vld [vmem:[%s202 + $0x90] sm:$0xff]
      %v234 = vld [vmem:[%s202 + $0x98] sm:$0xff]
      %v235 = vld [vmem:[%s202 + $0xa0] sm:$0xff]
      %v236 = vld [vmem:[%s202 + $0xa8] sm:$0xff]
      %v237 = vld [vmem:[%s202 + $0xb0] sm:$0xff]
      %v238 = vld [vmem:[%s202 + $0xb8] sm:$0xff]
      %v239 = vld [vmem:[%s202 + $0xc0] sm:$0xff]
      %v240 = vld [vmem:[%s202 + $0xc8] sm:$0xff]
      %v241 = vld [vmem:[%s202 + $0xd0] sm:$0xff]
      %v242 = vld [vmem:[%s202 + $0xd8] sm:$0xff]
      %v243 = vld [vmem:[%s202 + $0xe0] sm:$0xff]
      %v244 = vld [vmem:[%s202 + $0xe8] sm:$0xff]
      %v245 = vld [vmem:[%s202 + $0xf0] sm:$0xff]
      %v246 = vld [vmem:[%s202 + $0xf8] sm:$0xff]
      %v247 = vld [vmem:[%s1] sm:$0x1]
      %v248 = vld [vmem:[%s2] sm:$0x1]
      %v250 = vperm.slane %v247, 0
      %v252 = vmul.f32 %v215, %v250
      %v253 = vmul.f32 %v216, %v250
      %v254 = vmul.f32 %v217, %v250
      %v255 = vmul.f32 %v218, %v250
      %v256 = vmul.f32 %v219, %v250
      %v257 = vmul.f32 %v220, %v250
      %v258 = vmul.f32 %v221, %v250
      %v259 = vmul.f32 %v222, %v250
      %v260 = vmul.f32 %v223, %v250
      %v261 = vmul.f32 %v224, %v250
      %v262 = vmul.f32 %v225, %v250
      %v263 = vmul.f32 %v226, %v250
      %v264 = vmul.f32 %v227, %v250
      %v265 = vmul.f32 %v228, %v250
      %v266 = vmul.f32 %v229, %v250
      %v267 = vmul.f32 %v230, %v250
      %v268 = vmul.f32 %v231, %v250
      %v269 = vmul.f32 %v232, %v250
      %v270 = vmul.f32 %v233, %v250
      %v271 = vmul.f32 %v234, %v250
      %v272 = vmul.f32 %v235, %v250
      %v273 = vmul.f32 %v236, %v250
      %v274 = vmul.f32 %v237, %v250
      %v275 = vmul.f32 %v238, %v250
      %v276 = vmul.f32 %v239, %v250
      %v277 = vmul.f32 %v240, %v250
      %v278 = vmul.f32 %v241, %v250
      %v279 = vmul.f32 %v242, %v250
      %v280 = vmul.f32 %v243, %v250
      %v281 = vmul.f32 %v244, %v250
      %v282 = vmul.f32 %v245, %v250
      %v283 = vmul.f32 %v246, %v250
      %v285 = vperm.slane %v248, 0
      %v287 = vadd.f32 %v252, %v285
      %v288 = vadd.f32 %v253, %v285
      %v289 = vadd.f32 %v254, %v285
      %v290 = vadd.f32 %v255, %v285
      %v291 = vadd.f32 %v256, %v285
      %v292 = vadd.f32 %v257, %v285
      %v293 = vadd.f32 %v258, %v285
      %v294 = vadd.f32 %v259, %v285
      %v295 = vadd.f32 %v260, %v285
      %v296 = vadd.f32 %v261, %v285
      %v297 = vadd.f32 %v262, %v285
      %v298 = vadd.f32 %v263, %v285
      %v299 = vadd.f32 %v264, %v285
      %v300 = vadd.f32 %v265, %v285
      %v301 = vadd.f32 %v266, %v285
      %v302 = vadd.f32 %v267, %v285
      %v303 = vadd.f32 %v268, %v285
      %v304 = vadd.f32 %v269, %v285
      %v305 = vadd.f32 %v270, %v285
      %v306 = vadd.f32 %v271, %v285
      %v307 = vadd.f32 %v272, %v285
      %v308 = vadd.f32 %v273, %v285
      %v309 = vadd.f32 %v274, %v285
      %v310 = vadd.f32 %v275, %v285
      %v311 = vadd.f32 %v276, %v285
      %v312 = vadd.f32 %v277, %v285
      %v313 = vadd.f32 %v278, %v285
      %v314 = vadd.f32 %v279, %v285
      %v315 = vadd.f32 %v280, %v285
      %v316 = vadd.f32 %v281, %v285
      %v317 = vadd.f32 %v282, %v285
      %v318 = vadd.f32 %v283, %v285
      %v319 = vmax.f32 %v287, 0.0
      %v320 = vmax.f32 %v288, 0.0
      %v321 = vmax.f32 %v289, 0.0
      %v322 = vmax.f32 %v290, 0.0
      %v323 = vmax.f32 %v291, 0.0
      %v324 = vmax.f32 %v292, 0.0
      %v325 = vmax.f32 %v293, 0.0
      %v326 = vmax.f32 %v294, 0.0
      %v327 = vmax.f32 %v295, 0.0
      %v328 = vmax.f32 %v296, 0.0
      %v329 = vmax.f32 %v297, 0.0
      %v330 = vmax.f32 %v298, 0.0
      %v331 = vmax.f32 %v299, 0.0
      %v332 = vmax.f32 %v300, 0.0
      %v333 = vmax.f32 %v301, 0.0
      %v334 = vmax.f32 %v302, 0.0
      %v335 = vmax.f32 %v303, 0.0
      %v336 = vmax.f32 %v304, 0.0
      %v337 = vmax.f32 %v305, 0.0
      %v338 = vmax.f32 %v306, 0.0
      %v339 = vmax.f32 %v307, 0.0
      %v340 = vmax.f32 %v308, 0.0
      %v341 = vmax.f32 %v309, 0.0
      %v342 = vmax.f32 %v310, 0.0
      %v343 = vmax.f32 %v311, 0.0
      %v344 = vmax.f32 %v312, 0.0
      %v345 = vmax.f32 %v313, 0.0
      %v346 = vmax.f32 %v314, 0.0
      %v347 = vmax.f32 %v315, 0.0
      %v348 = vmax.f32 %v316, 0.0
      %v349 = vmax.f32 %v317, 0.0
      %v350 = vmax.f32 %v318, 0.0
      %vm351 = vcmask 64512
      %352 = vst.msk [vmem:[%s213] sm:$0xff] %vm351, %v319
      %353 = vst.msk [vmem:[%s213 + $0x8] sm:$0xff] %vm351, %v320
      %354 = vst.msk [vmem:[%s213 + $0x10] sm:$0xff] %vm351, %v321
      %355 = vst.msk [vmem:[%s213 + $0x18] sm:$0xff] %vm351, %v322
      %356 = vst.msk [vmem:[%s213 + $0x20] sm:$0xff] %vm351, %v323
      %357 = vst.msk [vmem:[%s213 + $0x28] sm:$0xff] %vm351, %v324
      %358 = vst.msk [vmem:[%s213 + $0x30] sm:$0xff] %vm351, %v325
      %359 = vst.msk [vmem:[%s213 + $0x38] sm:$0xff] %vm351, %v326
      %360 = vst.msk [vmem:[%s213 + $0x40] sm:$0xff] %vm351, %v327
      %361 = vst.msk [vmem:[%s213 + $0x48] sm:$0xff] %vm351, %v328
      %362 = vst.msk [vmem:[%s213 + $0x50] sm:$0xff] %vm351, %v329
      %363 = vst.msk [vmem:[%s213 + $0x58] sm:$0xff] %vm351, %v330
      %364 = vst.msk [vmem:[%s213 + $0x60] sm:$0xff] %vm351, %v331
      %365 = vst.msk [vmem:[%s213 + $0x68] sm:$0xff] %vm351, %v332
      %366 = vst.msk [vmem:[%s213 + $0x70] sm:$0xff] %vm351, %v333
      %367 = vst.msk [vmem:[%s213 + $0x78] sm:$0xff] %vm351, %v334
      %368 = vst.msk [vmem:[%s213 + $0x80] sm:$0xff] %vm351, %v335
      %369 = vst.msk [vmem:[%s213 + $0x88] sm:$0xff] %vm351, %v336
      %370 = vst.msk [vmem:[%s213 + $0x90] sm:$0xff] %vm351, %v337
      %371 = vst.msk [vmem:[%s213 + $0x98] sm:$0xff] %vm351, %v338
      %372 = vst.msk [vmem:[%s213 + $0xa0] sm:$0xff] %vm351, %v339
      %373 = vst.msk [vmem:[%s213 + $0xa8] sm:$0xff] %vm351, %v340
      %374 = vst.msk [vmem:[%s213 + $0xb0] sm:$0xff] %vm351, %v341
      %375 = vst.msk [vmem:[%s213 + $0xb8] sm:$0xff] %vm351, %v342
      %376 = vst.msk [vmem:[%s213 + $0xc0] sm:$0xff] %vm351, %v343
      %377 = vst.msk [vmem:[%s213 + $0xc8] sm:$0xff] %vm351, %v344
      %378 = vst.msk [vmem:[%s213 + $0xd0] sm:$0xff] %vm351, %v345
      %379 = vst.msk [vmem:[%s213 + $0xd8] sm:$0xff] %vm351, %v346
      %380 = vst.msk [vmem:[%s213 + $0xe0] sm:$0xff] %vm351, %v347
      %381 = vst.msk [vmem:[%s213 + $0xe8] sm:$0xff] %vm351, %v348
      %382 = vst.msk [vmem:[%s213 + $0xf0] sm:$0xff] %vm351, %v349
      %383 = vst.msk [vmem:[%s213 + $0xf8] sm:$0xff] %vm351, %v350
      %s384 = smul.u32 16, %s19
      %p385 = scmp.lt.s32.totalorder %s18, 1
      %s386 = scalar_select %p385, %s18, 1
      %p387 = scmp.lt.s32.totalorder %s384, 15
      %s388 = scalar_select %p387, %s384, 15
      %s389 = smul.addr %s388, 2
      %s390 = smul.addr %s386, 32
      %s391 = sadd.s32 %s389, %s390
      %s392 = smul.addr %s391, 8
      %s393 = scalar_lea.vmem %s3, %s392
      // Predicated region
      $region33: #{unet_conv_block.5} parent=31 // pred_check
        %p394 = pneg %p116
      $region34: #{unet_conv_block.5} parent=31 // pred_check_branch
        %396 = sbr.rel (%p394) target = $region36
      $region35: #{unet_conv_block.5} parent=31 // pred_region
        %s397 = smul.u32 16, %s19
      $region36: #{unet_conv_block.5} parent=31 // pred_fallthru
        _
    $region32: #{unet_conv_block.5} parent=5 // pred_fallthru
      _
    %p398 = scmp.le.s32.totalorder 2, %s9
    // Predicated region
    $region37: #{unet_conv_block.5} parent=5 // pred_check
      %p399 = pneg %p398
    $region38: #{unet_conv_block.5} parent=5 // pred_check_branch
      %401 = sbr.rel (%p399) target = $region40
    $region39: #{unet_conv_block.5} parent=5 // pred_region
      %s402 = ssub.s32 %s9, 2
      // Predicated region
      $region41: #{unet_conv_block.5} parent=39 // pred_check
        %p403 = pneg %p122
      $region42: #{unet_conv_block.5} parent=39 // pred_check_branch
        %405 = sbr.rel (%p403) target = $region44
      $region43: #{unet_conv_block.5} parent=39 // pred_region
        %s406 = smul.u32 16, %s21
        %p407 = scmp.lt.s32.totalorder %s20, 1
        %s408 = scalar_select %p407, %s20, 1
        %p409 = scmp.lt.s32.totalorder %s406, 15
        %s410 = scalar_select %p409, %s406, 15
        %s411 = smul.addr %s410, 2
        %s412 = smul.addr %s408, 32
        %s413 = sadd.s32 %s411, %s412
        %s414 = smul.addr %s413, 8
        %s415 = scalar_lea.vmem %s3, %s414
      $region44: #{unet_conv_block.5} parent=39 // pred_fallthru
        _
    $region40: #{unet_conv_block.5} parent=5 // pred_fallthru
      _
  $region6: #{unet_conv_block.5} parent=0 // loop_footer
    %s13 = sadd.s32 1, %s9
  $region7: #{unet_conv_block.5} parent=0 // loop_footer_branch
    %8 = sbr.rel target = $region3
  $region8: #{unet_conv_block.5} parent=0 // loop_exit
    _

// kernel: unet_conv_block.4
$region0: #{unet_conv_block.4}
  #allocation0 [shape = 'u32[]', space=smem, size = 0x4, offset = 0x4, fixed_abs, tag = 'smem constant byte address 0x4 - core index']
  #allocation1 [shape = 'u32[72,128]{1,0:T(1,128)}', space=vmem, size = 0x9000, scoped, tag = 'internal scratch']
  %s0 = inlined_call_operand.vmem [shape: f32[2,16,16,8], index: 0, kind: input, shape index: {}, may-alias: {0,1,2}]
  %s1 = inlined_call_operand.vmem [shape: f32[2,16,16,8], index: 1, kind: input, shape index: {}, may-alias: {0,1,2}]
  %s2 = inlined_call_operand.vmem [shape: f32[2,16,16,8], index: 2, kind: input, shape index: {}, may-alias: {0,1,2}]
  %s3 = inlined_call_operand.vmem [shape: f32[9,8,8], index: 3, kind: input, shape index: {}]
  %s4 = inlined_call_operand.vmem [shape: f32[1,8], index: 4, kind: input, shape index: {}]
  %s5 = inlined_call_operand.vmem [shape: f32[1,8], index: 5, kind: input, shape index: {}]
  %s6 = inlined_call_operand.vmem [shape: f32[2,16,16,8], index: 6, kind: output, shape index: {0}]
  %s7 = inlined_call_operand.vmem [shape: f32[2,1,2,8], index: 7, kind: output, shape index: {1}]
  %8 = xla_tuple %s6, %s7
  %s9 = sld [smem:[#allocation0]]
  $region65: #{unet_conv_block.4} parent=0
    _
  %s11 = ssub.s32 1, %s9
  %s12 = scalar_select 0, %s11, %s9
  loop: start=0, step=1, limit=4
  $region2: #{unet_conv_block.4} parent=0 // loop_pre_header
    _
  $region3: #{unet_conv_block.4} parent=0 // loop_header
    %s14 = sphi 0, %s18
    %p15 = scmp.ge.s32.totalorder %s14, 4
    %s21 = sphi 0, %s33
    %s22 = sphi 0, %s29
    %s23 = sphi 0, %s21
    %s24 = sphi 0, %s22
    %s25 = sphi 0, %s23
    %s26 = sphi 0, %s24
    %s46 = sphi 0, %s48
    %s49 = sphi 0, %s46
    %s50 = sphi 0, %s49
    %s66 = sphi 0, %s50
    %s74 = sphi 0, %s76
    %s77 = sphi 0, %s74
    %s78 = sphi 0, %s77
    %s94 = sphi 0, %s78
    %s110 = sphi 0, %s112
    %s113 = sphi 0, %s110
    %s114 = sphi 0, %s113
    %s130 = sphi 0, %s114
    %s134 = sphi 0, %s134
    %s136 = sphi 0, %s134
    %s137 = sphi 0, %s136
    %s151 = sphi 0, %s137
    %s155 = sphi 0, %s155
    %s157 = sphi 0, %s155
    %s158 = sphi 0, %s157
    %s172 = sphi 0, %s158
    %s176 = sphi 0, %s176
    %s178 = sphi 0, %s176
    %s179 = sphi 0, %s178
    %s193 = sphi 0, %s179
    %s201 = sphi 0, %s203
    %s204 = sphi 0, %s201
    %s205 = sphi 0, %s204
    %s221 = sphi 0, %s205
    %s229 = sphi 0, %s231
    %s232 = sphi 0, %s229
    %s233 = sphi 0, %s232
    %s249 = sphi 0, %s233
  $region4: #{unet_conv_block.4} parent=0 // loop_header_branch
    %17 = sbr.rel (%p15) target = $region8
  $region5: #{unet_conv_block.4} parent=0 // loop_body
    %s19 = ssub.s32 %s14, 1
    %s20 = ssub.s32 %s14, 2
    %s27 = sadd.s32 1, %s22
    %p28 = scmp.ge.s32.totalorder %s27, 1
    %s29 = scalar_select %p28, 0, %s27
    %s30 = sadd.s32 1, %s21
    %s31 = scalar_select %p28, %s30, %s21
    %p32 = scmp.ge.s32.totalorder %s31, 2
    %s33 = scalar_select %p32, 0, %s31
    %s34 = smul.u32 %s22, 16
    %s35 = ssub.s32 %s34, 1
    %p36 = scmp.gt.s32.totalorder %s35, 0
    %s37 = scalar_select %p36, %s35, 0
    %s38 = smul.u32 %s29, 16
    %s39 = ssub.s32 %s38, 1
    %p40 = scmp.gt.s32.totalorder %s39, 0
    %s41 = scalar_select %p40, %s39, 0
    %s42 = ssub.s32 %s21, %s33
    %s43 = ssub.s32 %s37, %s41
    %s44 = sor.u32 %s42, %s43
    %p45 = scmp.eq.s32.totalorder %s44, 0
    %s47 = sadd.s32 %s46, 1
    %s48 = scalar_select %p45, %s46, %s47
    %p51 = pneg %p45
    %p52 = scmp.eq.s32.totalorder %s14, 1
    %p53 = por %p51, %p52
    %p54 = scmp.ne.s32.totalorder %s46, %s49
    %p55 = scmp.eq.s32.totalorder %s14, 0
    %p56 = por %p54, %p55
    %p57 = scmp.ne.s32.totalorder %s46, %s49
    %p58 = scmp.eq.s32.totalorder %s19, 1
    %p59 = por %p57, %p58
    %p60 = scmp.ne.s32.totalorder %s49, %s50
    %p61 = scmp.eq.s32.totalorder %s19, 0
    %p62 = por %p60, %p61
    %p63 = scmp.ne.s32.totalorder %s49, %s50
    %p64 = scmp.eq.s32.totalorder %s20, 1
    %p65 = por %p63, %p64
    %p67 = scmp.ne.s32.totalorder %s50, %s66
    %p68 = scmp.eq.s32.totalorder %s20, 0
    %p69 = por %p67, %p68
    %s70 = ssub.s32 %s21, %s33
    %s71 = ssub.s32 %s22, %s29
    %s72 = sor.u32 %s70, %s71
    %p73 = scmp.eq.s32.totalorder %s72, 0
    %s75 = sadd.s32 %s74, 1
    %s76 = scalar_select %p73, %s74, %s75
    %p79 = pneg %p73
    %p80 = scmp.eq.s32.totalorder %s14, 1
    %p81 = por %p79, %p80
    %p82 = scmp.ne.s32.totalorder %s74, %s77
    %p83 = scmp.eq.s32.totalorder %s14, 0
    %p84 = por %p82, %p83
    %p85 = scmp.ne.s32.totalorder %s74, %s77
    %p86 = scmp.eq.s32.totalorder %s19, 1
    %p87 = por %p85, %p86
    %p88 = scmp.ne.s32.totalorder %s77, %s78
    %p89 = scmp.eq.s32.totalorder %s19, 0
    %p90 = por %p88, %p89
    %p91 = scmp.ne.s32.totalorder %s77, %s78
    %p92 = scmp.eq.s32.totalorder %s20, 1
    %p93 = por %p91, %p92
    %p95 = scmp.ne.s32.totalorder %s78, %s94
    %p96 = scmp.eq.s32.totalorder %s20, 0
    %p97 = por %p95, %p96
    %s98 = smul.u32 %s22, 16
    %s99 = sadd.s32 %s98, 16
    %p100 = scmp.lt.s32.totalorder %s99, 15
    %s101 = scalar_select %p100, %s99, 15
    %s102 = smul.u32 %s29, 16
    %s103 = sadd.s32 %s102, 16
    %p104 = scmp.lt.s32.totalorder %s103, 15
    %s105 = scalar_select %p104, %s103, 15
    %s106 = ssub.s32 %s21, %s33
    %s107 = ssub.s32 %s101, %s105
    %s108 = sor.u32 %s106, %s107
    %p109 = scmp.eq.s32.totalorder %s108, 0
    %s111 = sadd.s32 %s110, 1
    %s112 = scalar_select %p109, %s110, %s111
    %p115 = pneg %p109
    %p116 = scmp.eq.s32.totalorder %s14, 1
    %p117 = por %p115, %p116
    %p118 = scmp.ne.s32.totalorder %s110, %s113
    %p119 = scmp.eq.s32.totalorder %s14, 0
    %p120 = por %p118, %p119
    %p121 = scmp.ne.s32.totalorder %s110, %s113
    %p122 = scmp.eq.s32.totalorder %s19, 1
    %p123 = por %p121, %p122
    %p124 = scmp.ne.s32.totalorder %s113, %s114
    %p125 = scmp.eq.s32.totalorder %s19, 0
    %p126 = por %p124, %p125
    %p127 = scmp.ne.s32.totalorder %s113, %s114
    %p128 = scmp.eq.s32.totalorder %s20, 1
    %p129 = por %p127, %p128
    %p131 = scmp.ne.s32.totalorder %s114, %s130
    %p132 = scmp.eq.s32.totalorder %s20, 0
    %p133 = por %p131, %p132
    %s135 = sadd.s32 %s134, 1
    %p138 = scmp.eq.s32.totalorder %s14, 1
    %p139 = scmp.ne.s32.totalorder %s134, %s136
    %p140 = scmp.eq.s32.totalorder %s14, 0
    %p141 = por %p139, %p140
    %p142 = scmp.ne.s32.totalorder %s134, %s136
    %p143 = scmp.eq.s32.totalorder %s19, 1
    %p144 = por %p142, %p143
    %p145 = scmp.ne.s32.totalorder %s136, %s137
    %p146 = scmp.eq.s32.totalorder %s19, 0
    %p147 = por %p145, %p146
    %p148 = scmp.ne.s32.totalorder %s136, %s137
    %p149 = scmp.eq.s32.totalorder %s20, 1
    %p150 = por %p148, %p149
    %p152 = scmp.ne.s32.totalorder %s137, %s151
    %p153 = scmp.eq.s32.totalorder %s20, 0
    %p154 = por %p152, %p153
    %s156 = sadd.s32 %s155, 1
    %p159 = scmp.eq.s32.totalorder %s14, 1
    %p160 = scmp.ne.s32.totalorder %s155, %s157
    %p161 = scmp.eq.s32.totalorder %s14, 0
    %p162 = por %p160, %p161
    %p163 = scmp.ne.s32.totalorder %s155, %s157
    %p164 = scmp.eq.s32.totalorder %s19, 1
    %p165 = por %p163, %p164
    %p166 = scmp.ne.s32.totalorder %s157, %s158
    %p167 = scmp.eq.s32.totalorder %s19, 0
    %p168 = por %p166, %p167
    %p169 = scmp.ne.s32.totalorder %s157, %s158
    %p170 = scmp.eq.s32.totalorder %s20, 1
    %p171 = por %p169, %p170
    %p173 = scmp.ne.s32.totalorder %s158, %s172
    %p174 = scmp.eq.s32.totalorder %s20, 0
    %p175 = por %p173, %p174
    %s177 = sadd.s32 %s176, 1
    %p180 = scmp.eq.s32.totalorder %s14, 1
    %p181 = scmp.ne.s32.totalorder %s176, %s178
    %p182 = scmp.eq.s32.totalorder %s14, 0
    %p183 = por %p181, %p182
    %p184 = scmp.ne.s32.totalorder %s176, %s178
    %p185 = scmp.eq.s32.totalorder %s19, 1
    %p186 = por %p184, %p185
    %p187 = scmp.ne.s32.totalorder %s178, %s179
    %p188 = scmp.eq.s32.totalorder %s19, 0
    %p189 = por %p187, %p188
    %p190 = scmp.ne.s32.totalorder %s178, %s179
    %p191 = scmp.eq.s32.totalorder %s20, 1
    %p192 = por %p190, %p191
    %p194 = scmp.ne.s32.totalorder %s179, %s193
    %p195 = scmp.eq.s32.totalorder %s20, 0
    %p196 = por %p194, %p195
    %s197 = ssub.s32 %s21, %s33
    %s198 = ssub.s32 %s22, %s29
    %s199 = sor.u32 %s197, %s198
    %p200 = scmp.eq.s32.totalorder %s199, 0
    %s202 = sadd.s32 %s201, 1
    %s203 = scalar_select %p200, %s201, %s202
    %p206 = pneg %p200
    %p207 = scmp.eq.s32.totalorder %s14, 1
    %p208 = por %p206, %p207
    %p209 = scmp.ne.s32.totalorder %s201, %s204
    %p210 = scmp.eq.s32.totalorder %s14, 0
    %p211 = por %p209, %p210
    %p212 = scmp.ne.s32.totalorder %s201, %s204
    %p213 = scmp.eq.s32.totalorder %s19, 1
    %p214 = por %p212, %p213
    %p215 = scmp.ne.s32.totalorder %s204, %s205
    %p216 = scmp.eq.s32.totalorder %s19, 0
    %p217 = por %p215, %p216
    %p218 = scmp.ne.s32.totalorder %s204, %s205
    %p219 = scmp.eq.s32.totalorder %s20, 1
    %p220 = por %p218, %p219
    %p222 = scmp.ne.s32.totalorder %s205, %s221
    %p223 = scmp.eq.s32.totalorder %s20, 0
    %p224 = por %p222, %p223
    %s225 = ssub.s32 %s21, %s33
    %s226 = ssub.s32 %s22, %s29
    %s227 = sor.u32 %s225, %s226
    %p228 = scmp.eq.s32.totalorder %s227, 0
    %s230 = sadd.s32 %s229, 1
    %s231 = scalar_select %p228, %s229, %s230
    %p234 = pneg %p228
    %p235 = scmp.eq.s32.totalorder %s14, 1
    %p236 = por %p234, %p235
    %p237 = scmp.ne.s32.totalorder %s229, %s232
    %p238 = scmp.eq.s32.totalorder %s14, 0
    %p239 = por %p237, %p238
    %p240 = scmp.ne.s32.totalorder %s229, %s232
    %p241 = scmp.eq.s32.totalorder %s19, 1
    %p242 = por %p240, %p241
    %p243 = scmp.ne.s32.totalorder %s232, %s233
    %p244 = scmp.eq.s32.totalorder %s19, 0
    %p245 = por %p243, %p244
    %p246 = scmp.ne.s32.totalorder %s232, %s233
    %p247 = scmp.eq.s32.totalorder %s20, 1
    %p248 = por %p246, %p247
    %p250 = scmp.ne.s32.totalorder %s233, %s249
    %p251 = scmp.eq.s32.totalorder %s20, 0
    %p252 = por %p250, %p251
    %p253 = scmp.le.s32.totalorder 1, %s14
    %p254 = scmp.lt.s32.totalorder %s14, 3
    %p255 = pnand %p253, %p254
    %p256 = pneg %p255
    // Predicated region
    $region9: #{unet_conv_block.4} parent=5 // pred_check
      _
    $region10: #{unet_conv_block.4} parent=5 // pred_check_branch
      %258 = sbr.rel (%p255) target = $region12
    $region11: #{unet_conv_block.4} parent=5 // pred_region
      %s259 = ssub.s32 %s14, 1
      // Predicated region
      $region13: #{unet_conv_block.4} parent=11 // pred_check
        %p260 = pneg %p147
      $region14: #{unet_conv_block.4} parent=11 // pred_check_branch
        %262 = sbr.rel (%p260) target = $region16
      $region15: #{unet_conv_block.4} parent=11 // pred_region
        _
      $region16: #{unet_conv_block.4} parent=11 // pred_fallthru
        _
      // Predicated region
      $region17: #{unet_conv_block.4} parent=11 // pred_check
        %p263 = pneg %p168
      $region18: #{unet_conv_block.4} parent=11 // pred_check_branch
        %265 = sbr.rel (%p263) target = $region20
      $region19: #{unet_conv_block.4} parent=11 // pred_region
        _
      $region20: #{unet_conv_block.4} parent=11 // pred_fallthru
        _
      // Predicated region
      $region21: #{unet_conv_block.4} parent=11 // pred_check
        %p266 = pneg %p189
      $region22: #{unet_conv_block.4} parent=11 // pred_check_branch
        %268 = sbr.rel (%p266) target = $region24
      $region23: #{unet_conv_block.4} parent=11 // pred_region
        _
      $region24: #{unet_conv_block.4} parent=11 // pred_fallthru
        _
    $region12: #{unet_conv_block.4} parent=5 // pred_fallthru
      _
    %p269 = scmp.lt.s32.totalorder %s14, 2
    // Predicated region
    $region25: #{unet_conv_block.4} parent=5 // pred_check
      %p270 = pneg %p269
    $region26: #{unet_conv_block.4} parent=5 // pred_check_branch
      %272 = sbr.rel (%p270) target = $region28
    $region27: #{unet_conv_block.4} parent=5 // pred_region
      // Predicated region
      $region29: #{unet_conv_block.4} parent=27 // pred_check
        %p273 = pneg %p56
      $region30: #{unet_conv_block.4} parent=27 // pred_check_branch
        %275 = sbr.rel (%p273) target = $region32
      $region31: #{unet_conv_block.4} parent=27 // pred_region
        %s276 = smul.u32 %s22, 16
        %s277 = ssub.s32 %s276, 1
        %p278 = scmp.gt.s32.totalorder %s277, 0
        %s279 = scalar_select %p278, %s277, 0
        %p280 = scmp.lt.s32.totalorder %s21, 1
        %s281 = scalar_select %p280, %s21, 1
        %p282 = scmp.lt.s32.totalorder %s279, 15
        %s283 = scalar_select %p282, %s279, 15
        %s284 = smul.addr %s283, 2
        %s285 = smul.addr %s281, 32
        %s286 = sadd.s32 %s284, %s285
        %s287 = smul.addr %s286, 8
        %s288 = scalar_lea.vmem %s0, %s287
        %s289 = smul.u32 %s22, 16
        %s290 = ssub.s32 %s289, 1
        %p291 = scmp.gt.s32.totalorder %s290, 0
        %s292 = scalar_select %p291, %s290, 0
      $region32: #{unet_conv_block.4} parent=27 // pred_fallthru
        _
      // Predicated region
      $region33: #{unet_conv_block.4} parent=27 // pred_check
        %p293 = pneg %p84
      $region34: #{unet_conv_block.4} parent=27 // pred_check_branch
        %295 = sbr.rel (%p293) target = $region36
      $region35: #{unet_conv_block.4} parent=27 // pred_region
        %s296 = smul.u32 16, %s22
        %p297 = scmp.lt.s32.totalorder %s21, 1
        %s298 = scalar_select %p297, %s21, 1
        %p299 = scmp.lt.s32.totalorder %s296, 15
        %s300 = scalar_select %p299, %s296, 15
        %s301 = smul.addr %s300, 2
        %s302 = smul.addr %s298, 32
        %s303 = sadd.s32 %s301, %s302
        %s304 = smul.addr %s303, 8
        %s305 = scalar_lea.vmem %s1, %s304
        %s306 = smul.u32 16, %s22
      $region36: #{unet_conv_block.4} parent=27 // pred_fallthru
        _
      // Predicated region
      $region37: #{unet_conv_block.4} parent=27 // pred_check
        %p307 = pneg %p120
      $region38: #{unet_conv_block.4} parent=27 // pred_check_branch
        %309 = sbr.rel (%p307) target = $region40
      $region39: #{unet_conv_block.4} parent=27 // pred_region
        %s310 = smul.u32 %s22, 16
        %s311 = sadd.s32 %s310, 16
        %p312 = scmp.lt.s32.totalorder %s311, 15
        %s313 = scalar_select %p312, %s311, 15
        %p314 = scmp.lt.s32.totalorder %s21, 1
        %s315 = scalar_select %p314, %s21, 1
        %p316 = scmp.lt.s32.totalorder %s313, 15
        %s317 = scalar_select %p316, %s313, 15
        %s318 = smul.addr %s317, 2
        %s319 = smul.addr %s315, 32
        %s320 = sadd.s32 %s318, %s319
        %s321 = smul.addr %s320, 8
        %s322 = scalar_lea.vmem %s2, %s321
        %s323 = smul.u32 %s22, 16
        %s324 = sadd.s32 %s323, 16
        %p325 = scmp.lt.s32.totalorder %s324, 15
        %s326 = scalar_select %p325, %s324, 15
      $region40: #{unet_conv_block.4} parent=27 // pred_fallthru
        _
    $region28: #{unet_conv_block.4} parent=5 // pred_fallthru
      _
    %p327 = scmp.le.s32.totalorder 1, %s14
    %p328 = scmp.lt.s32.totalorder %s14, 3
    %p329 = pnand %p327, %p328
    %p330 = pneg %p329
    // Predicated region
    $region41: #{unet_conv_block.4} parent=5 // pred_check
      _
    $region42: #{unet_conv_block.4} parent=5 // pred_check_branch
      %332 = sbr.rel (%p329) target = $region44
    $region43: #{unet_conv_block.4} parent=5 // pred_region
      %s333 = ssub.s32 %s14, 1
      %s334 = smul.u32 %s24, 16
      %s335 = ssub.s32 %s334, 1
      %p336 = scmp.gt.s32.totalorder %s335, 0
      %s337 = scalar_select %p336, %s335, 0
      %p338 = scmp.lt.s32.totalorder %s23, 1
      %s339 = scalar_select %p338, %s23, 1
      %p340 = scmp.lt.s32.totalorder %s337, 15
      %s341 = scalar_select %p340, %s337, 15
      %s342 = smul.addr %s341, 2
      %s343 = smul.addr %s339, 32
      %s344 = sadd.s32 %s342, %s343
      %s345 = smul.addr %s344, 8
      %s346 = scalar_lea.vmem %s0, %s345
      %p347 = pneg %p62
      %p348 = pneg %p59
      %s349 = smul.u32 16, %s24
      %p350 = scmp.lt.s32.totalorder %s23, 1
      %s351 = scalar_select %p350, %s23, 1
      %p352 = scmp.lt.s32.totalorder %s349, 15
      %s353 = scalar_select %p352, %s349, 15
      %s354 = smul.addr %s353, 2
      %s355 = smul.addr %s351, 32
      %s356 = sadd.s32 %s354, %s355
      %s357 = smul.addr %s356, 8
      %s358 = scalar_lea.vmem %s1, %s357
      %p359 = pneg %p90
      %p360 = pneg %p87
      %s361 = smul.u32 %s24, 16
      %s362 = sadd.s32 %s361, 16
      %p363 = scmp.lt.s32.totalorder %s362, 15
      %s364 = scalar_select %p363, %s362, 15
      %p365 = scmp.lt.s32.totalorder %s23, 1
      %s366 = scalar_select %p365, %s23, 1
      %p367 = scmp.lt.s32.totalorder %s364, 15
      %s368 = scalar_select %p367, %s364, 15
      %s369 = smul.addr %s368, 2
      %s370 = smul.addr %s366, 32
      %s371 = sadd.s32 %s369, %s370
      %s372 = smul.addr %s371, 8
      %s373 = scalar_lea.vmem %s2, %s372
      %p374 = pneg %p126
      %p375 = pneg %p123
      %p376 = pneg %p147
      %p377 = pneg %p144
      %p378 = pneg %p168
      %p379 = pneg %p165
      %p380 = pneg %p189
      %p381 = pneg %p186
      %p382 = pneg %p217
      %p383 = pneg %p214
      %s384 = smul.u32 16, %s24
      %p385 = scmp.lt.s32.totalorder %s23, 1
      %s386 = scalar_select %p385, %s23, 1
      %p387 = scmp.lt.s32.totalorder %s384, 15
      %s388 = scalar_select %p387, %s384, 15
      %s389 = smul.addr %s388, 2
      %s390 = smul.addr %s386, 32
      %s391 = sadd.s32 %s389, %s390
      %s392 = smul.addr %s391, 8
      %s393 = scalar_lea.vmem %s6, %s392
      %p394 = pneg %p245
      %p395 = pneg %p242
      %p396 = scmp.lt.s32.totalorder %s23, 1
      %s397 = scalar_select %p396, %s23, 1
      %p398 = scmp.lt.s32.totalorder %s24, 0
      %s399 = scalar_select %p398, %s24, 0
      %s400 = sadd.s32 %s399, %s397
      %s401 = smul.addr %s400, 2
      %s402 = scalar_lea.vmem %s7, %s401
      %s403 = smul.u32 %s24, 16
      %s404 = ssub.s32 %s403, 1
      %p405 = scmp.gt.s32.totalorder %s404, 0
      %s406 = scalar_select %p405, %s404, 0
      %p407 = scmp.lt.s32.totalorder %s23, 1
      %s408 = scalar_select %p407, %s23, 1
      %p409 = scmp.lt.s32.totalorder %s406, 15
      %s410 = scalar_select %p409, %s406, 15
      %s411 = smul.addr %s410, 2
      %s412 = smul.addr %s408, 32
      %s413 = sadd.s32 %s411, %s412
      %s414 = smul.addr %s413, 8
      %s415 = scalar_lea.vmem %s0, %s414
      %s416 = smul.u32 %s24, 16
      %s417 = ssub.s32 %s416, 1
      %p418 = scmp.gt.s32.totalorder %s417, 0
      %s419 = scalar_select %p418, %s417, 0
      %s420 = smul.u32 16, %s24
      %p421 = scmp.lt.s32.totalorder %s23, 1
      %s422 = scalar_select %p421, %s23, 1
      %p423 = scmp.lt.s32.totalorder %s420, 15
      %s424 = scalar_select %p423, %s420, 15
      %s425 = smul.addr %s424, 2
      %s426 = smul.addr %s422, 32
      %s427 = sadd.s32 %s425, %s426
      %s428 = smul.addr %s427, 8
      %s429 = scalar_lea.vmem %s1, %s428
      %s430 = smul.u32 16, %s24
      %s431 = smul.u32 %s24, 16
      %s432 = sadd.s32 %s431, 16
      %p433 = scmp.lt.s32.totalorder %s432, 15
      %s434 = scalar_select %p433, %s432, 15
      %p435 = scmp.lt.s32.totalorder %s23, 1
      %s436 = scalar_select %p435, %s23, 1
      %p437 = scmp.lt.s32.totalorder %s434, 15
      %s438 = scalar_select %p437, %s434, 15
      %s439 = smul.addr %s438, 2
      %s440 = smul.addr %s436, 32
      %s441 = sadd.s32 %s439, %s440
      %s442 = smul.addr %s441, 8
      %s443 = scalar_lea.vmem %s2, %s442
      %s444 = smul.u32 %s24, 16
      %s445 = sadd.s32 %s444, 16
      %p446 = scmp.lt.s32.totalorder %s445, 15
      %s447 = scalar_select %p446, %s445, 15
      %s448 = smul.u32 16, %s24
      %p449 = scmp.lt.s32.totalorder %s23, 1
      %s450 = scalar_select %p449, %s23, 1
      %p451 = scmp.lt.s32.totalorder %s448, 15
      %s452 = scalar_select %p451, %s448, 15
      %s453 = smul.addr %s452, 2
      %s454 = smul.addr %s450, 32
      %s455 = sadd.s32 %s453, %s454
      %s456 = smul.addr %s455, 8
      %s457 = scalar_lea.vmem %s6, %s456
      %s458 = smul.u32 16, %s24
      %p459 = scmp.lt.s32.totalorder %s23, 1
      %s460 = scalar_select %p459, %s23, 1
      %p461 = scmp.lt.s32.totalorder %s24, 0
      %s462 = scalar_select %p461, %s24, 0
      %s463 = sadd.s32 %s462, %s460
      %s464 = smul.addr %s463, 2
      %s465 = scalar_lea.vmem %s7, %s464
      %v466 = vld [vmem:[%s429] sm:$0xff]
      %v467 = vld [vmem:[%s429 + $0x8] sm:$0xff]
      %v468 = vld [vmem:[%s429 + $0x10] sm:$0xff]
      %v469 = vld [vmem:[%s429 + $0x18] sm:$0xff]
      %v470 = vld [vmem:[%s429 + $0x20] sm:$0xff]
      %v471 = vld [vmem:[%s429 + $0x28] sm:$0xff]
      %v472 = vld [vmem:[%s429 + $0x30] sm:$0xff]
      %v473 = vld [vmem:[%s429 + $0x38] sm:$0xff]
      %v474 = vld [vmem:[%s429 + $0x40] sm:$0xff]
      %v475 = vld [vmem:[%s429 + $0x48] sm:$0xff]
      %v476 = vld [vmem:[%s429 + $0x50] sm:$0xff]
      %v477 = vld [vmem:[%s429 + $0x58] sm:$0xff]
      %v478 = vld [vmem:[%s429 + $0x60] sm:$0xff]
      %v479 = vld [vmem:[%s429 + $0x68] sm:$0xff]
      %v480 = vld [vmem:[%s429 + $0x70] sm:$0xff]
      %v481 = vld [vmem:[%s429 + $0x78] sm:$0xff]
      %v482 = vld [vmem:[%s429 + $0x80] sm:$0xff]
      %v483 = vld [vmem:[%s429 + $0x88] sm:$0xff]
      %v484 = vld [vmem:[%s429 + $0x90] sm:$0xff]
      %v485 = vld [vmem:[%s429 + $0x98] sm:$0xff]
      %v486 = vld [vmem:[%s429 + $0xa0] sm:$0xff]
      %v487 = vld [vmem:[%s429 + $0xa8] sm:$0xff]
      %v488 = vld [vmem:[%s429 + $0xb0] sm:$0xff]
      %v489 = vld [vmem:[%s429 + $0xb8] sm:$0xff]
      %v490 = vld [vmem:[%s429 + $0xc0] sm:$0xff]
      %v491 = vld [vmem:[%s429 + $0xc8] sm:$0xff]
      %v492 = vld [vmem:[%s429 + $0xd0] sm:$0xff]
      %v493 = vld [vmem:[%s429 + $0xd8] sm:$0xff]
      %v494 = vld [vmem:[%s429 + $0xe0] sm:$0xff]
      %v495 = vld [vmem:[%s429 + $0xe8] sm:$0xff]
      %v496 = vld [vmem:[%s429 + $0xf0] sm:$0xff]
      %v497 = vld [vmem:[%s429 + $0xf8] sm:$0xff]
      %v498 = vld [vmem:[%s4] sm:$0x1]
      %v499 = vld [vmem:[%s5] sm:$0x1]
      %v501 = vperm.slane %v498, 0
      %v503 = vmul.f32 %v466, %v501
      %v504 = vmul.f32 %v467, %v501
      %v505 = vmul.f32 %v468, %v501
      %v506 = vmul.f32 %v469, %v501
      %v507 = vmul.f32 %v470, %v501
      %v508 = vmul.f32 %v471, %v501
      %v509 = vmul.f32 %v472, %v501
      %v510 = vmul.f32 %v473, %v501
      %v511 = vmul.f32 %v474, %v501
      %v512 = vmul.f32 %v475, %v501
      %v513 = vmul.f32 %v476, %v501
      %v514 = vmul.f32 %v477, %v501
      %v515 = vmul.f32 %v478, %v501
      %v516 = vmul.f32 %v479, %v501
      %v517 = vmul.f32 %v480, %v501
      %v518 = vmul.f32 %v481, %v501
      %v519 = vmul.f32 %v482, %v501
      %v520 = vmul.f32 %v483, %v501
      %v521 = vmul.f32 %v484, %v501
      %v522 = vmul.f32 %v485, %v501
      %v523 = vmul.f32 %v486, %v501
      %v524 = vmul.f32 %v487, %v501
      %v525 = vmul.f32 %v488, %v501
      %v526 = vmul.f32 %v489, %v501
      %v527 = vmul.f32 %v490, %v501
      %v528 = vmul.f32 %v491, %v501
      %v529 = vmul.f32 %v492, %v501
      %v530 = vmul.f32 %v493, %v501
      %v531 = vmul.f32 %v494, %v501
      %v532 = vmul.f32 %v495, %v501
      %v533 = vmul.f32 %v496, %v501
      %v534 = vmul.f32 %v497, %v501
      %v536 = vperm.slane %v499, 0
      %v538 = vadd.f32 %v503, %v536
      %v539 = vadd.f32 %v504, %v536
      %v540 = vadd.f32 %v505, %v536
      %v541 = vadd.f32 %v506, %v536
      %v542 = vadd.f32 %v507, %v536
      %v543 = vadd.f32 %v508, %v536
      %v544 = vadd.f32 %v509, %v536
      %v545 = vadd.f32 %v510, %v536
      %v546 = vadd.f32 %v511, %v536
      %v547 = vadd.f32 %v512, %v536
      %v548 = vadd.f32 %v513, %v536
      %v549 = vadd.f32 %v514, %v536
      %v550 = vadd.f32 %v515, %v536
      %v551 = vadd.f32 %v516, %v536
      %v552 = vadd.f32 %v517, %v536
      %v553 = vadd.f32 %v518, %v536
      %v554 = vadd.f32 %v519, %v536
      %v555 = vadd.f32 %v520, %v536
      %v556 = vadd.f32 %v521, %v536
      %v557 = vadd.f32 %v522, %v536
      %v558 = vadd.f32 %v523, %v536
      %v559 = vadd.f32 %v524, %v536
      %v560 = vadd.f32 %v525, %v536
      %v561 = vadd.f32 %v526, %v536
      %v562 = vadd.f32 %v527, %v536
      %v563 = vadd.f32 %v528, %v536
      %v564 = vadd.f32 %v529, %v536
      %v565 = vadd.f32 %v530, %v536
      %v566 = vadd.f32 %v531, %v536
      %v567 = vadd.f32 %v532, %v536
      %v568 = vadd.f32 %v533, %v536
      %v569 = vadd.f32 %v534, %v536
      %v570 = vmax.f32 %v538, 0.0
      %v571 = vmax.f32 %v539, 0.0
      %v572 = vmax.f32 %v540, 0.0
      %v573 = vmax.f32 %v541, 0.0
      %v574 = vmax.f32 %v542, 0.0
      %v575 = vmax.f32 %v543, 0.0
      %v576 = vmax.f32 %v544, 0.0
      %v577 = vmax.f32 %v545, 0.0
      %v578 = vmax.f32 %v546, 0.0
      %v579 = vmax.f32 %v547, 0.0
      %v580 = vmax.f32 %v548, 0.0
      %v581 = vmax.f32 %v549, 0.0
      %v582 = vmax.f32 %v550, 0.0
      %v583 = vmax.f32 %v551, 0.0
      %v584 = vmax.f32 %v552, 0.0
      %v585 = vmax.f32 %v553, 0.0
      %v586 = vmax.f32 %v554, 0.0
      %v587 = vmax.f32 %v555, 0.0
      %v588 = vmax.f32 %v556, 0.0
      %v589 = vmax.f32 %v557, 0.0
      %v590 = vmax.f32 %v558, 0.0
      %v591 = vmax.f32 %v559, 0.0
      %v592 = vmax.f32 %v560, 0.0
      %v593 = vmax.f32 %v561, 0.0
      %v594 = vmax.f32 %v562, 0.0
      %v595 = vmax.f32 %v563, 0.0
      %v596 = vmax.f32 %v564, 0.0
      %v597 = vmax.f32 %v565, 0.0
      %v598 = vmax.f32 %v566, 0.0
      %v599 = vmax.f32 %v567, 0.0
      %v600 = vmax.f32 %v568, 0.0
      %v601 = vmax.f32 %v569, 0.0
      %v602 = vld [vmem:[%s415] sm:$0xff]
      %v603 = vld [vmem:[%s415 + $0x8] sm:$0xff]
      %v604 = vmul.f32 %v602, %v501
      %v605 = vmul.f32 %v603, %v501
      %v606 = vadd.f32 %v604, %v536
      %v607 = vadd.f32 %v605, %v536
      %v608 = vmax.f32 %v606, 0.0
      %v609 = vmax.f32 %v607, 0.0
      %p610 = scmp.gt.s32.totalorder %s24, 0
      %s611 = scalar_select %p610, 1, 0
      %s612 = scvt.s32.f32 %s611
      %v613 = vstv %s612
      %v614 = vmul.f32 %v608, %v613
      %v615 = vmul.f32 %v609, %v613
      %v616 = vld [vmem:[%s443] sm:$0xff]
      %v617 = vld [vmem:[%s443 + $0x8] sm:$0xff]
      %v618 = vmul.f32 %v616, %v501
      %v619 = vmul.f32 %v617, %v501
      %v620 = vadd.f32 %v618, %v536
      %v621 = vadd.f32 %v619, %v536
      %v622 = vmax.f32 %v620, 0.0
      %v623 = vmax.f32 %v621, 0.0
      %p624 = scmp.lt.s32.totalorder %s24, 0
      %s625 = scalar_select %p624, 1, 0
      %s626 = scvt.s32.f32 %s625
      %v627 = vstv %s626
      %v628 = vmul.f32 %v622, %v627
      %v629 = vmul.f32 %v623, %v627
      %vm666 = vcmask 1040384
      %v667 = vrot.slane %v614, 7
      %v668 = vrot.slane %v615, 7
      %v669 = vsel %vm666, %v667, %v668
      %v670 = vrot.slane %v570, 7
      %v671 = vrot.slane %v571, 7
      %v672 = vsel %vm666, %v670, %v671
      %v673 = vrot.slane %v572, 7
      %v674 = vrot.slane %v573, 7
      %v675 = vsel %vm666, %v673, %v674
      %v676 = vrot.slane %v574, 7
      %v677 = vrot.slane %v575, 7
      %v678 = vsel %vm666, %v676, %v677
      %v679 = vrot.slane %v576, 7
      %v680 = vrot.slane %v577, 7
      %v681 = vsel %vm666, %v679, %v680
      %v682 = vrot.slane %v578, 7
      %v683 = vrot.slane %v579, 7
      %v684 = vsel %vm666, %v682, %v683
      %v685 = vrot.slane %v580, 7
      %v686 = vrot.slane %v581, 7
      %v687 = vsel %vm666, %v685, %v686
      %v688 = vrot.slane %v582, 7
      %v689 = vrot.slane %v583, 7
      %v690 = vsel %vm666, %v688, %v689
      %v691 = vrot.slane %v584, 7
      %v692 = vrot.slane %v585, 7
      %v693 = vsel %vm666, %v691, %v692
      %v694 = vrot.slane %v586, 7
      %v695 = vrot.slane %v587, 7
      %v696 = vsel %vm666, %v694, %v695
      %v697 = vrot.slane %v588, 7
      %v698 = vrot.slane %v589, 7
      %v699 = vsel %vm666, %v697, %v698
      %v700 = vrot.slane %v590, 7
      %v701 = vrot.slane %v591, 7
      %v702 = vsel %vm666, %v700, %v701
      %v703 = vrot.slane %v592, 7
      %v704 = vrot.slane %v593, 7
      %v705 = vsel %vm666, %v703, %v704
      %v706 = vrot.slane %v594, 7
      %v707 = vrot.slane %v595, 7
      %v708 = vsel %vm666, %v706, %v707
      %v709 = vrot.slane %v596, 7
      %v710 = vrot.slane %v597, 7
      %v711 = vsel %vm666, %v709, %v710
      %v712 = vrot.slane %v598, 7
      %v713 = vrot.slane %v599, 7
      %v714 = vsel %vm666, %v712, %v713
      %v715 = vrot.slane %v600, 7
      %v716 = vrot.slane %v601, 7
      %v717 = vsel %vm666, %v715, %v716
      %v718 = vrot.slane %v628, 7
      %v719 = vrot.slane %v629, 7
      %v720 = vsel %vm666, %v718, %v719
      %v739 = vsel %vm666, 0.0, %v667
      %v740 = vsel %vm666, 0.0, %v670
      %v741 = vsel %vm666, 0.0, %v673
      %v742 = vsel %vm666, 0.0, %v676
      %v743 = vsel %vm666, 0.0, %v679
      %v744 = vsel %vm666, 0.0, %v682
      %v745 = vsel %vm666, 0.0, %v685
      %v746 = vsel %vm666, 0.0, %v688
      %v747 = vsel %vm666, 0.0, %v691
      %v748 = vsel %vm666, 0.0, %v694
      %v749 = vsel %vm666, 0.0, %v697
      %v750 = vsel %vm666, 0.0, %v700
      %v751 = vsel %vm666, 0.0, %v703
      %v752 = vsel %vm666, 0.0, %v706
      %v753 = vsel %vm666, 0.0, %v709
      %v754 = vsel %vm666, 0.0, %v712
      %v755 = vsel %vm666, 0.0, %v715
      %v756 = vsel %vm666, 0.0, %v718
      %vm757 = vcmask 1046528
      %v758 = vrot.slane %v614, 1
      %v759 = vrot.slane %v615, 1
      %v760 = vsel %vm757, %v758, %v759
      %v761 = vrot.slane %v570, 1
      %v762 = vrot.slane %v571, 1
      %v763 = vsel %vm757, %v761, %v762
      %v764 = vrot.slane %v572, 1
      %v765 = vrot.slane %v573, 1
      %v766 = vsel %vm757, %v764, %v765
      %v767 = vrot.slane %v574, 1
      %v768 = vrot.slane %v575, 1
      %v769 = vsel %vm757, %v767, %v768
      %v770 = vrot.slane %v576, 1
      %v771 = vrot.slane %v577, 1
      %v772 = vsel %vm757, %v770, %v771
      %v773 = vrot.slane %v578, 1
      %v774 = vrot.slane %v579, 1
      %v775 = vsel %vm757, %v773, %v774
      %v776 = vrot.slane %v580, 1
      %v777 = vrot.slane %v581, 1
      %v778 = vsel %vm757, %v776, %v777
      %v779 = vrot.slane %v582, 1
      %v780 = vrot.slane %v583, 1
      %v781 = vsel %vm757, %v779, %v780
      %v782 = vrot.slane %v584, 1
      %v783 = vrot.slane %v585, 1
      %v784 = vsel %vm757, %v782, %v783
      %v785 = vrot.slane %v586, 1
      %v786 = vrot.slane %v587, 1
      %v787 = vsel %vm757, %v785, %v786
      %v788 = vrot.slane %v588, 1
      %v789 = vrot.slane %v589, 1
      %v790 = vsel %vm757, %v788, %v789
      %v791 = vrot.slane %v590, 1
      %v792 = vrot.slane %v591, 1
      %v793 = vsel %vm757, %v791, %v792
      %v794 = vrot.slane %v592, 1
      %v795 = vrot.slane %v593, 1
      %v796 = vsel %vm757, %v794, %v795
      %v797 = vrot.slane %v594, 1
      %v798 = vrot.slane %v595, 1
      %v799 = vsel %vm757, %v797, %v798
      %v800 = vrot.slane %v596, 1
      %v801 = vrot.slane %v597, 1
      %v802 = vsel %vm757, %v800, %v801
      %v803 = vrot.slane %v598, 1
      %v804 = vrot.slane %v599, 1
      %v805 = vsel %vm757, %v803, %v804
      %v806 = vrot.slane %v600, 1
      %v807 = vrot.slane %v601, 1
      %v808 = vsel %vm757, %v806, %v807
      %v809 = vrot.slane %v628, 1
      %v810 = vrot.slane %v629, 1
      %v811 = vsel %vm757, %v809, %v810
      %v830 = vsel %vm757, %v759, 0.0
      %v831 = vsel %vm757, %v762, 0.0
      %v832 = vsel %vm757, %v765, 0.0
      %v833 = vsel %vm757, %v768, 0.0
      %v834 = vsel %vm757, %v771, 0.0
      %v835 = vsel %vm757, %v774, 0.0
      %v836 = vsel %vm757, %v777, 0.0
      %v837 = vsel %vm757, %v780, 0.0
      %v838 = vsel %vm757, %v783, 0.0
      %v839 = vsel %vm757, %v786, 0.0
      %v840 = vsel %vm757, %v789, 0.0
      %v841 = vsel %vm757, %v792, 0.0
      %v842 = vsel %vm757, %v795, 0.0
      %v843 = vsel %vm757, %v798, 0.0
      %v844 = vsel %vm757, %v801, 0.0
      %v845 = vsel %vm757, %v804, 0.0
      %v846 = vsel %vm757, %v807, 0.0
      %v847 = vsel %vm757, %v810, 0.0
      %v848 = vld [vmem:[%s3] sm:$0xff]
      %s849 = scalar_lea.vmem %s3, 8
      %v850 = vld [vmem:[%s849] sm:$0xff]
      %vm851 = vcmask 64512
      %v852 = vsel %vm851, %v614, 0
      %v854 = vsel %vm851, %v615, 0
      %v856 = vsel %vm851, %v570, 0
      %v858 = vsel %vm851, %v571, 0
      %v860 = vsel %vm851, %v572, 0
      %v862 = vsel %vm851, %v573, 0
      %v864 = vsel %vm851, %v574, 0
      %v866 = vsel %vm851, %v575, 0
      %v868 = vsel %vm851, %v576, 0
      %v870 = vsel %vm851, %v577, 0
      %v872 = vsel %vm851, %v578, 0
      %v874 = vsel %vm851, %v579, 0
      %v876 = vsel %vm851, %v580, 0
      %v878 = vsel %vm851, %v581, 0
      %v880 = vsel %vm851, %v582, 0
      %v882 = vsel %vm851, %v583, 0
      %v884 = vsel %vm851, %v584, 0
      %v886 = vsel %vm851, %v585, 0
      %v888 = vsel %vm851, %v586, 0
      %v890 = vsel %vm851, %v587, 0
      %v892 = vsel %vm851, %v588, 0
      %v894 = vsel %vm851, %v589, 0
      %v896 = vsel %vm851, %v590, 0
      %v898 = vsel %vm851, %v591, 0
      %v900 = vsel %vm851, %v592, 0
      %v902 = vsel %vm851, %v593, 0
      %v904 = vsel %vm851, %v594, 0
      %v906 = vsel %vm851, %v595, 0
      %v908 = vsel %vm851, %v596, 0
      %v910 = vsel %vm851, %v597, 0
      %v912 = vsel %vm851, %v598, 0
      %v914 = vsel %vm851, %v599, 0
      %916 = vmatpush.msra.mxu0 0.0
      %917 = vmatpush.msra.mxu0 0.0
      %918 = vmatpush.msra.mxu0 0.0
      %919 = vmatpush.msra.mxu0 0.0
      %920 = vmatpush.msra.mxu0 0.0
      %921 = vmatpush.msra.mxu0 0.0
      %922 = vmatpush.msra.mxu0 0.0
      %923 = vmatpush.msra.mxu0 0.0
      %924 = vmatpush.msra.mxu0 0.0
      %925 = vmatpush.msra.mxu0 0.0
      %926 = vmatpush.msra.mxu0 0.0
      %927 = vmatpush.msra.mxu0 0.0
      %928 = vmatpush.msra.mxu0 0.0
      %929 = vmatpush.msra.mxu0 0.0
      %930 = vmatpush.msra.mxu0 0.0
      %931 = vmatpush.msra.mxu0 %v850
      %932 = vmatmul.f32.gmra.mxu0 %v852
      %v933 = vpop.f32.mrf.mxu0
      %v934 = vadd.f32 0.0, %v933
      %935 = vmatmul.f32.gmra.mxu0 %v854
      %v936 = vpop.f32.mrf.mxu0
      %v937 = vadd.f32 0.0, %v936
      %938 = vmatmul.f32.gmra.mxu0 %v856
      %v939 = vpop.f32.mrf.mxu0
      %v940 = vadd.f32 0.0, %v939
      %941 = vmatmul.f32.gmra.mxu0 %v858
      %v942 = vpop.f32.mrf.mxu0
      %v943 = vadd.f32 0.0, %v942
      %944 = vmatmul.f32.gmra.mxu0 %v860
      %v945 = vpop.f32.mrf.mxu0
      %v946 = vadd.f32 0.0, %v945
      %947 = vmatmul.f32.gmra.mxu0 %v862
      %v948 = vpop.f32.mrf.mxu0
      %v949 = vadd.f32 0.0, %v948
      %950 = vmatmul.f32.gmra.mxu0 %v864
      %v951 = vpop.f32.mrf.mxu0
      %v952 = vadd.f32 0.0, %v951
      %953 = vmatmul.f32.gmra.mxu0 %v866
      %v954 = vpop.f32.mrf.mxu0
      %v955 = vadd.f32 0.0, %v954
      %956 = vmatmul.f32.gmra.mxu0 %v868
      %v957 = vpop.f32.mrf.mxu0
      %v958 = vadd.f32 0.0, %v957
      %959 = vmatmul.f32.gmra.mxu0 %v870
      %v960 = vpop.f32.mrf.mxu0
      %v961 = vadd.f32 0.0, %v960
      %962 = vmatmul.f32.gmra.mxu0 %v872
      %v963 = vpop.f32.mrf.mxu0
      %v964 = vadd.f32 0.0, %v963
      %965 = vmatmul.f32.gmra.mxu0 %v874
      %v966 = vpop.f32.mrf.mxu0
      %v967 = vadd.f32 0.0, %v966
      %968 = vmatmul.f32.gmra.mxu0 %v876
      %v969 = vpop.f32.mrf.mxu0
      %v970 = vadd.f32 0.0, %v969
      %971 = vmatmul.f32.gmra.mxu0 %v878
      %v972 = vpop.f32.mrf.mxu0
      %v973 = vadd.f32 0.0, %v972
      %974 = vmatmul.f32.gmra.mxu0 %v880
      %v975 = vpop.f32.mrf.mxu0
      %v976 = vadd.f32 0.0, %v975
      %977 = vmatmul.f32.gmra.mxu0 %v882
      %v978 = vpop.f32.mrf.mxu0
      %v979 = vadd.f32 0.0, %v978
      %980 = vmatmul.f32.gmra.mxu0 %v884
      %v981 = vpop.f32.mrf.mxu0
      %v982 = vadd.f32 0.0, %v981
      %983 = vmatmul.f32.gmra.mxu0 %v886
      %v984 = vpop.f32.mrf.mxu0
      %v985 = vadd.f32 0.0, %v984
      %986 = vmatmul.f32.gmra.mxu0 %v888
      %v987 = vpop.f32.mrf.mxu0
      %v988 = vadd.f32 0.0, %v987
      %989 = vmatmul.f32.gmra.mxu0 %v890
      %v990 = vpop.f32.mrf.mxu0
      %v991 = vadd.f32 0.0, %v990
      %992 = vmatmul.f32.gmra.mxu0 %v892
      %v993 = vpop.f32.mrf.mxu0
      %v994 = vadd.f32 0.0, %v993
      %995 = vmatmul.f32.gmra.mxu0 %v894
      %v996 = vpop.f32.mrf.mxu0
      %v997 = vadd.f32 0.0, %v996
      %998 = vmatmul.f32.gmra.mxu0 %v896
      %v999 = vpop.f32.mrf.mxu0
      %v1000 = vadd.f32 0.0, %v999
      %1001 = vmatmul.f32.gmra.mxu0 %v898
      %v1002 = vpop.f32.mrf.mxu0
      %v1003 = vadd.f32 0.0, %v1002
      %1004 = vmatmul.f32.gmra.mxu0 %v900
      %v1005 = vpop.f32.mrf.mxu0
      %v1006 = vadd.f32 0.0, %v1005
      %1007 = vmatmul.f32.gmra.mxu0 %v902
      %v1008 = vpop.f32.mrf.mxu0
      %v1009 = vadd.f32 0.0, %v1008
      %1010 = vmatmul.f32.gmra.mxu0 %v904
      %v1011 = vpop.f32.mrf.mxu0
      %v1012 = vadd.f32 0.0, %v1011
      %1013 = vmatmul.f32.gmra.mxu0 %v906
      %v1014 = vpop.f32.mrf.mxu0
      %v1015 = vadd.f32 0.0, %v1014
      %1016 = vmatmul.f32.gmra.mxu0 %v908
      %v1017 = vpop.f32.mrf.mxu0
      %v1018 = vadd.f32 0.0, %v1017
      %1019 = vmatmul.f32.gmra.mxu0 %v910
      %v1020 = vpop.f32.mrf.mxu0
      %v1021 = vadd.f32 0.0, %v1020
      %1022 = vmatmul.f32.gmra.mxu0 %v912
      %v1023 = vpop.f32.mrf.mxu0
      %v1024 = vadd.f32 0.0, %v1023
      %1025 = vmatmul.f32.gmra.mxu0 %v914
      %v1026 = vpop.f32.mrf.mxu0
      %v1027 = vadd.f32 0.0, %v1026
      %1028 = vdwg.mxu0
      %v1030 = vsel %vm851, %v739, 0
      %v1032 = vsel %vm851, %v669, 0
      %v1035 = vsel %vm851, %v740, 0
      %v1037 = vsel %vm851, %v672, 0
      %v1040 = vsel %vm851, %v741, 0
      %v1042 = vsel %vm851, %v675, 0
      %v1045 = vsel %vm851, %v742, 0
      %v1047 = vsel %vm851, %v678, 0
      %v1050 = vsel %vm851, %v743, 0
      %v1052 = vsel %vm851, %v681, 0
      %v1055 = vsel %vm851, %v744, 0
      %v1057 = vsel %vm851, %v684, 0
      %v1060 = vsel %vm851, %v745, 0
      %v1062 = vsel %vm851, %v687, 0
      %v1065 = vsel %vm851, %v746, 0
      %v1067 = vsel %vm851, %v690, 0
      %v1070 = vsel %vm851, %v747, 0
      %v1072 = vsel %vm851, %v693, 0
      %v1075 = vsel %vm851, %v748, 0
      %v1077 = vsel %vm851, %v696, 0
      %v1080 = vsel %vm851, %v749, 0
      %v1082 = vsel %vm851, %v699, 0
      %v1085 = vsel %vm851, %v750, 0
      %v1087 = vsel %vm851, %v702, 0
      %v1090 = vsel %vm851, %v751, 0
      %v1092 = vsel %vm851, %v705, 0
      %v1095 = vsel %vm851, %v752, 0
      %v1097 = vsel %vm851, %v708, 0
      %v1100 = vsel %vm851, %v753, 0
      %v1102 = vsel %vm851, %v711, 0
      %v1105 = vsel %vm851, %v754, 0
      %v1107 = vsel %vm851, %v714, 0
      %1109 = vmatpush.msra.mxu0 0.0
      %1110 = vmatpush.msra.mxu0 0.0
      %1111 = vmatpush.msra.mxu0 0.0
      %1112 = vmatpush.msra.mxu0 0.0
      %1113 = vmatpush.msra.mxu0 0.0
      %1114 = vmatpush.msra.mxu0 0.0
      %1115 = vmatpush.msra.mxu0 0.0
      %1116 = vmatpush.msra.mxu0 0.0
      %1117 = vmatpush.msra.mxu0 0.0
      %1118 = vmatpush.msra.mxu0 0.0
      %1119 = vmatpush.msra.mxu0 0.0
      %1120 = vmatpush.msra.mxu0 0.0
      %1121 = vmatpush.msra.mxu0 0.0
      %1122 = vmatpush.msra.mxu0 0.0
      %1123 = vmatpush.msra.mxu0 0.0
      %1124 = vmatpush.msra.mxu0 %v848
      %1125 = vmatmul.f32.gmra.mxu0 %v1030
      %v1126 = vpop.f32.mrf.mxu0
      %v1127 = vadd.f32 %v934, %v1126
      %1128 = vmatmul.f32.gmra.mxu0 %v1032
      %v1129 = vpop.f32.mrf.mxu0
      %v1130 = vadd.f32 %v937, %v1129
      %1131 = vmatmul.f32.gmra.mxu0 %v1035
      %v1132 = vpop.f32.mrf.mxu0
      %v1133 = vadd.f32 %v940, %v1132
      %1134 = vmatmul.f32.gmra.mxu0 %v1037
      %v1135 = vpop.f32.mrf.mxu0
      %v1136 = vadd.f32 %v943, %v1135
      %1137 = vmatmul.f32.gmra.mxu0 %v1040
      %v1138 = vpop.f32.mrf.mxu0
      %v1139 = vadd.f32 %v946, %v1138
      %1140 = vmatmul.f32.gmra.mxu0 %v1042
      %v1141 = vpop.f32.mrf.mxu0
      %v1142 = vadd.f32 %v949, %v1141
      %1143 = vmatmul.f32.gmra.mxu0 %v1045
      %v1144 = vpop.f32.mrf.mxu0
      %v1145 = vadd.f32 %v952, %v1144
      %1146 = vmatmul.f32.gmra.mxu0 %v1047
      %v1147 = vpop.f32.mrf.mxu0
      %v1148 = vadd.f32 %v955, %v1147
      %1149 = vmatmul.f32.gmra.mxu0 %v1050
      %v1150 = vpop.f32.mrf.mxu0
      %v1151 = vadd.f32 %v958, %v1150
      %1152 = vmatmul.f32.gmra.mxu0 %v1052
      %v1153 = vpop.f32.mrf.mxu0
      %v1154 = vadd.f32 %v961, %v1153
      %1155 = vmatmul.f32.gmra.mxu0 %v1055
      %v1156 = vpop.f32.mrf.mxu0
      %v1157 = vadd.f32 %v964, %v1156
      %1158 = vmatmul.f32.gmra.mxu0 %v1057
      %v1159 = vpop.f32.mrf.mxu0
      %v1160 = vadd.f32 %v967, %v1159
      %1161 = vmatmul.f32.gmra.mxu0 %v1060
      %v1162 = vpop.f32.mrf.mxu0
      %v1163 = vadd.f32 %v970, %v1162
      %1164 = vmatmul.f32.gmra.mxu0 %v1062
      %v1165 = vpop.f32.mrf.mxu0
      %v1166 = vadd.f32 %v973, %v1165
      %1167 = vmatmul.f32.gmra.mxu0 %v1065
      %v1168 = vpop.f32.mrf.mxu0
      %v1169 = vadd.f32 %v976, %v1168
      %1170 = vmatmul.f32.gmra.mxu0 %v1067
      %v1171 = vpop.f32.mrf.mxu0
      %v1172 = vadd.f32 %v979, %v1171
      %1173 = vmatmul.f32.gmra.mxu0 %v1070
      %v1174 = vpop.f32.mrf.mxu0
      %v1175 = vadd.f32 %v982, %v1174
      %1176 = vmatmul.f32.gmra.mxu0 %v1072
      %v1177 = vpop.f32.mrf.mxu0
      %v1178 = vadd.f32 %v985, %v1177
      %1179 = vmatmul.f32.gmra.mxu0 %v1075
      %v1180 = vpop.f32.mrf.mxu0
      %v1181 = vadd.f32 %v988, %v1180
      %1182 = vmatmul.f32.gmra.mxu0 %v1077
      %v1183 = vpop.f32.mrf.mxu0
      %v1184 = vadd.f32 %v991, %v1183
      %1185 = vmatmul.f32.gmra.mxu0 %v1080
      %v1186 = vpop.f32.mrf.mxu0
      %v1187 = vadd.f32 %v994, %v1186
      %1188 = vmatmul.f32.gmra.mxu0 %v1082
      %v1189 = vpop.f32.mrf.mxu0
      %v1190 = vadd.f32 %v997, %v1189
      %1191 = vmatmul.f32.gmra.mxu0 %v1085
      %v1192 = vpop.f32.mrf.mxu0
      %v1193 = vadd.f32 %v1000, %v1192
      %1194 = vmatmul.f32.gmra.mxu0 %v1087
      %v1195 = vpop.f32.mrf.mxu0
      %v1196 = vadd.f32 %v1003, %v1195
      %1197 = vmatmul.f32.gmra.mxu0 %v1090
      %v1198 = vpop.f32.mrf.mxu0
      %v1199 = vadd.f32 %v1006, %v1198
      %1200 = vmatmul.f32.gmra.mxu0 %v1092
      %v1201 = vpop.f32.mrf.mxu0
      %v1202 = vadd.f32 %v1009, %v1201
      %1203 = vmatmul.f32.gmra.mxu0 %v1095
      %v1204 = vpop.f32.mrf.mxu0
      %v1205 = vadd.f32 %v1012, %v1204
      %1206 = vmatmul.f32.gmra.mxu0 %v1097
      %v1207 = vpop.f32.mrf.mxu0
      %v1208 = vadd.f32 %v1015, %v1207
      %1209 = vmatmul.f32.gmra.mxu0 %v1100
      %v1210 = vpop.f32.mrf.mxu0
      %v1211 = vadd.f32 %v1018, %v1210
      %1212 = vmatmul.f32.gmra.mxu0 %v1102
      %v1213 = vpop.f32.mrf.mxu0
      %v1214 = vadd.f32 %v1021, %v1213
      %1215 = vmatmul.f32.gmra.mxu0 %v1105
      %v1216 = vpop.f32.mrf.mxu0
      %v1217 = vadd.f32 %v1024, %v1216
      %1218 = vmatmul.f32.gmra.mxu0 %v1107
      %v1219 = vpop.f32.mrf.mxu0
      %v1220 = vadd.f32 %v1027, %v1219
      %1221 = vdwg.mxu0
      %s1222 = scalar_lea.vmem %s3, 16
      %v1223 = vld [vmem:[%s1222] sm:$0xff]
      %v1224 = vsel %vm851, %v760, 0
      %v1227 = vsel %vm851, %v830, 0
      %v1229 = vsel %vm851, %v763, 0
      %v1232 = vsel %vm851, %v831, 0
      %v1234 = vsel %vm851, %v766, 0
      %v1237 = vsel %vm851, %v832, 0
      %v1239 = vsel %vm851, %v769, 0
      %v1242 = vsel %vm851, %v833, 0
      %v1244 = vsel %vm851, %v772, 0
      %v1247 = vsel %vm851, %v834, 0
      %v1249 = vsel %vm851, %v775, 0
      %v1252 = vsel %vm851, %v835, 0
      %v1254 = vsel %vm851, %v778, 0
      %v1257 = vsel %vm851, %v836, 0
      %v1259 = vsel %vm851, %v781, 0
      %v1262 = vsel %vm851, %v837, 0
      %v1264 = vsel %vm851, %v784, 0
      %v1267 = vsel %vm851, %v838, 0
      %v1269 = vsel %vm851, %v787, 0
      %v1272 = vsel %vm851, %v839, 0
      %v1274 = vsel %vm851, %v790, 0
      %v1277 = vsel %vm851, %v840, 0
      %v1279 = vsel %vm851, %v793, 0
      %v1282 = vsel %vm851, %v841, 0
      %v1284 = vsel %vm851, %v796, 0
      %v1287 = vsel %vm851, %v842, 0
      %v1289 = vsel %vm851, %v799, 0
      %v1292 = vsel %vm851, %v843, 0
      %v1294 = vsel %vm851, %v802, 0
      %v1297 = vsel %vm851, %v844, 0
      %v1299 = vsel %vm851, %v805, 0
      %v1302 = vsel %vm851, %v845, 0
      %1304 = vmatpush.msra.mxu0 0.0
      %1305 = vmatpush.msra.mxu0 0.0
      %1306 = vmatpush.msra.mxu0 0.0
      %1307 = vmatpush.msra.mxu0 0.0
      %1308 = vmatpush.msra.mxu0 0.0
      %1309 = vmatpush.msra.mxu0 0.0
      %1310 = vmatpush.msra.mxu0 0.0
      %1311 = vmatpush.msra.mxu0 0.0
      %1312 = vmatpush.msra.mxu0 0.0
      %1313 = vmatpush.msra.mxu0 0.0
      %1314 = vmatpush.msra.mxu0 0.0
      %1315 = vmatpush.msra.mxu0 0.0
      %1316 = vmatpush.msra.mxu0 0.0
      %1317 = vmatpush.msra.mxu0 0.0
      %1318 = vmatpush.msra.mxu0 0.0
      %1319 = vmatpush.msra.mxu0 %v1223
      %1320 = vmatmul.f32.gmra.mxu0 %v1224
      %v1321 = vpop.f32.mrf.mxu0
      %v1322 = vadd.f32 0.0, %v1321
      %1323 = vmatmul.f32.gmra.mxu0 %v1227
      %v1324 = vpop.f32.mrf.mxu0
      %v1325 = vadd.f32 0.0, %v1324
      %1326 = vmatmul.f32.gmra.mxu0 %v1229
      %v1327 = vpop.f32.mrf.mxu0
      %v1328 = vadd.f32 0.0, %v1327
      %1329 = vmatmul.f32.gmra.mxu0 %v1232
      %v1330 = vpop.f32.mrf.mxu0
      %v1331 = vadd.f32 0.0, %v1330
      %1332 = vmatmul.f32.gmra.mxu0 %v1234
      %v1333 = vpop.f32.mrf.mxu0
      %v1334 = vadd.f32 0.0, %v1333
      %1335 = vmatmul.f32.gmra.mxu0 %v1237
      %v1336 = vpop.f32.mrf.mxu0
      %v1337 = vadd.f32 0.0, %v1336
      %1338 = vmatmul.f32.gmra.mxu0 %v1239
      %v1339 = vpop.f32.mrf.mxu0
      %v1340 = vadd.f32 0.0, %v1339
      %1341 = vmatmul.f32.gmra.mxu0 %v1242
      %v1342 = vpop.f32.mrf.mxu0
      %v1343 = vadd.f32 0.0, %v1342
      %1344 = vmatmul.f32.gmra.mxu0 %v1244
      %v1345 = vpop.f32.mrf.mxu0
      %v1346 = vadd.f32 0.0, %v1345
      %1347 = vmatmul.f32.gmra.mxu0 %v1247
      %v1348 = vpop.f32.mrf.mxu0
      %v1349 = vadd.f32 0.0, %v1348
      %1350 = vmatmul.f32.gmra.mxu0 %v1249
      %v1351 = vpop.f32.mrf.mxu0
      %v1352 = vadd.f32 0.0, %v1351
      %1353 = vmatmul.f32.gmra.mxu0 %v1252
      %v1354 = vpop.f32.mrf.mxu0
      %v1355 = vadd.f32 0.0, %v1354
      %1356 = vmatmul.f32.gmra.mxu0 %v1254
      %v1357 = vpop.f32.mrf.mxu0
      %v1358 = vadd.f32 0.0, %v1357
      %1359 = vmatmul.f32.gmra.mxu0 %v1257
      %v1360 = vpop.f32.mrf.mxu0
      %v1361 = vadd.f32 0.0, %v1360
      %1362 = vmatmul.f32.gmra.mxu0 %v1259
      %v1363 = vpop.f32.mrf.mxu0
      %v1364 = vadd.f32 0.0, %v1363
      %1365 = vmatmul.f32.gmra.mxu0 %v1262
      %v1366 = vpop.f32.mrf.mxu0
      %v1367 = vadd.f32 0.0, %v1366
      %1368 = vmatmul.f32.gmra.mxu0 %v1264
      %v1369 = vpop.f32.mrf.mxu0
      %v1370 = vadd.f32 0.0, %v1369
      %1371 = vmatmul.f32.gmra.mxu0 %v1267
      %v1372 = vpop.f32.mrf.mxu0
      %v1373 = vadd.f32 0.0, %v1372
      %1374 = vmatmul.f32.gmra.mxu0 %v1269
      %v1375 = vpop.f32.mrf.mxu0
      %v1376 = vadd.f32 0.0, %v1375
      %1377 = vmatmul.f32.gmra.mxu0 %v1272
      %v1378 = vpop.f32.mrf.mxu0
      %v1379 = vadd.f32 0.0, %v1378
      %1380 = vmatmul.f32.gmra.mxu0 %v1274
      %v1381 = vpop.f32.mrf.mxu0
      %v1382 = vadd.f32 0.0, %v1381
      %1383 = vmatmul.f32.gmra.mxu0 %v1277
      %v1384 = vpop.f32.mrf.mxu0
      %v1385 = vadd.f32 0.0, %v1384
      %1386 = vmatmul.f32.gmra.mxu0 %v1279
      %v1387 = vpop.f32.mrf.mxu0
      %v1388 = vadd.f32 0.0, %v1387
      %1389 = vmatmul.f32.gmra.mxu0 %v1282
      %v1390 = vpop.f32.mrf.mxu0
      %v1391 = vadd.f32 0.0, %v1390
      %1392 = vmatmul.f32.gmra.mxu0 %v1284
      %v1393 = vpop.f32.mrf.mxu0
      %v1394 = vadd.f32 0.0, %v1393
      %1395 = vmatmul.f32.gmra.mxu0 %v1287
      %v1396 = vpop.f32.mrf.mxu0
      %v1397 = vadd.f32 0.0, %v1396
      %1398 = vmatmul.f32.gmra.mxu0 %v1289
      %v1399 = vpop.f32.mrf.mxu0
      %v1400 = vadd.f32 0.0, %v1399
      %1401 = vmatmul.f32.gmra.mxu0 %v1292
      %v1402 = vpop.f32.mrf.mxu0
      %v1403 = vadd.f32 0.0, %v1402
      %1404 = vmatmul.f32.gmra.mxu0 %v1294
      %v1405 = vpop.f32.mrf.mxu0
      %v1406 = vadd.f32 0.0, %v1405
      %1407 = vmatmul.f32.gmra.mxu0 %v1297
      %v1408 = vpop.f32.mrf.mxu0
      %v1409 = vadd.f32 0.0, %v1408
      %1410 = vmatmul.f32.gmra.mxu0 %v1299
      %v1411 = vpop.f32.mrf.mxu0
      %v1412 = vadd.f32 0.0, %v1411
      %1413 = vmatmul.f32.gmra.mxu0 %v1302
      %v1414 = vpop.f32.mrf.mxu0
      %v1415 = vadd.f32 0.0, %v1414
      %1416 = vdwg.mxu0
      %v1417 = vadd.f32 %v1127, %v1322
      %v1418 = vadd.f32 %v1130, %v1325
      %v1419 = vadd.f32 %v1133, %v1328
      %v1420 = vadd.f32 %v1136, %v1331
      %v1421 = vadd.f32 %v1139, %v1334
      %v1422 = vadd.f32 %v1142, %v1337
      %v1423 = vadd.f32 %v1145, %v1340
      %v1424 = vadd.f32 %v1148, %v1343
      %v1425 = vadd.f32 %v1151, %v1346
      %v1426 = vadd.f32 %v1154, %v1349
      %v1427 = vadd.f32 %v1157, %v1352
      %v1428 = vadd.f32 %v1160, %v1355
      %v1429 = vadd.f32 %v1163, %v1358
      %v1430 = vadd.f32 %v1166, %v1361
      %v1431 = vadd.f32 %v1169, %v1364
      %v1432 = vadd.f32 %v1172, %v1367
      %v1433 = vadd.f32 %v1175, %v1370
      %v1434 = vadd.f32 %v1178, %v1373
      %v1435 = vadd.f32 %v1181, %v1376
      %v1436 = vadd.f32 %v1184, %v1379
      %v1437 = vadd.f32 %v1187, %v1382
      %v1438 = vadd.f32 %v1190, %v1385
      %v1439 = vadd.f32 %v1193, %v1388
      %v1440 = vadd.f32 %v1196, %v1391
      %v1441 = vadd.f32 %v1199, %v1394
      %v1442 = vadd.f32 %v1202, %v1397
      %v1443 = vadd.f32 %v1205, %v1400
      %v1444 = vadd.f32 %v1208, %v1403
      %v1445 = vadd.f32 %v1211, %v1406
      %v1446 = vadd.f32 %v1214, %v1409
      %v1447 = vadd.f32 %v1217, %v1412
      %v1448 = vadd.f32 %v1220, %v1415
      %s1449 = scalar_lea.vmem %s3, 24
      %v1450 = vld [vmem:[%s1449] sm:$0xff]
      %v1452 = vsel %vm851, %v755, 0
      %v1454 = vsel %vm851, %v717, 0
      %1456 = vmatpush.msra.mxu0 0.0
      %1457 = vmatpush.msra.mxu0 0.0
      %1458 = vmatpush.msra.mxu0 0.0
      %1459 = vmatpush.msra.mxu0 0.0
      %1460 = vmatpush.msra.mxu0 0.0
      %1461 = vmatpush.msra.mxu0 0.0
      %1462 = vmatpush.msra.mxu0 0.0
      %1463 = vmatpush.msra.mxu0 0.0
      %1464 = vmatpush.msra.mxu0 0.0
      %1465 = vmatpush.msra.mxu0 0.0
      %1466 = vmatpush.msra.mxu0 0.0
      %1467 = vmatpush.msra.mxu0 0.0
      %1468 = vmatpush.msra.mxu0 0.0
      %1469 = vmatpush.msra.mxu0 0.0
      %1470 = vmatpush.msra.mxu0 0.0
      %1471 = vmatpush.msra.mxu0 %v1450
      %1472 = vmatmul.f32.gmra.mxu0 %v1035
      %v1473 = vpop.f32.mrf.mxu0
      %v1474 = vadd.f32 0.0, %v1473
      %1475 = vmatmul.f32.gmra.mxu0 %v1037
      %v1476 = vpop.f32.mrf.mxu0
      %v1477 = vadd.f32 0.0, %v1476
      %1478 = vmatmul.f32.gmra.mxu0 %v1040
      %v1479 = vpop.f32.mrf.mxu0
      %v1480 = vadd.f32 0.0, %v1479
      %1481 = vmatmul.f32.gmra.mxu0 %v1042
      %v1482 = vpop.f32.mrf.mxu0
      %v1483 = vadd.f32 0.0, %v1482
      %1484 = vmatmul.f32.gmra.mxu0 %v1045
      %v1485 = vpop.f32.mrf.mxu0
      %v1486 = vadd.f32 0.0, %v1485
      %1487 = vmatmul.f32.gmra.mxu0 %v1047
      %v1488 = vpop.f32.mrf.mxu0
      %v1489 = vadd.f32 0.0, %v1488
      %1490 = vmatmul.f32.gmra.mxu0 %v1050
      %v1491 = vpop.f32.mrf.mxu0
      %v1492 = vadd.f32 0.0, %v1491
      %1493 = vmatmul.f32.gmra.mxu0 %v1052
      %v1494 = vpop.f32.mrf.mxu0
      %v1495 = vadd.f32 0.0, %v1494
      %1496 = vmatmul.f32.gmra.mxu0 %v1055
      %v1497 = vpop.f32.mrf.mxu0
      %v1498 = vadd.f32 0.0, %v1497
      %1499 = vmatmul.f32.gmra.mxu0 %v1057
      %v1500 = vpop.f32.mrf.mxu0
      %v1501 = vadd.f32 0.0, %v1500
      %1502 = vmatmul.f32.gmra.mxu0 %v1060
      %v1503 = vpop.f32.mrf.mxu0
      %v1504 = vadd.f32 0.0, %v1503
      %1505 = vmatmul.f32.gmra.mxu0 %v1062
      %v1506 = vpop.f32.mrf.mxu0
      %v1507 = vadd.f32 0.0, %v1506
      %1508 = vmatmul.f32.gmra.mxu0 %v1065
      %v1509 = vpop.f32.mrf.mxu0
      %v1510 = vadd.f32 0.0, %v1509
      %1511 = vmatmul.f32.gmra.mxu0 %v1067
      %v1512 = vpop.f32.mrf.mxu0
      %v1513 = vadd.f32 0.0, %v1512
      %1514 = vmatmul.f32.gmra.mxu0 %v1070
      %v1515 = vpop.f32.mrf.mxu0
      %v1516 = vadd.f32 0.0, %v1515
      %1517 = vmatmul.f32.gmra.mxu0 %v1072
      %v1518 = vpop.f32.mrf.mxu0
      %v1519 = vadd.f32 0.0, %v1518
      %1520 = vmatmul.f32.gmra.mxu0 %v1075
      %v1521 = vpop.f32.mrf.mxu0
      %v1522 = vadd.f32 0.0, %v1521
      %1523 = vmatmul.f32.gmra.mxu0 %v1077
      %v1524 = vpop.f32.mrf.mxu0
      %v1525 = vadd.f32 0.0, %v1524
      %1526 = vmatmul.f32.gmra.mxu0 %v1080
      %v1527 = vpop.f32.mrf.mxu0
      %v1528 = vadd.f32 0.0, %v1527
      %1529 = vmatmul.f32.gmra.mxu0 %v1082
      %v1530 = vpop.f32.mrf.mxu0
      %v1531 = vadd.f32 0.0, %v1530
      %1532 = vmatmul.f32.gmra.mxu0 %v1085
      %v1533 = vpop.f32.mrf.mxu0
      %v1534 = vadd.f32 0.0, %v1533
      %1535 = vmatmul.f32.gmra.mxu0 %v1087
      %v1536 = vpop.f32.mrf.mxu0
      %v1537 = vadd.f32 0.0, %v1536
      %1538 = vmatmul.f32.gmra.mxu0 %v1090
      %v1539 = vpop.f32.mrf.mxu0
      %v1540 = vadd.f32 0.0, %v1539
      %1541 = vmatmul.f32.gmra.mxu0 %v1092
      %v1542 = vpop.f32.mrf.mxu0
      %v1543 = vadd.f32 0.0, %v1542
      %1544 = vmatmul.f32.gmra.mxu0 %v1095
      %v1545 = vpop.f32.mrf.mxu0
      %v1546 = vadd.f32 0.0, %v1545
      %1547 = vmatmul.f32.gmra.mxu0 %v1097
      %v1548 = vpop.f32.mrf.mxu0
      %v1549 = vadd.f32 0.0, %v1548
      %1550 = vmatmul.f32.gmra.mxu0 %v1100
      %v1551 = vpop.f32.mrf.mxu0
      %v1552 = vadd.f32 0.0, %v1551
      %1553 = vmatmul.f32.gmra.mxu0 %v1102
      %v1554 = vpop.f32.mrf.mxu0
      %v1555 = vadd.f32 0.0, %v1554
      %1556 = vmatmul.f32.gmra.mxu0 %v1105
      %v1557 = vpop.f32.mrf.mxu0
      %v1558 = vadd.f32 0.0, %v1557
      %1559 = vmatmul.f32.gmra.mxu0 %v1107
      %v1560 = vpop.f32.mrf.mxu0
      %v1561 = vadd.f32 0.0, %v1560
      %1562 = vmatmul.f32.gmra.mxu0 %v1452
      %v1563 = vpop.f32.mrf.mxu0
      %v1564 = vadd.f32 0.0, %v1563
      %1565 = vmatmul.f32.gmra.mxu0 %v1454
      %v1566 = vpop.f32.mrf.mxu0
      %v1567 = vadd.f32 0.0, %v1566
      %1568 = vdwg.mxu0
      %v1569 = vadd.f32 %v1417, %v1474
      %v1570 = vadd.f32 %v1418, %v1477
      %v1571 = vadd.f32 %v1419, %v1480
      %v1572 = vadd.f32 %v1420, %v1483
      %v1573 = vadd.f32 %v1421, %v1486
      %v1574 = vadd.f32 %v1422, %v1489
      %v1575 = vadd.f32 %v1423, %v1492
      %v1576 = vadd.f32 %v1424, %v1495
      %v1577 = vadd.f32 %v1425, %v1498
      %v1578 = vadd.f32 %v1426, %v1501
      %v1579 = vadd.f32 %v1427, %v1504
      %v1580 = vadd.f32 %v1428, %v1507
      %v1581 = vadd.f32 %v1429, %v1510
      %v1582 = vadd.f32 %v1430, %v1513
      %v1583 = vadd.f32 %v1431, %v1516
      %v1584 = vadd.f32 %v1432, %v1519
      %v1585 = vadd.f32 %v1433, %v1522
      %v1586 = vadd.f32 %v1434, %v1525
      %v1587 = vadd.f32 %v1435, %v1528
      %v1588 = vadd.f32 %v1436, %v1531
      %v1589 = vadd.f32 %v1437, %v1534
      %v1590 = vadd.f32 %v1438, %v1537
      %v1591 = vadd.f32 %v1439, %v1540
      %v1592 = vadd.f32 %v1440, %v1543
      %v1593 = vadd.f32 %v1441, %v1546
      %v1594 = vadd.f32 %v1442, %v1549
      %v1595 = vadd.f32 %v1443, %v1552
      %v1596 = vadd.f32 %v1444, %v1555
      %v1597 = vadd.f32 %v1445, %v1558
      %v1598 = vadd.f32 %v1446, %v1561
      %v1599 = vadd.f32 %v1447, %v1564
      %v1600 = vadd.f32 %v1448, %v1567
      %s1601 = scalar_lea.vmem %s3, 32
      %v1602 = vld [vmem:[%s1601] sm:$0xff]
      %v1603 = vsel %vm851, %v600, 0
      %v1605 = vsel %vm851, %v601, 0
      %1607 = vmatpush.msra.mxu0 0.0
      %1608 = vmatpush.msra.mxu0 0.0
      %1609 = vmatpush.msra.mxu0 0.0
      %1610 = vmatpush.msra.mxu0 0.0
      %1611 = vmatpush.msra.mxu0 0.0
      %1612 = vmatpush.msra.mxu0 0.0
      %1613 = vmatpush.msra.mxu0 0.0
      %1614 = vmatpush.msra.mxu0 0.0
      %1615 = vmatpush.msra.mxu0 0.0
      %1616 = vmatpush.msra.mxu0 0.0
      %1617 = vmatpush.msra.mxu0 0.0
      %1618 = vmatpush.msra.mxu0 0.0
      %1619 = vmatpush.msra.mxu0 0.0
      %1620 = vmatpush.msra.mxu0 0.0
      %1621 = vmatpush.msra.mxu0 0.0
      %1622 = vmatpush.msra.mxu0 %v1602
      %1623 = vmatmul.f32.gmra.mxu0 %v856
      %v1624 = vpop.f32.mrf.mxu0
      %v1625 = vadd.f32 0.0, %v1624
      %1626 = vmatmul.f32.gmra.mxu0 %v858
      %v1627 = vpop.f32.mrf.mxu0
      %v1628 = vadd.f32 0.0, %v1627
      %1629 = vmatmul.f32.gmra.mxu0 %v860
      %v1630 = vpop.f32.mrf.mxu0
      %v1631 = vadd.f32 0.0, %v1630
      %1632 = vmatmul.f32.gmra.mxu0 %v862
      %v1633 = vpop.f32.mrf.mxu0
      %v1634 = vadd.f32 0.0, %v1633
      %1635 = vmatmul.f32.gmra.mxu0 %v864
      %v1636 = vpop.f32.mrf.mxu0
      %v1637 = vadd.f32 0.0, %v1636
      %1638 = vmatmul.f32.gmra.mxu0 %v866
      %v1639 = vpop.f32.mrf.mxu0
      %v1640 = vadd.f32 0.0, %v1639
      %1641 = vmatmul.f32.gmra.mxu0 %v868
      %v1642 = vpop.f32.mrf.mxu0
      %v1643 = vadd.f32 0.0, %v1642
      %1644 = vmatmul.f32.gmra.mxu0 %v870
      %v1645 = vpop.f32.mrf.mxu0
      %v1646 = vadd.f32 0.0, %v1645
      %1647 = vmatmul.f32.gmra.mxu0 %v872
      %v1648 = vpop.f32.mrf.mxu0
      %v1649 = vadd.f32 0.0, %v1648
      %1650 = vmatmul.f32.gmra.mxu0 %v874
      %v1651 = vpop.f32.mrf.mxu0
      %v1652 = vadd.f32 0.0, %v1651
      %1653 = vmatmul.f32.gmra.mxu0 %v876
      %v1654 = vpop.f32.mrf.mxu0
      %v1655 = vadd.f32 0.0, %v1654
      %1656 = vmatmul.f32.gmra.mxu0 %v878
      %v1657 = vpop.f32.mrf.mxu0
      %v1658 = vadd.f32 0.0, %v1657
      %1659 = vmatmul.f32.gmra.mxu0 %v880
      %v1660 = vpop.f32.mrf.mxu0
      %v1661 = vadd.f32 0.0, %v1660
      %1662 = vmatmul.f32.gmra.mxu0 %v882
      %v1663 = vpop.f32.mrf.mxu0
      %v1664 = vadd.f32 0.0, %v1663
      %1665 = vmatmul.f32.gmra.mxu0 %v884
      %v1666 = vpop.f32.mrf.mxu0
      %v1667 = vadd.f32 0.0, %v1666
      %1668 = vmatmul.f32.gmra.mxu0 %v886
      %v1669 = vpop.f32.mrf.mxu0
      %v1670 = vadd.f32 0.0, %v1669
      %1671 = vmatmul.f32.gmra.mxu0 %v888
      %v1672 = vpop.f32.mrf.mxu0
      %v1673 = vadd.f32 0.0, %v1672
      %1674 = vmatmul.f32.gmra.mxu0 %v890
      %v1675 = vpop.f32.mrf.mxu0
      %v1676 = vadd.f32 0.0, %v1675
      %1677 = vmatmul.f32.gmra.mxu0 %v892
      %v1678 = vpop.f32.mrf.mxu0
      %v1679 = vadd.f32 0.0, %v1678
      %1680 = vmatmul.f32.gmra.mxu0 %v894
      %v1681 = vpop.f32.mrf.mxu0
      %v1682 = vadd.f32 0.0, %v1681
      %1683 = vmatmul.f32.gmra.mxu0 %v896
      %v1684 = vpop.f32.mrf.mxu0
      %v1685 = vadd.f32 0.0, %v1684
      %1686 = vmatmul.f32.gmra.mxu0 %v898
      %v1687 = vpop.f32.mrf.mxu0
      %v1688 = vadd.f32 0.0, %v1687
      %1689 = vmatmul.f32.gmra.mxu0 %v900
      %v1690 = vpop.f32.mrf.mxu0
      %v1691 = vadd.f32 0.0, %v1690
      %1692 = vmatmul.f32.gmra.mxu0 %v902
      %v1693 = vpop.f32.mrf.mxu0
      %v1694 = vadd.f32 0.0, %v1693
      %1695 = vmatmul.f32.gmra.mxu0 %v904
      %v1696 = vpop.f32.mrf.mxu0
      %v1697 = vadd.f32 0.0, %v1696
      %1698 = vmatmul.f32.gmra.mxu0 %v906
      %v1699 = vpop.f32.mrf.mxu0
      %v1700 = vadd.f32 0.0, %v1699
      %1701 = vmatmul.f32.gmra.mxu0 %v908
      %v1702 = vpop.f32.mrf.mxu0
      %v1703 = vadd.f32 0.0, %v1702
      %1704 = vmatmul.f32.gmra.mxu0 %v910
      %v1705 = vpop.f32.mrf.mxu0
      %v1706 = vadd.f32 0.0, %v1705
      %1707 = vmatmul.f32.gmra.mxu0 %v912
      %v1708 = vpop.f32.mrf.mxu0
      %v1709 = vadd.f32 0.0, %v1708
      %1710 = vmatmul.f32.gmra.mxu0 %v914
      %v1711 = vpop.f32.mrf.mxu0
      %v1712 = vadd.f32 0.0, %v1711
      %1713 = vmatmul.f32.gmra.mxu0 %v1603
      %v1714 = vpop.f32.mrf.mxu0
      %v1715 = vadd.f32 0.0, %v1714
      %1716 = vmatmul.f32.gmra.mxu0 %v1605
      %v1717 = vpop.f32.mrf.mxu0
      %v1718 = vadd.f32 0.0, %v1717
      %1719 = vdwg.mxu0
      %v1720 = vadd.f32 %v1569, %v1625
      %v1721 = vadd.f32 %v1570, %v1628
      %v1722 = vadd.f32 %v1571, %v1631
      %v1723 = vadd.f32 %v1572, %v1634
      %v1724 = vadd.f32 %v1573, %v1637
      %v1725 = vadd.f32 %v1574, %v1640
      %v1726 = vadd.f32 %v1575, %v1643
      %v1727 = vadd.f32 %v1576, %v1646
      %v1728 = vadd.f32 %v1577, %v1649
      %v1729 = vadd.f32 %v1578, %v1652
      %v1730 = vadd.f32 %v1579, %v1655
      %v1731 = vadd.f32 %v1580, %v1658
      %v1732 = vadd.f32 %v1581, %v1661
      %v1733 = vadd.f32 %v1582, %v1664
      %v1734 = vadd.f32 %v1583, %v1667
      %v1735 = vadd.f32 %v1584, %v1670
      %v1736 = vadd.f32 %v1585, %v1673
      %v1737 = vadd.f32 %v1586, %v1676
      %v1738 = vadd.f32 %v1587, %v1679
      %v1739 = vadd.f32 %v1588, %v1682
      %v1740 = vadd.f32 %v1589, %v1685
      %v1741 = vadd.f32 %v1590, %v1688
      %v1742 = vadd.f32 %v1591, %v1691
      %v1743 = vadd.f32 %v1592, %v1694
      %v1744 = vadd.f32 %v1593, %v1697
      %v1745 = vadd.f32 %v1594, %v1700
      %v1746 = vadd.f32 %v1595, %v1703
      %v1747 = vadd.f32 %v1596, %v1706
      %v1748 = vadd.f32 %v1597, %v1709
      %v1749 = vadd.f32 %v1598, %v1712
      %v1750 = vadd.f32 %v1599, %v1715
      %v1751 = vadd.f32 %v1600, %v1718
      %s1752 = scalar_lea.vmem %s3, 40
      %v1753 = vld [vmem:[%s1752] sm:$0xff]
      %v1754 = vsel %vm851, %v808, 0
      %v1757 = vsel %vm851, %v846, 0
      %1759 = vmatpush.msra.mxu0 0.0
      %1760 = vmatpush.msra.mxu0 0.0
      %1761 = vmatpush.msra.mxu0 0.0
      %1762 = vmatpush.msra.mxu0 0.0
      %1763 = vmatpush.msra.mxu0 0.0
      %1764 = vmatpush.msra.mxu0 0.0
      %1765 = vmatpush.msra.mxu0 0.0
      %1766 = vmatpush.msra.mxu0 0.0
      %1767 = vmatpush.msra.mxu0 0.0
      %1768 = vmatpush.msra.mxu0 0.0
      %1769 = vmatpush.msra.mxu0 0.0
      %1770 = vmatpush.msra.mxu0 0.0
      %1771 = vmatpush.msra.mxu0 0.0
      %1772 = vmatpush.msra.mxu0 0.0
      %1773 = vmatpush.msra.mxu0 0.0
      %1774 = vmatpush.msra.mxu0 %v1753
      %1775 = vmatmul.f32.gmra.mxu0 %v1229
      %v1776 = vpop.f32.mrf.mxu0
      %v1777 = vadd.f32 0.0, %v1776
      %1778 = vmatmul.f32.gmra.mxu0 %v1232
      %v1779 = vpop.f32.mrf.mxu0
      %v1780 = vadd.f32 0.0, %v1779
      %1781 = vmatmul.f32.gmra.mxu0 %v1234
      %v1782 = vpop.f32.mrf.mxu0
      %v1783 = vadd.f32 0.0, %v1782
      %1784 = vmatmul.f32.gmra.mxu0 %v1237
      %v1785 = vpop.f32.mrf.mxu0
      %v1786 = vadd.f32 0.0, %v1785
      %1787 = vmatmul.f32.gmra.mxu0 %v1239
      %v1788 = vpop.f32.mrf.mxu0
      %v1789 = vadd.f32 0.0, %v1788
      %1790 = vmatmul.f32.gmra.mxu0 %v1242
      %v1791 = vpop.f32.mrf.mxu0
      %v1792 = vadd.f32 0.0, %v1791
      %1793 = vmatmul.f32.gmra.mxu0 %v1244
      %v1794 = vpop.f32.mrf.mxu0
      %v1795 = vadd.f32 0.0, %v1794
      %1796 = vmatmul.f32.gmra.mxu0 %v1247
      %v1797 = vpop.f32.mrf.mxu0
      %v1798 = vadd.f32 0.0, %v1797
      %1799 = vmatmul.f32.gmra.mxu0 %v1249
      %v1800 = vpop.f32.mrf.mxu0
      %v1801 = vadd.f32 0.0, %v1800
      %1802 = vmatmul.f32.gmra.mxu0 %v1252
      %v1803 = vpop.f32.mrf.mxu0
      %v1804 = vadd.f32 0.0, %v1803
      %1805 = vmatmul.f32.gmra.mxu0 %v1254
      %v1806 = vpop.f32.mrf.mxu0
      %v1807 = vadd.f32 0.0, %v1806
      %1808 = vmatmul.f32.gmra.mxu0 %v1257
      %v1809 = vpop.f32.mrf.mxu0
      %v1810 = vadd.f32 0.0, %v1809
      %1811 = vmatmul.f32.gmra.mxu0 %v1259
      %v1812 = vpop.f32.mrf.mxu0
      %v1813 = vadd.f32 0.0, %v1812
      %1814 = vmatmul.f32.gmra.mxu0 %v1262
      %v1815 = vpop.f32.mrf.mxu0
      %v1816 = vadd.f32 0.0, %v1815
      %1817 = vmatmul.f32.gmra.mxu0 %v1264
      %v1818 = vpop.f32.mrf.mxu0
      %v1819 = vadd.f32 0.0, %v1818
      %1820 = vmatmul.f32.gmra.mxu0 %v1267
      %v1821 = vpop.f32.mrf.mxu0
      %v1822 = vadd.f32 0.0, %v1821
      %1823 = vmatmul.f32.gmra.mxu0 %v1269
      %v1824 = vpop.f32.mrf.mxu0
      %v1825 = vadd.f32 0.0, %v1824
      %1826 = vmatmul.f32.gmra.mxu0 %v1272
      %v1827 = vpop.f32.mrf.mxu0
      %v1828 = vadd.f32 0.0, %v1827
      %1829 = vmatmul.f32.gmra.mxu0 %v1274
      %v1830 = vpop.f32.mrf.mxu0
      %v1831 = vadd.f32 0.0, %v1830
      %1832 = vmatmul.f32.gmra.mxu0 %v1277
      %v1833 = vpop.f32.mrf.mxu0
      %v1834 = vadd.f32 0.0, %v1833
      %1835 = vmatmul.f32.gmra.mxu0 %v1279
      %v1836 = vpop.f32.mrf.mxu0
      %v1837 = vadd.f32 0.0, %v1836
      %1838 = vmatmul.f32.gmra.mxu0 %v1282
      %v1839 = vpop.f32.mrf.mxu0
      %v1840 = vadd.f32 0.0, %v1839
      %1841 = vmatmul.f32.gmra.mxu0 %v1284
      %v1842 = vpop.f32.mrf.mxu0
      %v1843 = vadd.f32 0.0, %v1842
      %1844 = vmatmul.f32.gmra.mxu0 %v1287
      %v1845 = vpop.f32.mrf.mxu0
      %v1846 = vadd.f32 0.0, %v1845
      %1847 = vmatmul.f32.gmra.mxu0 %v1289
      %v1848 = vpop.f32.mrf.mxu0
      %v1849 = vadd.f32 0.0, %v1848
      %1850 = vmatmul.f32.gmra.mxu0 %v1292
      %v1851 = vpop.f32.mrf.mxu0
      %v1852 = vadd.f32 0.0, %v1851
      %1853 = vmatmul.f32.gmra.mxu0 %v1294
      %v1854 = vpop.f32.mrf.mxu0
      %v1855 = vadd.f32 0.0, %v1854
      %1856 = vmatmul.f32.gmra.mxu0 %v1297
      %v1857 = vpop.f32.mrf.mxu0
      %v1858 = vadd.f32 0.0, %v1857
      %1859 = vmatmul.f32.gmra.mxu0 %v1299
      %v1860 = vpop.f32.mrf.mxu0
      %v1861 = vadd.f32 0.0, %v1860
      %1862 = vmatmul.f32.gmra.mxu0 %v1302
      %v1863 = vpop.f32.mrf.mxu0
      %v1864 = vadd.f32 0.0, %v1863
      %1865 = vmatmul.f32.gmra.mxu0 %v1754
      %v1866 = vpop.f32.mrf.mxu0
      %v1867 = vadd.f32 0.0, %v1866
      %1868 = vmatmul.f32.gmra.mxu0 %v1757
      %v1869 = vpop.f32.mrf.mxu0
      %v1870 = vadd.f32 0.0, %v1869
      %1871 = vdwg.mxu0
      %v1872 = vadd.f32 %v1720, %v1777
      %v1873 = vadd.f32 %v1721, %v1780
      %v1874 = vadd.f32 %v1722, %v1783
      %v1875 = vadd.f32 %v1723, %v1786
      %v1876 = vadd.f32 %v1724, %v1789
      %v1877 = vadd.f32 %v1725, %v1792
      %v1878 = vadd.f32 %v1726, %v1795
      %v1879 = vadd.f32 %v1727, %v1798
      %v1880 = vadd.f32 %v1728, %v1801
      %v1881 = vadd.f32 %v1729, %v1804
      %v1882 = vadd.f32 %v1730, %v1807
      %v1883 = vadd.f32 %v1731, %v1810
      %v1884 = vadd.f32 %v1732, %v1813
      %v1885 = vadd.f32 %v1733, %v1816
      %v1886 = vadd.f32 %v1734, %v1819
      %v1887 = vadd.f32 %v1735, %v1822
      %v1888 = vadd.f32 %v1736, %v1825
      %v1889 = vadd.f32 %v1737, %v1828
      %v1890 = vadd.f32 %v1738, %v1831
      %v1891 = vadd.f32 %v1739, %v1834
      %v1892 = vadd.f32 %v1740, %v1837
      %v1893 = vadd.f32 %v1741, %v1840
      %v1894 = vadd.f32 %v1742, %v1843
      %v1895 = vadd.f32 %v1743, %v1846
      %v1896 = vadd.f32 %v1744, %v1849
      %v1897 = vadd.f32 %v1745, %v1852
      %v1898 = vadd.f32 %v1746, %v1855
      %v1899 = vadd.f32 %v1747, %v1858
      %v1900 = vadd.f32 %v1748, %v1861
      %v1901 = vadd.f32 %v1749, %v1864
      %v1902 = vadd.f32 %v1750, %v1867
      %v1903 = vadd.f32 %v1751, %v1870
      %s1904 = scalar_lea.vmem %s3, 48
      %v1905 = vld [vmem:[%s1904] sm:$0xff]
      %v1907 = vsel %vm851, %v756, 0
      %v1909 = vsel %vm851, %v720, 0
      %1911 = vmatpush.msra.mxu0 0.0
      %1912 = vmatpush.msra.mxu0 0.0
      %1913 = vmatpush.msra.mxu0 0.0
      %1914 = vmatpush.msra.mxu0 0.0
      %1915 = vmatpush.msra.mxu0 0.0
      %1916 = vmatpush.msra.mxu0 0.0
      %1917 = vmatpush.msra.mxu0 0.0
      %1918 = vmatpush.msra.mxu0 0.0
      %1919 = vmatpush.msra.mxu0 0.0
      %1920 = vmatpush.msra.mxu0 0.0
      %1921 = vmatpush.msra.mxu0 0.0
      %1922 = vmatpush.msra.mxu0 0.0
      %1923 = vmatpush.msra.mxu0 0.0
      %1924 = vmatpush.msra.mxu0 0.0
      %1925 = vmatpush.msra.mxu0 0.0
      %1926 = vmatpush.msra.mxu0 %v1905
      %1927 = vmatmul.f32.gmra.mxu0 %v1040
      %v1928 = vpop.f32.mrf.mxu0
      %v1929 = vadd.f32 0.0, %v1928
      %1930 = vmatmul.f32.gmra.mxu0 %v1042
      %v1931 = vpop.f32.mrf.mxu0
      %v1932 = vadd.f32 0.0, %v1931
      %1933 = vmatmul.f32.gmra.mxu0 %v1045
      %v1934 = vpop.f32.mrf.mxu0
      %v1935 = vadd.f32 0.0, %v1934
      %1936 = vmatmul.f32.gmra.mxu0 %v1047
      %v1937 = vpop.f32.mrf.mxu0
      %v1938 = vadd.f32 0.0, %v1937
      %1939 = vmatmul.f32.gmra.mxu0 %v1050
      %v1940 = vpop.f32.mrf.mxu0
      %v1941 = vadd.f32 0.0, %v1940
      %1942 = vmatmul.f32.gmra.mxu0 %v1052
      %v1943 = vpop.f32.mrf.mxu0
      %v1944 = vadd.f32 0.0, %v1943
      %1945 = vmatmul.f32.gmra.mxu0 %v1055
      %v1946 = vpop.f32.mrf.mxu0
      %v1947 = vadd.f32 0.0, %v1946
      %1948 = vmatmul.f32.gmra.mxu0 %v1057
      %v1949 = vpop.f32.mrf.mxu0
      %v1950 = vadd.f32 0.0, %v1949
      %1951 = vmatmul.f32.gmra.mxu0 %v1060
      %v1952 = vpop.f32.mrf.mxu0
      %v1953 = vadd.f32 0.0, %v1952
      %1954 = vmatmul.f32.gmra.mxu0 %v1062
      %v1955 = vpop.f32.mrf.mxu0
      %v1956 = vadd.f32 0.0, %v1955
      %1957 = vmatmul.f32.gmra.mxu0 %v1065
      %v1958 = vpop.f32.mrf.mxu0
      %v1959 = vadd.f32 0.0, %v1958
      %1960 = vmatmul.f32.gmra.mxu0 %v1067
      %v1961 = vpop.f32.mrf.mxu0
      %v1962 = vadd.f32 0.0, %v1961
      %1963 = vmatmul.f32.gmra.mxu0 %v1070
      %v1964 = vpop.f32.mrf.mxu0
      %v1965 = vadd.f32 0.0, %v1964
      %1966 = vmatmul.f32.gmra.mxu0 %v1072
      %v1967 = vpop.f32.mrf.mxu0
      %v1968 = vadd.f32 0.0, %v1967
      %1969 = vmatmul.f32.gmra.mxu0 %v1075
      %v1970 = vpop.f32.mrf.mxu0
      %v1971 = vadd.f32 0.0, %v1970
      %1972 = vmatmul.f32.gmra.mxu0 %v1077
      %v1973 = vpop.f32.mrf.mxu0
      %v1974 = vadd.f32 0.0, %v1973
      %1975 = vmatmul.f32.gmra.mxu0 %v1080
      %v1976 = vpop.f32.mrf.mxu0
      %v1977 = vadd.f32 0.0, %v1976
      %1978 = vmatmul.f32.gmra.mxu0 %v1082
      %v1979 = vpop.f32.mrf.mxu0
      %v1980 = vadd.f32 0.0, %v1979
      %1981 = vmatmul.f32.gmra.mxu0 %v1085
      %v1982 = vpop.f32.mrf.mxu0
      %v1983 = vadd.f32 0.0, %v1982
      %1984 = vmatmul.f32.gmra.mxu0 %v1087
      %v1985 = vpop.f32.mrf.mxu0
      %v1986 = vadd.f32 0.0, %v1985
      %1987 = vmatmul.f32.gmra.mxu0 %v1090
      %v1988 = vpop.f32.mrf.mxu0
      %v1989 = vadd.f32 0.0, %v1988
      %1990 = vmatmul.f32.gmra.mxu0 %v1092
      %v1991 = vpop.f32.mrf.mxu0
      %v1992 = vadd.f32 0.0, %v1991
      %1993 = vmatmul.f32.gmra.mxu0 %v1095
      %v1994 = vpop.f32.mrf.mxu0
      %v1995 = vadd.f32 0.0, %v1994
      %1996 = vmatmul.f32.gmra.mxu0 %v1097
      %v1997 = vpop.f32.mrf.mxu0
      %v1998 = vadd.f32 0.0, %v1997
      %1999 = vmatmul.f32.gmra.mxu0 %v1100
      %v2000 = vpop.f32.mrf.mxu0
      %v2001 = vadd.f32 0.0, %v2000
      %2002 = vmatmul.f32.gmra.mxu0 %v1102
      %v2003 = vpop.f32.mrf.mxu0
      %v2004 = vadd.f32 0.0, %v2003
      %2005 = vmatmul.f32.gmra.mxu0 %v1105
      %v2006 = vpop.f32.mrf.mxu0
      %v2007 = vadd.f32 0.0, %v2006
      %2008 = vmatmul.f32.gmra.mxu0 %v1107
      %v2009 = vpop.f32.mrf.mxu0
      %v2010 = vadd.f32 0.0, %v2009
      %2011 = vmatmul.f32.gmra.mxu0 %v1452
      %v2012 = vpop.f32.mrf.mxu0
      %v2013 = vadd.f32 0.0, %v2012
      %2014 = vmatmul.f32.gmra.mxu0 %v1454
      %v2015 = vpop.f32.mrf.mxu0
      %v2016 = vadd.f32 0.0, %v2015
      %2017 = vmatmul.f32.gmra.mxu0 %v1907
      %v2018 = vpop.f32.mrf.mxu0
      %v2019 = vadd.f32 0.0, %v2018
      %2020 = vmatmul.f32.gmra.mxu0 %v1909
      %v2021 = vpop.f32.mrf.mxu0
      %v2022 = vadd.f32 0.0, %v2021
      %2023 = vdwg.mxu0
      %v2024 = vadd.f32 %v1872, %v1929
      %v2025 = vadd.f32 %v1873, %v1932
      %v2026 = vadd.f32 %v1874, %v1935
      %v2027 = vadd.f32 %v1875, %v1938
      %v2028 = vadd.f32 %v1876, %v1941
      %v2029 = vadd.f32 %v1877, %v1944
      %v2030 = vadd.f32 %v1878, %v1947
      %v2031 = vadd.f32 %v1879, %v1950
      %v2032 = vadd.f32 %v1880, %v1953
      %v2033 = vadd.f32 %v1881, %v1956
      %v2034 = vadd.f32 %v1882, %v1959
      %v2035 = vadd.f32 %v1883, %v1962
      %v2036 = vadd.f32 %v1884, %v1965
      %v2037 = vadd.f32 %v1885, %v1968
      %v2038 = vadd.f32 %v1886, %v1971
      %v2039 = vadd.f32 %v1887, %v1974
      %v2040 = vadd.f32 %v1888, %v1977
      %v2041 = vadd.f32 %v1889, %v1980
      %v2042 = vadd.f32 %v1890, %v1983
      %v2043 = vadd.f32 %v1891, %v1986
      %v2044 = vadd.f32 %v1892, %v1989
      %v2045 = vadd.f32 %v1893, %v1992
      %v2046 = vadd.f32 %v1894, %v1995
      %v2047 = vadd.f32 %v1895, %v1998
      %v2048 = vadd.f32 %v1896, %v2001
      %v2049 = vadd.f32 %v1897, %v2004
      %v2050 = vadd.f32 %v1898, %v2007
      %v2051 = vadd.f32 %v1899, %v2010
      %v2052 = vadd.f32 %v1900, %v2013
      %v2053 = vadd.f32 %v1901, %v2016
      %v2054 = vadd.f32 %v1902, %v2019
      %v2055 = vadd.f32 %v1903, %v2022
      %s2056 = scalar_lea.vmem %s3, 56
      %v2057 = vld [vmem:[%s2056] sm:$0xff]
      %v2058 = vsel %vm851, %v628, 0
      %v2060 = vsel %vm851, %v629, 0
      %2062 = vmatpush.msra.mxu0 0.0
      %2063 = vmatpush.msra.mxu0 0.0
      %2064 = vmatpush.msra.mxu0 0.0
      %2065 = vmatpush.msra.mxu0 0.0
      %2066 = vmatpush.msra.mxu0 0.0
      %2067 = vmatpush.msra.mxu0 0.0
      %2068 = vmatpush.msra.mxu0 0.0
      %2069 = vmatpush.msra.mxu0 0.0
      %2070 = vmatpush.msra.mxu0 0.0
      %2071 = vmatpush.msra.mxu0 0.0
      %2072 = vmatpush.msra.mxu0 0.0
      %2073 = vmatpush.msra.mxu0 0.0
      %2074 = vmatpush.msra.mxu0 0.0
      %2075 = vmatpush.msra.mxu0 0.0
      %2076 = vmatpush.msra.mxu0 0.0
      %2077 = vmatpush.msra.mxu0 %v2057
      %2078 = vmatmul.f32.gmra.mxu0 %v860
      %v2079 = vpop.f32.mrf.mxu0
      %v2080 = vadd.f32 0.0, %v2079
      %2081 = vmatmul.f32.gmra.mxu0 %v862
      %v2082 = vpop.f32.mrf.mxu0
      %v2083 = vadd.f32 0.0, %v2082
      %2084 = vmatmul.f32.gmra.mxu0 %v864
      %v2085 = vpop.f32.mrf.mxu0
      %v2086 = vadd.f32 0.0, %v2085
      %2087 = vmatmul.f32.gmra.mxu0 %v866
      %v2088 = vpop.f32.mrf.mxu0
      %v2089 = vadd.f32 0.0, %v2088
      %2090 = vmatmul.f32.gmra.mxu0 %v868
      %v2091 = vpop.f32.mrf.mxu0
      %v2092 = vadd.f32 0.0, %v2091
      %2093 = vmatmul.f32.gmra.mxu0 %v870
      %v2094 = vpop.f32.mrf.mxu0
      %v2095 = vadd.f32 0.0, %v2094
      %2096 = vmatmul.f32.gmra.mxu0 %v872
      %v2097 = vpop.f32.mrf.mxu0
      %v2098 = vadd.f32 0.0, %v2097
      %2099 = vmatmul.f32.gmra.mxu0 %v874
      %v2100 = vpop.f32.mrf.mxu0
      %v2101 = vadd.f32 0.0, %v2100
      %2102 = vmatmul.f32.gmra.mxu0 %v876
      %v2103 = vpop.f32.mrf.mxu0
      %v2104 = vadd.f32 0.0, %v2103
      %2105 = vmatmul.f32.gmra.mxu0 %v878
      %v2106 = vpop.f32.mrf.mxu0
      %v2107 = vadd.f32 0.0, %v2106
      %2108 = vmatmul.f32.gmra.mxu0 %v880
      %v2109 = vpop.f32.mrf.mxu0
      %v2110 = vadd.f32 0.0, %v2109
      %2111 = vmatmul.f32.gmra.mxu0 %v882
      %v2112 = vpop.f32.mrf.mxu0
      %v2113 = vadd.f32 0.0, %v2112
      %2114 = vmatmul.f32.gmra.mxu0 %v884
      %v2115 = vpop.f32.mrf.mxu0
      %v2116 = vadd.f32 0.0, %v2115
      %2117 = vmatmul.f32.gmra.mxu0 %v886
      %v2118 = vpop.f32.mrf.mxu0
      %v2119 = vadd.f32 0.0, %v2118
      %2120 = vmatmul.f32.gmra.mxu0 %v888
      %v2121 = vpop.f32.mrf.mxu0
      %v2122 = vadd.f32 0.0, %v2121
      %2123 = vmatmul.f32.gmra.mxu0 %v890
      %v2124 = vpop.f32.mrf.mxu0
      %v2125 = vadd.f32 0.0, %v2124
      %2126 = vmatmul.f32.gmra.mxu0 %v892
      %v2127 = vpop.f32.mrf.mxu0
      %v2128 = vadd.f32 0.0, %v2127
      %2129 = vmatmul.f32.gmra.mxu0 %v894
      %v2130 = vpop.f32.mrf.mxu0
      %v2131 = vadd.f32 0.0, %v2130
      %2132 = vmatmul.f32.gmra.mxu0 %v896
      %v2133 = vpop.f32.mrf.mxu0
      %v2134 = vadd.f32 0.0, %v2133
      %2135 = vmatmul.f32.gmra.mxu0 %v898
      %v2136 = vpop.f32.mrf.mxu0
      %v2137 = vadd.f32 0.0, %v2136
      %2138 = vmatmul.f32.gmra.mxu0 %v900
      %v2139 = vpop.f32.mrf.mxu0
      %v2140 = vadd.f32 0.0, %v2139
      %2141 = vmatmul.f32.gmra.mxu0 %v902
      %v2142 = vpop.f32.mrf.mxu0
      %v2143 = vadd.f32 0.0, %v2142
      %2144 = vmatmul.f32.gmra.mxu0 %v904
      %v2145 = vpop.f32.mrf.mxu0
      %v2146 = vadd.f32 0.0, %v2145
      %2147 = vmatmul.f32.gmra.mxu0 %v906
      %v2148 = vpop.f32.mrf.mxu0
      %v2149 = vadd.f32 0.0, %v2148
      %2150 = vmatmul.f32.gmra.mxu0 %v908
      %v2151 = vpop.f32.mrf.mxu0
      %v2152 = vadd.f32 0.0, %v2151
      %2153 = vmatmul.f32.gmra.mxu0 %v910
      %v2154 = vpop.f32.mrf.mxu0
      %v2155 = vadd.f32 0.0, %v2154
      %2156 = vmatmul.f32.gmra.mxu0 %v912
      %v2157 = vpop.f32.mrf.mxu0
      %v2158 = vadd.f32 0.0, %v2157
      %2159 = vmatmul.f32.gmra.mxu0 %v914
      %v2160 = vpop.f32.mrf.mxu0
      %v2161 = vadd.f32 0.0, %v2160
      %2162 = vmatmul.f32.gmra.mxu0 %v1603
      %v2163 = vpop.f32.mrf.mxu0
      %v2164 = vadd.f32 0.0, %v2163
      %2165 = vmatmul.f32.gmra.mxu0 %v1605
      %v2166 = vpop.f32.mrf.mxu0
      %v2167 = vadd.f32 0.0, %v2166
      %2168 = vmatmul.f32.gmra.mxu0 %v2058
      %v2169 = vpop.f32.mrf.mxu0
      %v2170 = vadd.f32 0.0, %v2169
      %2171 = vmatmul.f32.gmra.mxu0 %v2060
      %v2172 = vpop.f32.mrf.mxu0
      %v2173 = vadd.f32 0.0, %v2172
      %2174 = vdwg.mxu0
      %v2175 = vadd.f32 %v2024, %v2080
      %v2176 = vadd.f32 %v2025, %v2083
      %v2177 = vadd.f32 %v2026, %v2086
      %v2178 = vadd.f32 %v2027, %v2089
      %v2179 = vadd.f32 %v2028, %v2092
      %v2180 = vadd.f32 %v2029, %v2095
      %v2181 = vadd.f32 %v2030, %v2098
      %v2182 = vadd.f32 %v2031, %v2101
      %v2183 = vadd.f32 %v2032, %v2104
      %v2184 = vadd.f32 %v2033, %v2107
      %v2185 = vadd.f32 %v2034, %v2110
      %v2186 = vadd.f32 %v2035, %v2113
      %v2187 = vadd.f32 %v2036, %v2116
      %v2188 = vadd.f32 %v2037, %v2119
      %v2189 = vadd.f32 %v2038, %v2122
      %v2190 = vadd.f32 %v2039, %v2125
      %v2191 = vadd.f32 %v2040, %v2128
      %v2192 = vadd.f32 %v2041, %v2131
      %v2193 = vadd.f32 %v2042, %v2134
      %v2194 = vadd.f32 %v2043, %v2137
      %v2195 = vadd.f32 %v2044, %v2140
      %v2196 = vadd.f32 %v2045, %v2143
      %v2197 = vadd.f32 %v2046, %v2146
      %v2198 = vadd.f32 %v2047, %v2149
      %v2199 = vadd.f32 %v2048, %v2152
      %v2200 = vadd.f32 %v2049, %v2155
      %v2201 = vadd.f32 %v2050, %v2158
      %v2202 = vadd.f32 %v2051, %v2161
      %v2203 = vadd.f32 %v2052, %v2164
      %v2204 = vadd.f32 %v2053, %v2167
      %v2205 = vadd.f32 %v2054, %v2170
      %v2206 = vadd.f32 %v2055, %v2173
      %s2207 = scalar_lea.vmem %s3, 64
      %v2208 = vld [vmem:[%s2207] sm:$0xff]
      %v2209 = vsel %vm851, %v811, 0
      %v2212 = vsel %vm851, %v847, 0
      %2214 = vmatpush.msra.mxu0 0.0
      %2215 = vmatpush.msra.mxu0 0.0
      %2216 = vmatpush.msra.mxu0 0.0
      %2217 = vmatpush.msra.mxu0 0.0
      %2218 = vmatpush.msra.mxu0 0.0
      %2219 = vmatpush.msra.mxu0 0.0
      %2220 = vmatpush.msra.mxu0 0.0
      %2221 = vmatpush.msra.mxu0 0.0
      %2222 = vmatpush.msra.mxu0 0.0
      %2223 = vmatpush.msra.mxu0 0.0
      %2224 = vmatpush.msra.mxu0 0.0
      %2225 = vmatpush.msra.mxu0 0.0
      %2226 = vmatpush.msra.mxu0 0.0
      %2227 = vmatpush.msra.mxu0 0.0
      %2228 = vmatpush.msra.mxu0 0.0
      %2229 = vmatpush.msra.mxu0 %v2208
      %2230 = vmatmul.f32.gmra.mxu0 %v1234
      %v2231 = vpop.f32.mrf.mxu0
      %v2232 = vadd.f32 0.0, %v2231
      %2233 = vmatmul.f32.gmra.mxu0 %v1237
      %v2234 = vpop.f32.mrf.mxu0
      %v2235 = vadd.f32 0.0, %v2234
      %2236 = vmatmul.f32.gmra.mxu0 %v1239
      %v2237 = vpop.f32.mrf.mxu0
      %v2238 = vadd.f32 0.0, %v2237
      %2239 = vmatmul.f32.gmra.mxu0 %v1242
      %v2240 = vpop.f32.mrf.mxu0
      %v2241 = vadd.f32 0.0, %v2240
      %2242 = vmatmul.f32.gmra.mxu0 %v1244
      %v2243 = vpop.f32.mrf.mxu0
      %v2244 = vadd.f32 0.0, %v2243
      %2245 = vmatmul.f32.gmra.mxu0 %v1247
      %v2246 = vpop.f32.mrf.mxu0
      %v2247 = vadd.f32 0.0, %v2246
      %2248 = vmatmul.f32.gmra.mxu0 %v1249
      %v2249 = vpop.f32.mrf.mxu0
      %v2250 = vadd.f32 0.0, %v2249
      %2251 = vmatmul.f32.gmra.mxu0 %v1252
      %v2252 = vpop.f32.mrf.mxu0
      %v2253 = vadd.f32 0.0, %v2252
      %2254 = vmatmul.f32.gmra.mxu0 %v1254
      %v2255 = vpop.f32.mrf.mxu0
      %v2256 = vadd.f32 0.0, %v2255
      %2257 = vmatmul.f32.gmra.mxu0 %v1257
      %v2258 = vpop.f32.mrf.mxu0
      %v2259 = vadd.f32 0.0, %v2258
      %2260 = vmatmul.f32.gmra.mxu0 %v1259
      %v2261 = vpop.f32.mrf.mxu0
      %v2262 = vadd.f32 0.0, %v2261
      %2263 = vmatmul.f32.gmra.mxu0 %v1262
      %v2264 = vpop.f32.mrf.mxu0
      %v2265 = vadd.f32 0.0, %v2264
      %2266 = vmatmul.f32.gmra.mxu0 %v1264
      %v2267 = vpop.f32.mrf.mxu0
      %v2268 = vadd.f32 0.0, %v2267
      %2269 = vmatmul.f32.gmra.mxu0 %v1267
      %v2270 = vpop.f32.mrf.mxu0
      %v2271 = vadd.f32 0.0, %v2270
      %2272 = vmatmul.f32.gmra.mxu0 %v1269
      %v2273 = vpop.f32.mrf.mxu0
      %v2274 = vadd.f32 0.0, %v2273
      %2275 = vmatmul.f32.gmra.mxu0 %v1272
      %v2276 = vpop.f32.mrf.mxu0
      %v2277 = vadd.f32 0.0, %v2276
      %2278 = vmatmul.f32.gmra.mxu0 %v1274
      %v2279 = vpop.f32.mrf.mxu0
      %v2280 = vadd.f32 0.0, %v2279
      %2281 = vmatmul.f32.gmra.mxu0 %v1277
      %v2282 = vpop.f32.mrf.mxu0
      %v2283 = vadd.f32 0.0, %v2282
      %2284 = vmatmul.f32.gmra.mxu0 %v1279
      %v2285 = vpop.f32.mrf.mxu0
      %v2286 = vadd.f32 0.0, %v2285
      %2287 = vmatmul.f32.gmra.mxu0 %v1282
      %v2288 = vpop.f32.mrf.mxu0
      %v2289 = vadd.f32 0.0, %v2288
      %2290 = vmatmul.f32.gmra.mxu0 %v1284
      %v2291 = vpop.f32.mrf.mxu0
      %v2292 = vadd.f32 0.0, %v2291
      %2293 = vmatmul.f32.gmra.mxu0 %v1287
      %v2294 = vpop.f32.mrf.mxu0
      %v2295 = vadd.f32 0.0, %v2294
      %2296 = vmatmul.f32.gmra.mxu0 %v1289
      %v2297 = vpop.f32.mrf.mxu0
      %v2298 = vadd.f32 0.0, %v2297
      %2299 = vmatmul.f32.gmra.mxu0 %v1292
      %v2300 = vpop.f32.mrf.mxu0
      %v2301 = vadd.f32 0.0, %v2300
      %2302 = vmatmul.f32.gmra.mxu0 %v1294
      %v2303 = vpop.f32.mrf.mxu0
      %v2304 = vadd.f32 0.0, %v2303
      %2305 = vmatmul.f32.gmra.mxu0 %v1297
      %v2306 = vpop.f32.mrf.mxu0
      %v2307 = vadd.f32 0.0, %v2306
      %2308 = vmatmul.f32.gmra.mxu0 %v1299
      %v2309 = vpop.f32.mrf.mxu0
      %v2310 = vadd.f32 0.0, %v2309
      %2311 = vmatmul.f32.gmra.mxu0 %v1302
      %v2312 = vpop.f32.mrf.mxu0
      %v2313 = vadd.f32 0.0, %v2312
      %2314 = vmatmul.f32.gmra.mxu0 %v1754
      %v2315 = vpop.f32.mrf.mxu0
      %v2316 = vadd.f32 0.0, %v2315
      %2317 = vmatmul.f32.gmra.mxu0 %v1757
      %v2318 = vpop.f32.mrf.mxu0
      %v2319 = vadd.f32 0.0, %v2318
      %2320 = vmatmul.f32.gmra.mxu0 %v2209
      %v2321 = vpop.f32.mrf.mxu0
      %v2322 = vadd.f32 0.0, %v2321
      %2323 = vmatmul.f32.gmra.mxu0 %v2212
      %v2324 = vpop.f32.mrf.mxu0
      %v2325 = vadd.f32 0.0, %v2324
      %2326 = vdwg.mxu0
      %v2327 = vadd.f32 %v2175, %v2232
      %v2328 = vadd.f32 %v2176, %v2235
      %v2329 = vadd.f32 %v2177, %v2238
      %v2330 = vadd.f32 %v2178, %v2241
      %v2331 = vadd.f32 %v2179, %v2244
      %v2332 = vadd.f32 %v2180, %v2247
      %v2333 = vadd.f32 %v2181, %v2250
      %v2334 = vadd.f32 %v2182, %v2253
      %v2335 = vadd.f32 %v2183, %v2256
      %v2336 = vadd.f32 %v2184, %v2259
      %v2337 = vadd.f32 %v2185, %v2262
      %v2338 = vadd.f32 %v2186, %v2265
      %v2339 = vadd.f32 %v2187, %v2268
      %v2340 = vadd.f32 %v2188, %v2271
      %v2341 = vadd.f32 %v2189, %v2274
      %v2342 = vadd.f32 %v2190, %v2277
      %v2343 = vadd.f32 %v2191, %v2280
      %v2344 = vadd.f32 %v2192, %v2283
      %v2345 = vadd.f32 %v2193, %v2286
      %v2346 = vadd.f32 %v2194, %v2289
      %v2347 = vadd.f32 %v2195, %v2292
      %v2348 = vadd.f32 %v2196, %v2295
      %v2349 = vadd.f32 %v2197, %v2298
      %v2350 = vadd.f32 %v2198, %v2301
      %v2351 = vadd.f32 %v2199, %v2304
      %v2352 = vadd.f32 %v2200, %v2307
      %v2353 = vadd.f32 %v2201, %v2310
      %v2354 = vadd.f32 %v2202, %v2313
      %v2355 = vadd.f32 %v2203, %v2316
      %v2356 = vadd.f32 %v2204, %v2319
      %v2357 = vadd.f32 %v2205, %v2322
      %v2358 = vadd.f32 %v2206, %v2325
      %v2359 = vsel %vm851, %v2327, 0.0
      %v2360 = vsel %vm851, %v2328, 0.0
      %v2361 = vadd.f32 %v2359, %v2360
      %v2362 = vsel %vm851, %v2329, 0.0
      %v2363 = vadd.f32 %v2361, %v2362
      %v2364 = vsel %vm851, %v2330, 0.0
      %v2365 = vadd.f32 %v2363, %v2364
      %v2366 = vsel %vm851, %v2331, 0.0
      %v2367 = vadd.f32 %v2365, %v2366
      %v2368 = vsel %vm851, %v2332, 0.0
      %v2369 = vadd.f32 %v2367, %v2368
      %v2370 = vsel %vm851, %v2333, 0.0
      %v2371 = vadd.f32 %v2369, %v2370
      %v2372 = vsel %vm851, %v2334, 0.0
      %v2373 = vadd.f32 %v2371, %v2372
      %v2374 = vsel %vm851, %v2335, 0.0
      %v2375 = vadd.f32 %v2373, %v2374
      %v2376 = vsel %vm851, %v2336, 0.0
      %v2377 = vadd.f32 %v2375, %v2376
      %v2378 = vsel %vm851, %v2337, 0.0
      %v2379 = vadd.f32 %v2377, %v2378
      %v2380 = vsel %vm851, %v2338, 0.0
      %v2381 = vadd.f32 %v2379, %v2380
      %v2382 = vsel %vm851, %v2339, 0.0
      %v2383 = vadd.f32 %v2381, %v2382
      %v2384 = vsel %vm851, %v2340, 0.0
      %v2385 = vadd.f32 %v2383, %v2384
      %v2386 = vsel %vm851, %v2341, 0.0
      %v2387 = vadd.f32 %v2385, %v2386
      %v2388 = vsel %vm851, %v2342, 0.0
      %v2389 = vadd.f32 %v2387, %v2388
      %v2390 = vsel %vm851, %v2343, 0.0
      %v2391 = vadd.f32 %v2389, %v2390
      %v2392 = vsel %vm851, %v2344, 0.0
      %v2393 = vadd.f32 %v2391, %v2392
      %v2394 = vsel %vm851, %v2345, 0.0
      %v2395 = vadd.f32 %v2393, %v2394
      %v2396 = vsel %vm851, %v2346, 0.0
      %v2397 = vadd.f32 %v2395, %v2396
      %v2398 = vsel %vm851, %v2347, 0.0
      %v2399 = vadd.f32 %v2397, %v2398
      %v2400 = vsel %vm851, %v2348, 0.0
      %v2401 = vadd.f32 %v2399, %v2400
      %v2402 = vsel %vm851, %v2349, 0.0
      %v2403 = vadd.f32 %v2401, %v2402
      %v2404 = vsel %vm851, %v2350, 0.0
      %v2405 = vadd.f32 %v2403, %v2404
      %v2406 = vsel %vm851, %v2351, 0.0
      %v2407 = vadd.f32 %v2405, %v2406
      %v2408 = vsel %vm851, %v2352, 0.0
      %v2409 = vadd.f32 %v2407, %v2408
      %v2410 = vsel %vm851, %v2353, 0.0
      %v2411 = vadd.f32 %v2409, %v2410
      %v2412 = vsel %vm851, %v2354, 0.0
      %v2413 = vadd.f32 %v2411, %v2412
      %v2414 = vsel %vm851, %v2355, 0.0
      %v2415 = vadd.f32 %v2413, %v2414
      %v2416 = vsel %vm851, %v2356, 0.0
      %v2417 = vadd.f32 %v2415, %v2416
      %v2418 = vsel %vm851, %v2357, 0.0
      %v2419 = vadd.f32 %v2417, %v2418
      %v2420 = vsel %vm851, %v2358, 0.0
      %v2421 = vadd.f32 %v2419, %v2420
      %v2422 = vrot.slane %v2421, 4
      %v2423 = vadd.f32 %v2421, %v2422
      %v2424 = vrot.slane %v2423, 2
      %v2425 = vadd.f32 %v2423, %v2424
      %v2426 = vrot.slane %v2425, 1
      %v2427 = vadd.f32 %v2425, %v2426
      %vm2428 = vcmask 57344
      %2429 = vst.msk [vmem:[%s465] sm:$0x1] %vm2428, %v2427
      %v2430 = vmul.f32 %v2327, %v2327
      %v2431 = vmul.f32 %v2328, %v2328
      %v2432 = vmul.f32 %v2329, %v2329
      %v2433 = vmul.f32 %v2330, %v2330
      %v2434 = vmul.f32 %v2331, %v2331
      %v2435 = vmul.f32 %v2332, %v2332
      %v2436 = vmul.f32 %v2333, %v2333
      %v2437 = vmul.f32 %v2334, %v2334
      %v2438 = vmul.f32 %v2335, %v2335
      %v2439 = vmul.f32 %v2336, %v2336
      %v2440 = vmul.f32 %v2337, %v2337
      %v2441 = vmul.f32 %v2338, %v2338
      %v2442 = vmul.f32 %v2339, %v2339
      %v2443 = vmul.f32 %v2340, %v2340
      %v2444 = vmul.f32 %v2341, %v2341
      %v2445 = vmul.f32 %v2342, %v2342
      %v2446 = vmul.f32 %v2343, %v2343
      %v2447 = vmul.f32 %v2344, %v2344
      %v2448 = vmul.f32 %v2345, %v2345
      %v2449 = vmul.f32 %v2346, %v2346
      %v2450 = vmul.f32 %v2347, %v2347
      %v2451 = vmul.f32 %v2348, %v2348
      %v2452 = vmul.f32 %v2349, %v2349
      %v2453 = vmul.f32 %v2350, %v2350
      %v2454 = vmul.f32 %v2351, %v2351
      %v2455 = vmul.f32 %v2352, %v2352
      %v2456 = vmul.f32 %v2353, %v2353
      %v2457 = vmul.f32 %v2354, %v2354
      %v2458 = vmul.f32 %v2355, %v2355
      %v2459 = vmul.f32 %v2356, %v2356
      %v2460 = vmul.f32 %v2357, %v2357
      %v2461 = vmul.f32 %v2358, %v2358
      %v2462 = vsel %vm851, %v2430, 0.0
      %v2463 = vsel %vm851, %v2431, 0.0
      %v2464 = vadd.f32 %v2462, %v2463
      %v2465 = vsel %vm851, %v2432, 0.0
      %v2466 = vadd.f32 %v2464, %v2465
      %v2467 = vsel %vm851, %v2433, 0.0
      %v2468 = vadd.f32 %v2466, %v2467
      %v2469 = vsel %vm851, %v2434, 0.0
      %v2470 = vadd.f32 %v2468, %v2469
      %v2471 = vsel %vm851, %v2435, 0.0
      %v2472 = vadd.f32 %v2470, %v2471
      %v2473 = vsel %vm851, %v2436, 0.0
      %v2474 = vadd.f32 %v2472, %v2473
      %v2475 = vsel %vm851, %v2437, 0.0
      %v2476 = vadd.f32 %v2474, %v2475
      %v2477 = vsel %vm851, %v2438, 0.0
      %v2478 = vadd.f32 %v2476, %v2477
      %v2479 = vsel %vm851, %v2439, 0.0
      %v2480 = vadd.f32 %v2478, %v2479
      %v2481 = vsel %vm851, %v2440, 0.0
      %v2482 = vadd.f32 %v2480, %v2481
      %v2483 = vsel %vm851, %v2441, 0.0
      %v2484 = vadd.f32 %v2482, %v2483
      %v2485 = vsel %vm851, %v2442, 0.0
      %v2486 = vadd.f32 %v2484, %v2485
      %v2487 = vsel %vm851, %v2443, 0.0
      %v2488 = vadd.f32 %v2486, %v2487
      %v2489 = vsel %vm851, %v2444, 0.0
      %v2490 = vadd.f32 %v2488, %v2489
      %v2491 = vsel %vm851, %v2445, 0.0
      %v2492 = vadd.f32 %v2490, %v2491
      %v2493 = vsel %vm851, %v2446, 0.0
      %v2494 = vadd.f32 %v2492, %v2493
      %v2495 = vsel %vm851, %v2447, 0.0
      %v2496 = vadd.f32 %v2494, %v2495
      %v2497 = vsel %vm851, %v2448, 0.0
      %v2498 = vadd.f32 %v2496, %v2497
      %v2499 = vsel %vm851, %v2449, 0.0
      %v2500 = vadd.f32 %v2498, %v2499
      %v2501 = vsel %vm851, %v2450, 0.0
      %v2502 = vadd.f32 %v2500, %v2501
      %v2503 = vsel %vm851, %v2451, 0.0
      %v2504 = vadd.f32 %v2502, %v2503
      %v2505 = vsel %vm851, %v2452, 0.0
      %v2506 = vadd.f32 %v2504, %v2505
      %v2507 = vsel %vm851, %v2453, 0.0
      %v2508 = vadd.f32 %v2506, %v2507
      %v2509 = vsel %vm851, %v2454, 0.0
      %v2510 = vadd.f32 %v2508, %v2509
      %v2511 = vsel %vm851, %v2455, 0.0
      %v2512 = vadd.f32 %v2510, %v2511
      %v2513 = vsel %vm851, %v2456, 0.0
      %v2514 = vadd.f32 %v2512, %v2513
      %v2515 = vsel %vm851, %v2457, 0.0
      %v2516 = vadd.f32 %v2514, %v2515
      %v2517 = vsel %vm851, %v2458, 0.0
      %v2518 = vadd.f32 %v2516, %v2517
      %v2519 = vsel %vm851, %v2459, 0.0
      %v2520 = vadd.f32 %v2518, %v2519
      %v2521 = vsel %vm851, %v2460, 0.0
      %v2522 = vadd.f32 %v2520, %v2521
      %v2523 = vsel %vm851, %v2461, 0.0
      %v2524 = vadd.f32 %v2522, %v2523
      %v2525 = vrot.slane %v2524, 4
      %v2526 = vadd.f32 %v2524, %v2525
      %v2527 = vrot.slane %v2526, 2
      %v2528 = vadd.f32 %v2526, %v2527
      %v2529 = vrot.slane %v2528, 1
      %v2530 = vadd.f32 %v2528, %v2529
      %2531 = vst.msk [vmem:[%s465 + $0x1] sm:$0x1] %vm2428, %v2530
      %2532 = vst.msk [vmem:[%s457] sm:$0xff] %vm851, %v2327
      %2533 = vst.msk [vmem:[%s457 + $0x8] sm:$0xff] %vm851, %v2328
      %2534 = vst.msk [vmem:[%s457 + $0x10] sm:$0xff] %vm851, %v2329
      %2535 = vst.msk [vmem:[%s457 + $0x18] sm:$0xff] %vm851, %v2330
      %2536 = vst.msk [vmem:[%s457 + $0x20] sm:$0xff] %vm851, %v2331
      %2537 = vst.msk [vmem:[%s457 + $0x28] sm:$0xff] %vm851, %v2332
      %2538 = vst.msk [vmem:[%s457 + $0x30] sm:$0xff] %vm851, %v2333
      %2539 = vst.msk [vmem:[%s457 + $0x38] sm:$0xff] %vm851, %v2334
      %2540 = vst.msk [vmem:[%s457 + $0x40] sm:$0xff] %vm851, %v2335
      %2541 = vst.msk [vmem:[%s457 + $0x48] sm:$0xff] %vm851, %v2336
      %2542 = vst.msk [vmem:[%s457 + $0x50] sm:$0xff] %vm851, %v2337
      %2543 = vst.msk [vmem:[%s457 + $0x58] sm:$0xff] %vm851, %v2338
      %2544 = vst.msk [vmem:[%s457 + $0x60] sm:$0xff] %vm851, %v2339
      %2545 = vst.msk [vmem:[%s457 + $0x68] sm:$0xff] %vm851, %v2340
      %2546 = vst.msk [vmem:[%s457 + $0x70] sm:$0xff] %vm851, %v2341
      %2547 = vst.msk [vmem:[%s457 + $0x78] sm:$0xff] %vm851, %v2342
      %2548 = vst.msk [vmem:[%s457 + $0x80] sm:$0xff] %vm851, %v2343
      %2549 = vst.msk [vmem:[%s457 + $0x88] sm:$0xff] %vm851, %v2344
      %2550 = vst.msk [vmem:[%s457 + $0x90] sm:$0xff] %vm851, %v2345
      %2551 = vst.msk [vmem:[%s457 + $0x98] sm:$0xff] %vm851, %v2346
      %2552 = vst.msk [vmem:[%s457 + $0xa0] sm:$0xff] %vm851, %v2347
      %2553 = vst.msk [vmem:[%s457 + $0xa8] sm:$0xff] %vm851, %v2348
      %2554 = vst.msk [vmem:[%s457 + $0xb0] sm:$0xff] %vm851, %v2349
      %2555 = vst.msk [vmem:[%s457 + $0xb8] sm:$0xff] %vm851, %v2350
      %2556 = vst.msk [vmem:[%s457 + $0xc0] sm:$0xff] %vm851, %v2351
      %2557 = vst.msk [vmem:[%s457 + $0xc8] sm:$0xff] %vm851, %v2352
      %2558 = vst.msk [vmem:[%s457 + $0xd0] sm:$0xff] %vm851, %v2353
      %2559 = vst.msk [vmem:[%s457 + $0xd8] sm:$0xff] %vm851, %v2354
      %2560 = vst.msk [vmem:[%s457 + $0xe0] sm:$0xff] %vm851, %v2355
      %2561 = vst.msk [vmem:[%s457 + $0xe8] sm:$0xff] %vm851, %v2356
      %2562 = vst.msk [vmem:[%s457 + $0xf0] sm:$0xff] %vm851, %v2357
      %2563 = vst.msk [vmem:[%s457 + $0xf8] sm:$0xff] %vm851, %v2358
      %s2564 = smul.u32 16, %s24
      %p2565 = scmp.lt.s32.totalorder %s23, 1
      %s2566 = scalar_select %p2565, %s23, 1
      %p2567 = scmp.lt.s32.totalorder %s2564, 15
      %s2568 = scalar_select %p2567, %s2564, 15
      %s2569 = smul.addr %s2568, 2
      %s2570 = smul.addr %s2566, 32
      %s2571 = sadd.s32 %s2569, %s2570
      %s2572 = smul.addr %s2571, 8
      %s2573 = scalar_lea.vmem %s6, %s2572
      %p2574 = scmp.lt.s32.totalorder %s23, 1
      %s2575 = scalar_select %p2574, %s23, 1
      %p2576 = scmp.lt.s32.totalorder %s24, 0
      %s2577 = scalar_select %p2576, %s24, 0
      %s2578 = sadd.s32 %s2577, %s2575
      %s2579 = smul.addr %s2578, 2
      %s2580 = scalar_lea.vmem %s7, %s2579
      // Predicated region
      $region45: #{unet_conv_block.4} parent=43 // pred_check
        %p2581 = pneg %p214
      $region46: #{unet_conv_block.4} parent=43 // pred_check_branch
        %2583 = sbr.rel (%p2581) target = $region48
      $region47: #{unet_conv_block.4} parent=43 // pred_region
        %s2584 = smul.u32 16, %s24
      $region48: #{unet_conv_block.4} parent=43 // pred_fallthru
        _
      // Predicated region
      $region49: #{unet_conv_block.4} parent=43 // pred_check
        %p2585 = pneg %p242
      $region50: #{unet_conv_block.4} parent=43 // pred_check_branch
        %2587 = sbr.rel (%p2585) target = $region52
      $region51: #{unet_conv_block.4} parent=43 // pred_region
        _
      $region52: #{unet_conv_block.4} parent=43 // pred_fallthru
        _
    $region44: #{unet_conv_block.4} parent=5 // pred_fallthru
      _
    %p2588 = scmp.le.s32.totalorder 2, %s14
    // Predicated region
    $region53: #{unet_conv_block.4} parent=5 // pred_check
      %p2589 = pneg %p2588
    $region54: #{unet_conv_block.4} parent=5 // pred_check_branch
      %2591 = sbr.rel (%p2589) target = $region56
    $region55: #{unet_conv_block.4} parent=5 // pred_region
      %s2592 = ssub.s32 %s14, 2
      // Predicated region
      $region57: #{unet_conv_block.4} parent=55 // pred_check
        %p2593 = pneg %p220
      $region58: #{unet_conv_block.4} parent=55 // pred_check_branch
        %2595 = sbr.rel (%p2593) target = $region60
      $region59: #{unet_conv_block.4} parent=55 // pred_region
        %s2596 = smul.u32 16, %s26
        %p2597 = scmp.lt.s32.totalorder %s25, 1
        %s2598 = scalar_select %p2597, %s25, 1
        %p2599 = scmp.lt.s32.totalorder %s2596, 15
        %s2600 = scalar_select %p2599, %s2596, 15
        %s2601 = smul.addr %s2600, 2
        %s2602 = smul.addr %s2598, 32
        %s2603 = sadd.s32 %s2601, %s2602
        %s2604 = smul.addr %s2603, 8
        %s2605 = scalar_lea.vmem %s6, %s2604
      $region60: #{unet_conv_block.4} parent=55 // pred_fallthru
        _
      // Predicated region
      $region61: #{unet_conv_block.4} parent=55 // pred_check
        %p2606 = pneg %p248
      $region62: #{unet_conv_block.4} parent=55 // pred_check_branch
        %2608 = sbr.rel (%p2606) target = $region64
      $region63: #{unet_conv_block.4} parent=55 // pred_region
        %p2609 = scmp.lt.s32.totalorder %s25, 1
        %s2610 = scalar_select %p2609, %s25, 1
        %p2611 = scmp.lt.s32.totalorder %s26, 0
        %s2612 = scalar_select %p2611, %s26, 0
        %s2613 = sadd.s32 %s2612, %s2610
        %s2614 = smul.addr %s2613, 2
        %s2615 = scalar_lea.vmem %s7, %s2614
      $region64: #{unet_conv_block.4} parent=55 // pred_fallthru
        _
    $region56: #{unet_conv_block.4} parent=5 // pred_fallthru
      _
  $region6: #{unet_conv_block.4} parent=0 // loop_footer
    %s18 = sadd.s32 1, %s14
  $region7: #{unet_conv_block.4} parent=0 // loop_footer_branch
    %13 = sbr.rel target = $region3
  $region8: #{unet_conv_block.4} parent=0 // loop_exit
    _

// kernel: unet_conv_block.3
$region0: #{unet_conv_block.3}
  #allocation0 [shape = 'u32[]', space=smem, size = 0x4, offset = 0x4, fixed_abs, tag = 'smem constant byte address 0x4 - core index']
  #allocation1 [shape = 'u32[72,128]{1,0:T(1,128)}', space=vmem, size = 0x9000, scoped, tag = 'internal scratch']
  %s0 = inlined_call_operand.vmem [shape: f32[2,16,16,4], index: 0, kind: input, shape index: {}, may-alias: {0,1,2}]
  %s1 = inlined_call_operand.vmem [shape: f32[2,16,16,4], index: 1, kind: input, shape index: {}, may-alias: {0,1,2}]
  %s2 = inlined_call_operand.vmem [shape: f32[2,16,16,4], index: 2, kind: input, shape index: {}, may-alias: {0,1,2}]
  %s3 = inlined_call_operand.vmem [shape: f32[9,4,8], index: 3, kind: input, shape index: {}]
  %s4 = inlined_call_operand.vmem [shape: f32[2,16,16,8], index: 4, kind: output, shape index: {0}]
  %s5 = inlined_call_operand.vmem [shape: f32[2,1,2,8], index: 5, kind: output, shape index: {1}]
  %6 = xla_tuple %s4, %s5
  %s7 = sld [smem:[#allocation0]]
  $region57: #{unet_conv_block.3} parent=0
    _
  %s9 = ssub.s32 1, %s7
  %s10 = scalar_select 0, %s9, %s7
  loop: start=0, step=1, limit=4
  $region2: #{unet_conv_block.3} parent=0 // loop_pre_header
    _
  $region3: #{unet_conv_block.3} parent=0 // loop_header
    %s12 = sphi 0, %s16
    %p13 = scmp.ge.s32.totalorder %s12, 4
    %s19 = sphi 0, %s31
    %s20 = sphi 0, %s27
    %s21 = sphi 0, %s19
    %s22 = sphi 0, %s20
    %s23 = sphi 0, %s21
    %s24 = sphi 0, %s22
    %s44 = sphi 0, %s46
    %s47 = sphi 0, %s44
    %s48 = sphi 0, %s47
    %s64 = sphi 0, %s48
    %s72 = sphi 0, %s74
    %s75 = sphi 0, %s72
    %s76 = sphi 0, %s75
    %s92 = sphi 0, %s76
    %s108 = sphi 0, %s110
    %s111 = sphi 0, %s108
    %s112 = sphi 0, %s111
    %s128 = sphi 0, %s112
    %s132 = sphi 0, %s132
    %s134 = sphi 0, %s132
    %s135 = sphi 0, %s134
    %s149 = sphi 0, %s135
    %s157 = sphi 0, %s159
    %s160 = sphi 0, %s157
    %s161 = sphi 0, %s160
    %s177 = sphi 0, %s161
    %s185 = sphi 0, %s187
    %s188 = sphi 0, %s185
    %s189 = sphi 0, %s188
    %s205 = sphi 0, %s189
  $region4: #{unet_conv_block.3} parent=0 // loop_header_branch
    %15 = sbr.rel (%p13) target = $region8
  $region5: #{unet_conv_block.3} parent=0 // loop_body
    %s17 = ssub.s32 %s12, 1
    %s18 = ssub.s32 %s12, 2
    %s25 = sadd.s32 1, %s20
    %p26 = scmp.ge.s32.totalorder %s25, 1
    %s27 = scalar_select %p26, 0, %s25
    %s28 = sadd.s32 1, %s19
    %s29 = scalar_select %p26, %s28, %s19
    %p30 = scmp.ge.s32.totalorder %s29, 2
    %s31 = scalar_select %p30, 0, %s29
    %s32 = smul.u32 %s20, 16
    %s33 = ssub.s32 %s32, 1
    %p34 = scmp.gt.s32.totalorder %s33, 0
    %s35 = scalar_select %p34, %s33, 0
    %s36 = smul.u32 %s27, 16
    %s37 = ssub.s32 %s36, 1
    %p38 = scmp.gt.s32.totalorder %s37, 0
    %s39 = scalar_select %p38, %s37, 0
    %s40 = ssub.s32 %s19, %s31
    %s41 = ssub.s32 %s35, %s39
    %s42 = sor.u32 %s40, %s41
    %p43 = scmp.eq.s32.totalorder %s42, 0
    %s45 = sadd.s32 %s44, 1
    %s46 = scalar_select %p43, %s44, %s45
    %p49 = pneg %p43
    %p50 = scmp.eq.s32.totalorder %s12, 1
    %p51 = por %p49, %p50
    %p52 = scmp.ne.s32.totalorder %s44, %s47
    %p53 = scmp.eq.s32.totalorder %s12, 0
    %p54 = por %p52, %p53
    %p55 = scmp.ne.s32.totalorder %s44, %s47
    %p56 = scmp.eq.s32.totalorder %s17, 1
    %p57 = por %p55, %p56
    %p58 = scmp.ne.s32.totalorder %s47, %s48
    %p59 = scmp.eq.s32.totalorder %s17, 0
    %p60 = por %p58, %p59
    %p61 = scmp.ne.s32.totalorder %s47, %s48
    %p62 = scmp.eq.s32.totalorder %s18, 1
    %p63 = por %p61, %p62
    %p65 = scmp.ne.s32.totalorder %s48, %s64
    %p66 = scmp.eq.s32.totalorder %s18, 0
    %p67 = por %p65, %p66
    %s68 = ssub.s32 %s19, %s31
    %s69 = ssub.s32 %s20, %s27
    %s70 = sor.u32 %s68, %s69
    %p71 = scmp.eq.s32.totalorder %s70, 0
    %s73 = sadd.s32 %s72, 1
    %s74 = scalar_select %p71, %s72, %s73
    %p77 = pneg %p71
    %p78 = scmp.eq.s32.totalorder %s12, 1
    %p79 = por %p77, %p78
    %p80 = scmp.ne.s32.totalorder %s72, %s75
    %p81 = scmp.eq.s32.totalorder %s12, 0
    %p82 = por %p80, %p81
    %p83 = scmp.ne.s32.totalorder %s72, %s75
    %p84 = scmp.eq.s32.totalorder %s17, 1
    %p85 = por %p83, %p84
    %p86 = scmp.ne.s32.totalorder %s75, %s76
    %p87 = scmp.eq.s32.totalorder %s17, 0
    %p88 = por %p86, %p87
    %p89 = scmp.ne.s32.totalorder %s75, %s76
    %p90 = scmp.eq.s32.totalorder %s18, 1
    %p91 = por %p89, %p90
    %p93 = scmp.ne.s32.totalorder %s76, %s92
    %p94 = scmp.eq.s32.totalorder %s18, 0
    %p95 = por %p93, %p94
    %s96 = smul.u32 %s20, 16
    %s97 = sadd.s32 %s96, 16
    %p98 = scmp.lt.s32.totalorder %s97, 15
    %s99 = scalar_select %p98, %s97, 15
    %s100 = smul.u32 %s27, 16
    %s101 = sadd.s32 %s100, 16
    %p102 = scmp.lt.s32.totalorder %s101, 15
    %s103 = scalar_select %p102, %s101, 15
    %s104 = ssub.s32 %s19, %s31
    %s105 = ssub.s32 %s99, %s103
    %s106 = sor.u32 %s104, %s105
    %p107 = scmp.eq.s32.totalorder %s106, 0
    %s109 = sadd.s32 %s108, 1
    %s110 = scalar_select %p107, %s108, %s109
    %p113 = pneg %p107
    %p114 = scmp.eq.s32.totalorder %s12, 1
    %p115 = por %p113, %p114
    %p116 = scmp.ne.s32.totalorder %s108, %s111
    %p117 = scmp.eq.s32.totalorder %s12, 0
    %p118 = por %p116, %p117
    %p119 = scmp.ne.s32.totalorder %s108, %s111
    %p120 = scmp.eq.s32.totalorder %s17, 1
    %p121 = por %p119, %p120
    %p122 = scmp.ne.s32.totalorder %s111, %s112
    %p123 = scmp.eq.s32.totalorder %s17, 0
    %p124 = por %p122, %p123
    %p125 = scmp.ne.s32.totalorder %s111, %s112
    %p126 = scmp.eq.s32.totalorder %s18, 1
    %p127 = por %p125, %p126
    %p129 = scmp.ne.s32.totalorder %s112, %s128
    %p130 = scmp.eq.s32.totalorder %s18, 0
    %p131 = por %p129, %p130
    %s133 = sadd.s32 %s132, 1
    %p136 = scmp.eq.s32.totalorder %s12, 1
    %p137 = scmp.ne.s32.totalorder %s132, %s134
    %p138 = scmp.eq.s32.totalorder %s12, 0
    %p139 = por %p137, %p138
    %p140 = scmp.ne.s32.totalorder %s132, %s134
    %p141 = scmp.eq.s32.totalorder %s17, 1
    %p142 = por %p140, %p141
    %p143 = scmp.ne.s32.totalorder %s134, %s135
    %p144 = scmp.eq.s32.totalorder %s17, 0
    %p145 = por %p143, %p144
    %p146 = scmp.ne.s32.totalorder %s134, %s135
    %p147 = scmp.eq.s32.totalorder %s18, 1
    %p148 = por %p146, %p147
    %p150 = scmp.ne.s32.totalorder %s135, %s149
    %p151 = scmp.eq.s32.totalorder %s18, 0
    %p152 = por %p150, %p151
    %s153 = ssub.s32 %s19, %s31
    %s154 = ssub.s32 %s20, %s27
    %s155 = sor.u32 %s153, %s154
    %p156 = scmp.eq.s32.totalorder %s155, 0
    %s158 = sadd.s32 %s157, 1
    %s159 = scalar_select %p156, %s157, %s158
    %p162 = pneg %p156
    %p163 = scmp.eq.s32.totalorder %s12, 1
    %p164 = por %p162, %p163
    %p165 = scmp.ne.s32.totalorder %s157, %s160
    %p166 = scmp.eq.s32.totalorder %s12, 0
    %p167 = por %p165, %p166
    %p168 = scmp.ne.s32.totalorder %s157, %s160
    %p169 = scmp.eq.s32.totalorder %s17, 1
    %p170 = por %p168, %p169
    %p171 = scmp.ne.s32.totalorder %s160, %s161
    %p172 = scmp.eq.s32.totalorder %s17, 0
    %p173 = por %p171, %p172
    %p174 = scmp.ne.s32.totalorder %s160, %s161
    %p175 = scmp.eq.s32.totalorder %s18, 1
    %p176 = por %p174, %p175
    %p178 = scmp.ne.s32.totalorder %s161, %s177
    %p179 = scmp.eq.s32.totalorder %s18, 0
    %p180 = por %p178, %p179
    %s181 = ssub.s32 %s19, %s31
    %s182 = ssub.s32 %s20, %s27
    %s183 = sor.u32 %s181, %s182
    %p184 = scmp.eq.s32.totalorder %s183, 0
    %s186 = sadd.s32 %s185, 1
    %s187 = scalar_select %p184, %s185, %s186
    %p190 = pneg %p184
    %p191 = scmp.eq.s32.totalorder %s12, 1
    %p192 = por %p190, %p191
    %p193 = scmp.ne.s32.totalorder %s185, %s188
    %p194 = scmp.eq.s32.totalorder %s12, 0
    %p195 = por %p193, %p194
    %p196 = scmp.ne.s32.totalorder %s185, %s188
    %p197 = scmp.eq.s32.totalorder %s17, 1
    %p198 = por %p196, %p197
    %p199 = scmp.ne.s32.totalorder %s188, %s189
    %p200 = scmp.eq.s32.totalorder %s17, 0
    %p201 = por %p199, %p200
    %p202 = scmp.ne.s32.totalorder %s188, %s189
    %p203 = scmp.eq.s32.totalorder %s18, 1
    %p204 = por %p202, %p203
    %p206 = scmp.ne.s32.totalorder %s189, %s205
    %p207 = scmp.eq.s32.totalorder %s18, 0
    %p208 = por %p206, %p207
    %p209 = scmp.le.s32.totalorder 1, %s12
    %p210 = scmp.lt.s32.totalorder %s12, 3
    %p211 = pnand %p209, %p210
    %p212 = pneg %p211
    // Predicated region
    $region9: #{unet_conv_block.3} parent=5 // pred_check
      _
    $region10: #{unet_conv_block.3} parent=5 // pred_check_branch
      %214 = sbr.rel (%p211) target = $region12
    $region11: #{unet_conv_block.3} parent=5 // pred_region
      %s215 = ssub.s32 %s12, 1
      // Predicated region
      $region13: #{unet_conv_block.3} parent=11 // pred_check
        %p216 = pneg %p145
      $region14: #{unet_conv_block.3} parent=11 // pred_check_branch
        %218 = sbr.rel (%p216) target = $region16
      $region15: #{unet_conv_block.3} parent=11 // pred_region
        _
      $region16: #{unet_conv_block.3} parent=11 // pred_fallthru
        _
    $region12: #{unet_conv_block.3} parent=5 // pred_fallthru
      _
    %p219 = scmp.lt.s32.totalorder %s12, 2
    // Predicated region
    $region17: #{unet_conv_block.3} parent=5 // pred_check
      %p220 = pneg %p219
    $region18: #{unet_conv_block.3} parent=5 // pred_check_branch
      %222 = sbr.rel (%p220) target = $region20
    $region19: #{unet_conv_block.3} parent=5 // pred_region
      // Predicated region
      $region21: #{unet_conv_block.3} parent=19 // pred_check
        %p223 = pneg %p54
      $region22: #{unet_conv_block.3} parent=19 // pred_check_branch
        %225 = sbr.rel (%p223) target = $region24
      $region23: #{unet_conv_block.3} parent=19 // pred_region
        %s226 = smul.u32 %s20, 16
        %s227 = ssub.s32 %s226, 1
        %p228 = scmp.gt.s32.totalorder %s227, 0
        %s229 = scalar_select %p228, %s227, 0
        %p230 = scmp.lt.s32.totalorder %s19, 1
        %s231 = scalar_select %p230, %s19, 1
        %p232 = scmp.lt.s32.totalorder %s229, 15
        %s233 = scalar_select %p232, %s229, 15
        %s234 = smul.addr %s233, 2
        %s235 = smul.addr %s231, 32
        %s236 = sadd.s32 %s234, %s235
        %s237 = smul.addr %s236, 8
        %s238 = scalar_lea.vmem %s0, %s237
        %s239 = smul.u32 %s20, 16
        %s240 = ssub.s32 %s239, 1
        %p241 = scmp.gt.s32.totalorder %s240, 0
        %s242 = scalar_select %p241, %s240, 0
      $region24: #{unet_conv_block.3} parent=19 // pred_fallthru
        _
      // Predicated region
      $region25: #{unet_conv_block.3} parent=19 // pred_check
        %p243 = pneg %p82
      $region26: #{unet_conv_block.3} parent=19 // pred_check_branch
        %245 = sbr.rel (%p243) target = $region28
      $region27: #{unet_conv_block.3} parent=19 // pred_region
        %s246 = smul.u32 16, %s20
        %p247 = scmp.lt.s32.totalorder %s19, 1
        %s248 = scalar_select %p247, %s19, 1
        %p249 = scmp.lt.s32.totalorder %s246, 15
        %s250 = scalar_select %p249, %s246, 15
        %s251 = smul.addr %s250, 2
        %s252 = smul.addr %s248, 32
        %s253 = sadd.s32 %s251, %s252
        %s254 = smul.addr %s253, 8
        %s255 = scalar_lea.vmem %s1, %s254
        %s256 = smul.u32 16, %s20
      $region28: #{unet_conv_block.3} parent=19 // pred_fallthru
        _
      // Predicated region
      $region29: #{unet_conv_block.3} parent=19 // pred_check
        %p257 = pneg %p118
      $region30: #{unet_conv_block.3} parent=19 // pred_check_branch
        %259 = sbr.rel (%p257) target = $region32
      $region31: #{unet_conv_block.3} parent=19 // pred_region
        %s260 = smul.u32 %s20, 16
        %s261 = sadd.s32 %s260, 16
        %p262 = scmp.lt.s32.totalorder %s261, 15
        %s263 = scalar_select %p262, %s261, 15
        %p264 = scmp.lt.s32.totalorder %s19, 1
        %s265 = scalar_select %p264, %s19, 1
        %p266 = scmp.lt.s32.totalorder %s263, 15
        %s267 = scalar_select %p266, %s263, 15
        %s268 = smul.addr %s267, 2
        %s269 = smul.addr %s265, 32
        %s270 = sadd.s32 %s268, %s269
        %s271 = smul.addr %s270, 8
        %s272 = scalar_lea.vmem %s2, %s271
        %s273 = smul.u32 %s20, 16
        %s274 = sadd.s32 %s273, 16
        %p275 = scmp.lt.s32.totalorder %s274, 15
        %s276 = scalar_select %p275, %s274, 15
      $region32: #{unet_conv_block.3} parent=19 // pred_fallthru
        _
    $region20: #{unet_conv_block.3} parent=5 // pred_fallthru
      _
    %p277 = scmp.le.s32.totalorder 1, %s12
    %p278 = scmp.lt.s32.totalorder %s12, 3
    %p279 = pnand %p277, %p278
    %p280 = pneg %p279
    // Predicated region
    $region33: #{unet_conv_block.3} parent=5 // pred_check
      _
    $region34: #{unet_conv_block.3} parent=5 // pred_check_branch
      %282 = sbr.rel (%p279) target = $region36
    $region35: #{unet_conv_block.3} parent=5 // pred_region
      %s283 = ssub.s32 %s12, 1
      %s284 = smul.u32 %s22, 16
      %s285 = ssub.s32 %s284, 1
      %p286 = scmp.gt.s32.totalorder %s285, 0
      %s287 = scalar_select %p286, %s285, 0
      %p288 = scmp.lt.s32.totalorder %s21, 1
      %s289 = scalar_select %p288, %s21, 1
      %p290 = scmp.lt.s32.totalorder %s287, 15
      %s291 = scalar_select %p290, %s287, 15
      %s292 = smul.addr %s291, 2
      %s293 = smul.addr %s289, 32
      %s294 = sadd.s32 %s292, %s293
      %s295 = smul.addr %s294, 8
      %s296 = scalar_lea.vmem %s0, %s295
      %p297 = pneg %p60
      %p298 = pneg %p57
      %s299 = smul.u32 16, %s22
      %p300 = scmp.lt.s32.totalorder %s21, 1
      %s301 = scalar_select %p300, %s21, 1
      %p302 = scmp.lt.s32.totalorder %s299, 15
      %s303 = scalar_select %p302, %s299, 15
      %s304 = smul.addr %s303, 2
      %s305 = smul.addr %s301, 32
      %s306 = sadd.s32 %s304, %s305
      %s307 = smul.addr %s306, 8
      %s308 = scalar_lea.vmem %s1, %s307
      %p309 = pneg %p88
      %p310 = pneg %p85
      %s311 = smul.u32 %s22, 16
      %s312 = sadd.s32 %s311, 16
      %p313 = scmp.lt.s32.totalorder %s312, 15
      %s314 = scalar_select %p313, %s312, 15
      %p315 = scmp.lt.s32.totalorder %s21, 1
      %s316 = scalar_select %p315, %s21, 1
      %p317 = scmp.lt.s32.totalorder %s314, 15
      %s318 = scalar_select %p317, %s314, 15
      %s319 = smul.addr %s318, 2
      %s320 = smul.addr %s316, 32
      %s321 = sadd.s32 %s319, %s320
      %s322 = smul.addr %s321, 8
      %s323 = scalar_lea.vmem %s2, %s322
      %p324 = pneg %p124
      %p325 = pneg %p121
      %p326 = pneg %p145
      %p327 = pneg %p142
      %p328 = pneg %p173
      %p329 = pneg %p170
      %s330 = smul.u32 16, %s22
      %p331 = scmp.lt.s32.totalorder %s21, 1
      %s332 = scalar_select %p331, %s21, 1
      %p333 = scmp.lt.s32.totalorder %s330, 15
      %s334 = scalar_select %p333, %s330, 15
      %s335 = smul.addr %s334, 2
      %s336 = smul.addr %s332, 32
      %s337 = sadd.s32 %s335, %s336
      %s338 = smul.addr %s337, 8
      %s339 = scalar_lea.vmem %s4, %s338
      %p340 = pneg %p201
      %p341 = pneg %p198
      %p342 = scmp.lt.s32.totalorder %s21, 1
      %s343 = scalar_select %p342, %s21, 1
      %p344 = scmp.lt.s32.totalorder %s22, 0
      %s345 = scalar_select %p344, %s22, 0
      %s346 = sadd.s32 %s345, %s343
      %s347 = smul.addr %s346, 2
      %s348 = scalar_lea.vmem %s5, %s347
      %s349 = smul.u32 %s22, 16
      %s350 = ssub.s32 %s349, 1
      %p351 = scmp.gt.s32.totalorder %s350, 0
      %s352 = scalar_select %p351, %s350, 0
      %p353 = scmp.lt.s32.totalorder %s21, 1
      %s354 = scalar_select %p353, %s21, 1
      %p355 = scmp.lt.s32.totalorder %s352, 15
      %s356 = scalar_select %p355, %s352, 15
      %s357 = smul.addr %s356, 2
      %s358 = smul.addr %s354, 32
      %s359 = sadd.s32 %s357, %s358
      %s360 = smul.addr %s359, 8
      %s361 = scalar_lea.vmem %s0, %s360
      %s362 = smul.u32 %s22, 16
      %s363 = ssub.s32 %s362, 1
      %p364 = scmp.gt.s32.totalorder %s363, 0
      %s365 = scalar_select %p364, %s363, 0
      %s366 = smul.u32 16, %s22
      %p367 = scmp.lt.s32.totalorder %s21, 1
      %s368 = scalar_select %p367, %s21, 1
      %p369 = scmp.lt.s32.totalorder %s366, 15
      %s370 = scalar_select %p369, %s366, 15
      %s371 = smul.addr %s370, 2
      %s372 = smul.addr %s368, 32
      %s373 = sadd.s32 %s371, %s372
      %s374 = smul.addr %s373, 8
      %s375 = scalar_lea.vmem %s1, %s374
      %s376 = smul.u32 16, %s22
      %s377 = smul.u32 %s22, 16
      %s378 = sadd.s32 %s377, 16
      %p379 = scmp.lt.s32.totalorder %s378, 15
      %s380 = scalar_select %p379, %s378, 15
      %p381 = scmp.lt.s32.totalorder %s21, 1
      %s382 = scalar_select %p381, %s21, 1
      %p383 = scmp.lt.s32.totalorder %s380, 15
      %s384 = scalar_select %p383, %s380, 15
      %s385 = smul.addr %s384, 2
      %s386 = smul.addr %s382, 32
      %s387 = sadd.s32 %s385, %s386
      %s388 = smul.addr %s387, 8
      %s389 = scalar_lea.vmem %s2, %s388
      %s390 = smul.u32 %s22, 16
      %s391 = sadd.s32 %s390, 16
      %p392 = scmp.lt.s32.totalorder %s391, 15
      %s393 = scalar_select %p392, %s391, 15
      %s394 = smul.u32 16, %s22
      %p395 = scmp.lt.s32.totalorder %s21, 1
      %s396 = scalar_select %p395, %s21, 1
      %p397 = scmp.lt.s32.totalorder %s394, 15
      %s398 = scalar_select %p397, %s394, 15
      %s399 = smul.addr %s398, 2
      %s400 = smul.addr %s396, 32
      %s401 = sadd.s32 %s399, %s400
      %s402 = smul.addr %s401, 8
      %s403 = scalar_lea.vmem %s4, %s402
      %s404 = smul.u32 16, %s22
      %p405 = scmp.lt.s32.totalorder %s21, 1
      %s406 = scalar_select %p405, %s21, 1
      %p407 = scmp.lt.s32.totalorder %s22, 0
      %s408 = scalar_select %p407, %s22, 0
      %s409 = sadd.s32 %s408, %s406
      %s410 = smul.addr %s409, 2
      %s411 = scalar_lea.vmem %s5, %s410
      %v412 = vld [vmem:[%s375] sm:$0xff]
      %v413 = vld [vmem:[%s375 + $0x8] sm:$0xff]
      %v414 = vld [vmem:[%s375 + $0x10] sm:$0xff]
      %v415 = vld [vmem:[%s375 + $0x18] sm:$0xff]
      %v416 = vld [vmem:[%s375 + $0x20] sm:$0xff]
      %v417 = vld [vmem:[%s375 + $0x28] sm:$0xff]
      %v418 = vld [vmem:[%s375 + $0x30] sm:$0xff]
      %v419 = vld [vmem:[%s375 + $0x38] sm:$0xff]
      %v420 = vld [vmem:[%s375 + $0x40] sm:$0xff]
      %v421 = vld [vmem:[%s375 + $0x48] sm:$0xff]
      %v422 = vld [vmem:[%s375 + $0x50] sm:$0xff]
      %v423 = vld [vmem:[%s375 + $0x58] sm:$0xff]
      %v424 = vld [vmem:[%s375 + $0x60] sm:$0xff]
      %v425 = vld [vmem:[%s375 + $0x68] sm:$0xff]
      %v426 = vld [vmem:[%s375 + $0x70] sm:$0xff]
      %v427 = vld [vmem:[%s375 + $0x78] sm:$0xff]
      %v428 = vld [vmem:[%s375 + $0x80] sm:$0xff]
      %v429 = vld [vmem:[%s375 + $0x88] sm:$0xff]
      %v430 = vld [vmem:[%s375 + $0x90] sm:$0xff]
      %v431 = vld [vmem:[%s375 + $0x98] sm:$0xff]
      %v432 = vld [vmem:[%s375 + $0xa0] sm:$0xff]
      %v433 = vld [vmem:[%s375 + $0xa8] sm:$0xff]
      %v434 = vld [vmem:[%s375 + $0xb0] sm:$0xff]
      %v435 = vld [vmem:[%s375 + $0xb8] sm:$0xff]
      %v436 = vld [vmem:[%s375 + $0xc0] sm:$0xff]
      %v437 = vld [vmem:[%s375 + $0xc8] sm:$0xff]
      %v438 = vld [vmem:[%s375 + $0xd0] sm:$0xff]
      %v439 = vld [vmem:[%s375 + $0xd8] sm:$0xff]
      %v440 = vld [vmem:[%s375 + $0xe0] sm:$0xff]
      %v441 = vld [vmem:[%s375 + $0xe8] sm:$0xff]
      %v442 = vld [vmem:[%s375 + $0xf0] sm:$0xff]
      %v443 = vld [vmem:[%s375 + $0xf8] sm:$0xff]
      %v444 = vld [vmem:[%s361] sm:$0xff]
      %v445 = vld [vmem:[%s361 + $0x8] sm:$0xff]
      %p446 = scmp.gt.s32.totalorder %s22, 0
      %s447 = scalar_select %p446, 1, 0
      %s448 = scvt.s32.f32 %s447
      %v449 = vstv %s448
      %v450 = vmul.f32 %v444, %v449
      %v451 = vmul.f32 %v445, %v449
      %v452 = vld [vmem:[%s389] sm:$0xff]
      %v453 = vld [vmem:[%s389 + $0x8] sm:$0xff]
      %p454 = scmp.lt.s32.totalorder %s22, 0
      %s455 = scalar_select %p454, 1, 0
      %s456 = scvt.s32.f32 %s455
      %v457 = vstv %s456
      %v458 = vmul.f32 %v452, %v457
      %v459 = vmul.f32 %v453, %v457
      %vm496 = vcmask 1040384
      %v497 = vrot.slane %v450, 7
      %v498 = vrot.slane %v451, 7
      %v499 = vsel %vm496, %v497, %v498
      %v500 = vrot.slane %v412, 7
      %v501 = vrot.slane %v413, 7
      %v502 = vsel %vm496, %v500, %v501
      %v503 = vrot.slane %v414, 7
      %v504 = vrot.slane %v415, 7
      %v505 = vsel %vm496, %v503, %v504
      %v506 = vrot.slane %v416, 7
      %v507 = vrot.slane %v417, 7
      %v508 = vsel %vm496, %v506, %v507
      %v509 = vrot.slane %v418, 7
      %v510 = vrot.slane %v419, 7
      %v511 = vsel %vm496, %v509, %v510
      %v512 = vrot.slane %v420, 7
      %v513 = vrot.slane %v421, 7
      %v514 = vsel %vm496, %v512, %v513
      %v515 = vrot.slane %v422, 7
      %v516 = vrot.slane %v423, 7
      %v517 = vsel %vm496, %v515, %v516
      %v518 = vrot.slane %v424, 7
      %v519 = vrot.slane %v425, 7
      %v520 = vsel %vm496, %v518, %v519
      %v521 = vrot.slane %v426, 7
      %v522 = vrot.slane %v427, 7
      %v523 = vsel %vm496, %v521, %v522
      %v524 = vrot.slane %v428, 7
      %v525 = vrot.slane %v429, 7
      %v526 = vsel %vm496, %v524, %v525
      %v527 = vrot.slane %v430, 7
      %v528 = vrot.slane %v431, 7
      %v529 = vsel %vm496, %v527, %v528
      %v530 = vrot.slane %v432, 7
      %v531 = vrot.slane %v433, 7
      %v532 = vsel %vm496, %v530, %v531
      %v533 = vrot.slane %v434, 7
      %v534 = vrot.slane %v435, 7
      %v535 = vsel %vm496, %v533, %v534
      %v536 = vrot.slane %v436, 7
      %v537 = vrot.slane %v437, 7
      %v538 = vsel %vm496, %v536, %v537
      %v539 = vrot.slane %v438, 7
      %v540 = vrot.slane %v439, 7
      %v541 = vsel %vm496, %v539, %v540
      %v542 = vrot.slane %v440, 7
      %v543 = vrot.slane %v441, 7
      %v544 = vsel %vm496, %v542, %v543
      %v545 = vrot.slane %v442, 7
      %v546 = vrot.slane %v443, 7
      %v547 = vsel %vm496, %v545, %v546
      %v548 = vrot.slane %v458, 7
      %v549 = vrot.slane %v459, 7
      %v550 = vsel %vm496, %v548, %v549
      %v569 = vsel %vm496, 0.0, %v497
      %v570 = vsel %vm496, 0.0, %v500
      %v571 = vsel %vm496, 0.0, %v503
      %v572 = vsel %vm496, 0.0, %v506
      %v573 = vsel %vm496, 0.0, %v509
      %v574 = vsel %vm496, 0.0, %v512
      %v575 = vsel %vm496, 0.0, %v515
      %v576 = vsel %vm496, 0.0, %v518
      %v577 = vsel %vm496, 0.0, %v521
      %v578 = vsel %vm496, 0.0, %v524
      %v579 = vsel %vm496, 0.0, %v527
      %v580 = vsel %vm496, 0.0, %v530
      %v581 = vsel %vm496, 0.0, %v533
      %v582 = vsel %vm496, 0.0, %v536
      %v583 = vsel %vm496, 0.0, %v539
      %v584 = vsel %vm496, 0.0, %v542
      %v585 = vsel %vm496, 0.0, %v545
      %v586 = vsel %vm496, 0.0, %v548
      %vm587 = vcmask 1046528
      %v588 = vrot.slane %v450, 1
      %v589 = vrot.slane %v451, 1
      %v590 = vsel %vm587, %v588, %v589
      %v591 = vrot.slane %v412, 1
      %v592 = vrot.slane %v413, 1
      %v593 = vsel %vm587, %v591, %v592
      %v594 = vrot.slane %v414, 1
      %v595 = vrot.slane %v415, 1
      %v596 = vsel %vm587, %v594, %v595
      %v597 = vrot.slane %v416, 1
      %v598 = vrot.slane %v417, 1
      %v599 = vsel %vm587, %v597, %v598
      %v600 = vrot.slane %v418, 1
      %v601 = vrot.slane %v419, 1
      %v602 = vsel %vm587, %v600, %v601
      %v603 = vrot.slane %v420, 1
      %v604 = vrot.slane %v421, 1
      %v605 = vsel %vm587, %v603, %v604
      %v606 = vrot.slane %v422, 1
      %v607 = vrot.slane %v423, 1
      %v608 = vsel %vm587, %v606, %v607
      %v609 = vrot.slane %v424, 1
      %v610 = vrot.slane %v425, 1
      %v611 = vsel %vm587, %v609, %v610
      %v612 = vrot.slane %v426, 1
      %v613 = vrot.slane %v427, 1
      %v614 = vsel %vm587, %v612, %v613
      %v615 = vrot.slane %v428, 1
      %v616 = vrot.slane %v429, 1
      %v617 = vsel %vm587, %v615, %v616
      %v618 = vrot.slane %v430, 1
      %v619 = vrot.slane %v431, 1
      %v620 = vsel %vm587, %v618, %v619
      %v621 = vrot.slane %v432, 1
      %v622 = vrot.slane %v433, 1
      %v623 = vsel %vm587, %v621, %v622
      %v624 = vrot.slane %v434, 1
      %v625 = vrot.slane %v435, 1
      %v626 = vsel %vm587, %v624, %v625
      %v627 = vrot.slane %v436, 1
      %v628 = vrot.slane %v437, 1
      %v629 = vsel %vm587, %v627, %v628
      %v630 = vrot.slane %v438, 1
      %v631 = vrot.slane %v439, 1
      %v632 = vsel %vm587, %v630, %v631
      %v633 = vrot.slane %v440, 1
      %v634 = vrot.slane %v441, 1
      %v635 = vsel %vm587, %v633, %v634
      %v636 = vrot.slane %v442, 1
      %v637 = vrot.slane %v443, 1
      %v638 = vsel %vm587, %v636, %v637
      %v639 = vrot.slane %v458, 1
      %v640 = vrot.slane %v459, 1
      %v641 = vsel %vm587, %v639, %v640
      %v660 = vsel %vm587, %v589, 0.0
      %v661 = vsel %vm587, %v592, 0.0
      %v662 = vsel %vm587, %v595, 0.0
      %v663 = vsel %vm587, %v598, 0.0
      %v664 = vsel %vm587, %v601, 0.0
      %v665 = vsel %vm587, %v604, 0.0
      %v666 = vsel %vm587, %v607, 0.0
      %v667 = vsel %vm587, %v610, 0.0
      %v668 = vsel %vm587, %v613, 0.0
      %v669 = vsel %vm587, %v616, 0.0
      %v670 = vsel %vm587, %v619, 0.0
      %v671 = vsel %vm587, %v622, 0.0
      %v672 = vsel %vm587, %v625, 0.0
      %v673 = vsel %vm587, %v628, 0.0
      %v674 = vsel %vm587, %v631, 0.0
      %v675 = vsel %vm587, %v634, 0.0
      %v676 = vsel %vm587, %v637, 0.0
      %v677 = vsel %vm587, %v640, 0.0
      %v678 = vld [vmem:[%s3] sm:$0xf]
      %s679 = scalar_lea.vmem %s3, 4
      %v680 = vld [vmem:[%s679] sm:$0xf]
      %vm681 = vcmask 31744
      %v682 = vsel %vm681, %v450, 0
      %v684 = vsel %vm681, %v451, 0
      %v686 = vsel %vm681, %v412, 0
      %v688 = vsel %vm681, %v413, 0
      %v690 = vsel %vm681, %v414, 0
      %v692 = vsel %vm681, %v415, 0
      %v694 = vsel %vm681, %v416, 0
      %v696 = vsel %vm681, %v417, 0
      %v698 = vsel %vm681, %v418, 0
      %v700 = vsel %vm681, %v419, 0
      %v702 = vsel %vm681, %v420, 0
      %v704 = vsel %vm681, %v421, 0
      %v706 = vsel %vm681, %v422, 0
      %v708 = vsel %vm681, %v423, 0
      %v710 = vsel %vm681, %v424, 0
      %v712 = vsel %vm681, %v425, 0
      %v714 = vsel %vm681, %v426, 0
      %v716 = vsel %vm681, %v427, 0
      %v718 = vsel %vm681, %v428, 0
      %v720 = vsel %vm681, %v429, 0
      %v722 = vsel %vm681, %v430, 0
      %v724 = vsel %vm681, %v431, 0
      %v726 = vsel %vm681, %v432, 0
      %v728 = vsel %vm681, %v433, 0
      %v730 = vsel %vm681, %v434, 0
      %v732 = vsel %vm681, %v435, 0
      %v734 = vsel %vm681, %v436, 0
      %v736 = vsel %vm681, %v437, 0
      %v738 = vsel %vm681, %v438, 0
      %v740 = vsel %vm681, %v439, 0
      %v742 = vsel %vm681, %v440, 0
      %v744 = vsel %vm681, %v441, 0
      %vm746 = vcmask 1043456
      %v748 = vsel %vm746, %v680, 0
      %750 = vmatpush.msra.mxu0 0.0
      %751 = vmatpush.msra.mxu0 0.0
      %752 = vmatpush.msra.mxu0 0.0
      %753 = vmatpush.msra.mxu0 0.0
      %754 = vmatpush.msra.mxu0 0.0
      %755 = vmatpush.msra.mxu0 0.0
      %756 = vmatpush.msra.mxu0 0.0
      %757 = vmatpush.msra.mxu0 0.0
      %758 = vmatpush.msra.mxu0 0.0
      %759 = vmatpush.msra.mxu0 0.0
      %760 = vmatpush.msra.mxu0 0.0
      %761 = vmatpush.msra.mxu0 0.0
      %762 = vmatpush.msra.mxu0 0.0
      %763 = vmatpush.msra.mxu0 0.0
      %764 = vmatpush.msra.mxu0 0.0
      %765 = vmatpush.msra.mxu0 %v748
      %766 = vmatmul.f32.gmra.mxu0 %v682
      %v767 = vpop.f32.mrf.mxu0
      %v768 = vadd.f32 0.0, %v767
      %769 = vmatmul.f32.gmra.mxu0 %v684
      %v770 = vpop.f32.mrf.mxu0
      %v771 = vadd.f32 0.0, %v770
      %772 = vmatmul.f32.gmra.mxu0 %v686
      %v773 = vpop.f32.mrf.mxu0
      %v774 = vadd.f32 0.0, %v773
      %775 = vmatmul.f32.gmra.mxu0 %v688
      %v776 = vpop.f32.mrf.mxu0
      %v777 = vadd.f32 0.0, %v776
      %778 = vmatmul.f32.gmra.mxu0 %v690
      %v779 = vpop.f32.mrf.mxu0
      %v780 = vadd.f32 0.0, %v779
      %781 = vmatmul.f32.gmra.mxu0 %v692
      %v782 = vpop.f32.mrf.mxu0
      %v783 = vadd.f32 0.0, %v782
      %784 = vmatmul.f32.gmra.mxu0 %v694
      %v785 = vpop.f32.mrf.mxu0
      %v786 = vadd.f32 0.0, %v785
      %787 = vmatmul.f32.gmra.mxu0 %v696
      %v788 = vpop.f32.mrf.mxu0
      %v789 = vadd.f32 0.0, %v788
      %790 = vmatmul.f32.gmra.mxu0 %v698
      %v791 = vpop.f32.mrf.mxu0
      %v792 = vadd.f32 0.0, %v791
      %793 = vmatmul.f32.gmra.mxu0 %v700
      %v794 = vpop.f32.mrf.mxu0
      %v795 = vadd.f32 0.0, %v794
      %796 = vmatmul.f32.gmra.mxu0 %v702
      %v797 = vpop.f32.mrf.mxu0
      %v798 = vadd.f32 0.0, %v797
      %799 = vmatmul.f32.gmra.mxu0 %v704
      %v800 = vpop.f32.mrf.mxu0
      %v801 = vadd.f32 0.0, %v800
      %802 = vmatmul.f32.gmra.mxu0 %v706
      %v803 = vpop.f32.mrf.mxu0
      %v804 = vadd.f32 0.0, %v803
      %805 = vmatmul.f32.gmra.mxu0 %v708
      %v806 = vpop.f32.mrf.mxu0
      %v807 = vadd.f32 0.0, %v806
      %808 = vmatmul.f32.gmra.mxu0 %v710
      %v809 = vpop.f32.mrf.mxu0
      %v810 = vadd.f32 0.0, %v809
      %811 = vmatmul.f32.gmra.mxu0 %v712
      %v812 = vpop.f32.mrf.mxu0
      %v813 = vadd.f32 0.0, %v812
      %814 = vmatmul.f32.gmra.mxu0 %v714
      %v815 = vpop.f32.mrf.mxu0
      %v816 = vadd.f32 0.0, %v815
      %817 = vmatmul.f32.gmra.mxu0 %v716
      %v818 = vpop.f32.mrf.mxu0
      %v819 = vadd.f32 0.0, %v818
      %820 = vmatmul.f32.gmra.mxu0 %v718
      %v821 = vpop.f32.mrf.mxu0
      %v822 = vadd.f32 0.0, %v821
      %823 = vmatmul.f32.gmra.mxu0 %v720
      %v824 = vpop.f32.mrf.mxu0
      %v825 = vadd.f32 0.0, %v824
      %826 = vmatmul.f32.gmra.mxu0 %v722
      %v827 = vpop.f32.mrf.mxu0
      %v828 = vadd.f32 0.0, %v827
      %829 = vmatmul.f32.gmra.mxu0 %v724
      %v830 = vpop.f32.mrf.mxu0
      %v831 = vadd.f32 0.0, %v830
      %832 = vmatmul.f32.gmra.mxu0 %v726
      %v833 = vpop.f32.mrf.mxu0
      %v834 = vadd.f32 0.0, %v833
      %835 = vmatmul.f32.gmra.mxu0 %v728
      %v836 = vpop.f32.mrf.mxu0
      %v837 = vadd.f32 0.0, %v836
      %838 = vmatmul.f32.gmra.mxu0 %v730
      %v839 = vpop.f32.mrf.mxu0
      %v840 = vadd.f32 0.0, %v839
      %841 = vmatmul.f32.gmra.mxu0 %v732
      %v842 = vpop.f32.mrf.mxu0
      %v843 = vadd.f32 0.0, %v842
      %844 = vmatmul.f32.gmra.mxu0 %v734
      %v845 = vpop.f32.mrf.mxu0
      %v846 = vadd.f32 0.0, %v845
      %847 = vmatmul.f32.gmra.mxu0 %v736
      %v848 = vpop.f32.mrf.mxu0
      %v849 = vadd.f32 0.0, %v848
      %850 = vmatmul.f32.gmra.mxu0 %v738
      %v851 = vpop.f32.mrf.mxu0
      %v852 = vadd.f32 0.0, %v851
      %853 = vmatmul.f32.gmra.mxu0 %v740
      %v854 = vpop.f32.mrf.mxu0
      %v855 = vadd.f32 0.0, %v854
      %856 = vmatmul.f32.gmra.mxu0 %v742
      %v857 = vpop.f32.mrf.mxu0
      %v858 = vadd.f32 0.0, %v857
      %859 = vmatmul.f32.gmra.mxu0 %v744
      %v860 = vpop.f32.mrf.mxu0
      %v861 = vadd.f32 0.0, %v860
      %862 = vdwg.mxu0
      %v864 = vsel %vm681, %v569, 0
      %v866 = vsel %vm681, %v499, 0
      %v869 = vsel %vm681, %v570, 0
      %v871 = vsel %vm681, %v502, 0
      %v874 = vsel %vm681, %v571, 0
      %v876 = vsel %vm681, %v505, 0
      %v879 = vsel %vm681, %v572, 0
      %v881 = vsel %vm681, %v508, 0
      %v884 = vsel %vm681, %v573, 0
      %v886 = vsel %vm681, %v511, 0
      %v889 = vsel %vm681, %v574, 0
      %v891 = vsel %vm681, %v514, 0
      %v894 = vsel %vm681, %v575, 0
      %v896 = vsel %vm681, %v517, 0
      %v899 = vsel %vm681, %v576, 0
      %v901 = vsel %vm681, %v520, 0
      %v904 = vsel %vm681, %v577, 0
      %v906 = vsel %vm681, %v523, 0
      %v909 = vsel %vm681, %v578, 0
      %v911 = vsel %vm681, %v526, 0
      %v914 = vsel %vm681, %v579, 0
      %v916 = vsel %vm681, %v529, 0
      %v919 = vsel %vm681, %v580, 0
      %v921 = vsel %vm681, %v532, 0
      %v924 = vsel %vm681, %v581, 0
      %v926 = vsel %vm681, %v535, 0
      %v929 = vsel %vm681, %v582, 0
      %v931 = vsel %vm681, %v538, 0
      %v934 = vsel %vm681, %v583, 0
      %v936 = vsel %vm681, %v541, 0
      %v939 = vsel %vm681, %v584, 0
      %v941 = vsel %vm681, %v544, 0
      %v944 = vsel %vm746, %v678, 0
      %946 = vmatpush.msra.mxu0 0.0
      %947 = vmatpush.msra.mxu0 0.0
      %948 = vmatpush.msra.mxu0 0.0
      %949 = vmatpush.msra.mxu0 0.0
      %950 = vmatpush.msra.mxu0 0.0
      %951 = vmatpush.msra.mxu0 0.0
      %952 = vmatpush.msra.mxu0 0.0
      %953 = vmatpush.msra.mxu0 0.0
      %954 = vmatpush.msra.mxu0 0.0
      %955 = vmatpush.msra.mxu0 0.0
      %956 = vmatpush.msra.mxu0 0.0
      %957 = vmatpush.msra.mxu0 0.0
      %958 = vmatpush.msra.mxu0 0.0
      %959 = vmatpush.msra.mxu0 0.0
      %960 = vmatpush.msra.mxu0 0.0
      %961 = vmatpush.msra.mxu0 %v944
      %962 = vmatmul.f32.gmra.mxu0 %v864
      %v963 = vpop.f32.mrf.mxu0
      %v964 = vadd.f32 %v768, %v963
      %965 = vmatmul.f32.gmra.mxu0 %v866
      %v966 = vpop.f32.mrf.mxu0
      %v967 = vadd.f32 %v771, %v966
      %968 = vmatmul.f32.gmra.mxu0 %v869
      %v969 = vpop.f32.mrf.mxu0
      %v970 = vadd.f32 %v774, %v969
      %971 = vmatmul.f32.gmra.mxu0 %v871
      %v972 = vpop.f32.mrf.mxu0
      %v973 = vadd.f32 %v777, %v972
      %974 = vmatmul.f32.gmra.mxu0 %v874
      %v975 = vpop.f32.mrf.mxu0
      %v976 = vadd.f32 %v780, %v975
      %977 = vmatmul.f32.gmra.mxu0 %v876
      %v978 = vpop.f32.mrf.mxu0
      %v979 = vadd.f32 %v783, %v978
      %980 = vmatmul.f32.gmra.mxu0 %v879
      %v981 = vpop.f32.mrf.mxu0
      %v982 = vadd.f32 %v786, %v981
      %983 = vmatmul.f32.gmra.mxu0 %v881
      %v984 = vpop.f32.mrf.mxu0
      %v985 = vadd.f32 %v789, %v984
      %986 = vmatmul.f32.gmra.mxu0 %v884
      %v987 = vpop.f32.mrf.mxu0
      %v988 = vadd.f32 %v792, %v987
      %989 = vmatmul.f32.gmra.mxu0 %v886
      %v990 = vpop.f32.mrf.mxu0
      %v991 = vadd.f32 %v795, %v990
      %992 = vmatmul.f32.gmra.mxu0 %v889
      %v993 = vpop.f32.mrf.mxu0
      %v994 = vadd.f32 %v798, %v993
      %995 = vmatmul.f32.gmra.mxu0 %v891
      %v996 = vpop.f32.mrf.mxu0
      %v997 = vadd.f32 %v801, %v996
      %998 = vmatmul.f32.gmra.mxu0 %v894
      %v999 = vpop.f32.mrf.mxu0
      %v1000 = vadd.f32 %v804, %v999
      %1001 = vmatmul.f32.gmra.mxu0 %v896
      %v1002 = vpop.f32.mrf.mxu0
      %v1003 = vadd.f32 %v807, %v1002
      %1004 = vmatmul.f32.gmra.mxu0 %v899
      %v1005 = vpop.f32.mrf.mxu0
      %v1006 = vadd.f32 %v810, %v1005
      %1007 = vmatmul.f32.gmra.mxu0 %v901
      %v1008 = vpop.f32.mrf.mxu0
      %v1009 = vadd.f32 %v813, %v1008
      %1010 = vmatmul.f32.gmra.mxu0 %v904
      %v1011 = vpop.f32.mrf.mxu0
      %v1012 = vadd.f32 %v816, %v1011
      %1013 = vmatmul.f32.gmra.mxu0 %v906
      %v1014 = vpop.f32.mrf.mxu0
      %v1015 = vadd.f32 %v819, %v1014
      %1016 = vmatmul.f32.gmra.mxu0 %v909
      %v1017 = vpop.f32.mrf.mxu0
      %v1018 = vadd.f32 %v822, %v1017
      %1019 = vmatmul.f32.gmra.mxu0 %v911
      %v1020 = vpop.f32.mrf.mxu0
      %v1021 = vadd.f32 %v825, %v1020
      %1022 = vmatmul.f32.gmra.mxu0 %v914
      %v1023 = vpop.f32.mrf.mxu0
      %v1024 = vadd.f32 %v828, %v1023
      %1025 = vmatmul.f32.gmra.mxu0 %v916
      %v1026 = vpop.f32.mrf.mxu0
      %v1027 = vadd.f32 %v831, %v1026
      %1028 = vmatmul.f32.gmra.mxu0 %v919
      %v1029 = vpop.f32.mrf.mxu0
      %v1030 = vadd.f32 %v834, %v1029
      %1031 = vmatmul.f32.gmra.mxu0 %v921
      %v1032 = vpop.f32.mrf.mxu0
      %v1033 = vadd.f32 %v837, %v1032
      %1034 = vmatmul.f32.gmra.mxu0 %v924
      %v1035 = vpop.f32.mrf.mxu0
      %v1036 = vadd.f32 %v840, %v1035
      %1037 = vmatmul.f32.gmra.mxu0 %v926
      %v1038 = vpop.f32.mrf.mxu0
      %v1039 = vadd.f32 %v843, %v1038
      %1040 = vmatmul.f32.gmra.mxu0 %v929
      %v1041 = vpop.f32.mrf.mxu0
      %v1042 = vadd.f32 %v846, %v1041
      %1043 = vmatmul.f32.gmra.mxu0 %v931
      %v1044 = vpop.f32.mrf.mxu0
      %v1045 = vadd.f32 %v849, %v1044
      %1046 = vmatmul.f32.gmra.mxu0 %v934
      %v1047 = vpop.f32.mrf.mxu0
      %v1048 = vadd.f32 %v852, %v1047
      %1049 = vmatmul.f32.gmra.mxu0 %v936
      %v1050 = vpop.f32.mrf.mxu0
      %v1051 = vadd.f32 %v855, %v1050
      %1052 = vmatmul.f32.gmra.mxu0 %v939
      %v1053 = vpop.f32.mrf.mxu0
      %v1054 = vadd.f32 %v858, %v1053
      %1055 = vmatmul.f32.gmra.mxu0 %v941
      %v1056 = vpop.f32.mrf.mxu0
      %v1057 = vadd.f32 %v861, %v1056
      %1058 = vdwg.mxu0
      %s1059 = scalar_lea.vmem %s3, 8
      %v1060 = vld [vmem:[%s1059] sm:$0xf]
      %v1061 = vsel %vm681, %v590, 0
      %v1064 = vsel %vm681, %v660, 0
      %v1066 = vsel %vm681, %v593, 0
      %v1069 = vsel %vm681, %v661, 0
      %v1071 = vsel %vm681, %v596, 0
      %v1074 = vsel %vm681, %v662, 0
      %v1076 = vsel %vm681, %v599, 0
      %v1079 = vsel %vm681, %v663, 0
      %v1081 = vsel %vm681, %v602, 0
      %v1084 = vsel %vm681, %v664, 0
      %v1086 = vsel %vm681, %v605, 0
      %v1089 = vsel %vm681, %v665, 0
      %v1091 = vsel %vm681, %v608, 0
      %v1094 = vsel %vm681, %v666, 0
      %v1096 = vsel %vm681, %v611, 0
      %v1099 = vsel %vm681, %v667, 0
      %v1101 = vsel %vm681, %v614, 0
      %v1104 = vsel %vm681, %v668, 0
      %v1106 = vsel %vm681, %v617, 0
      %v1109 = vsel %vm681, %v669, 0
      %v1111 = vsel %vm681, %v620, 0
      %v1114 = vsel %vm681, %v670, 0
      %v1116 = vsel %vm681, %v623, 0
      %v1119 = vsel %vm681, %v671, 0
      %v1121 = vsel %vm681, %v626, 0
      %v1124 = vsel %vm681, %v672, 0
      %v1126 = vsel %vm681, %v629, 0
      %v1129 = vsel %vm681, %v673, 0
      %v1131 = vsel %vm681, %v632, 0
      %v1134 = vsel %vm681, %v674, 0
      %v1136 = vsel %vm681, %v635, 0
      %v1139 = vsel %vm681, %v675, 0
      %v1142 = vsel %vm746, %v1060, 0
      %1144 = vmatpush.msra.mxu0 0.0
      %1145 = vmatpush.msra.mxu0 0.0
      %1146 = vmatpush.msra.mxu0 0.0
      %1147 = vmatpush.msra.mxu0 0.0
      %1148 = vmatpush.msra.mxu0 0.0
      %1149 = vmatpush.msra.mxu0 0.0
      %1150 = vmatpush.msra.mxu0 0.0
      %1151 = vmatpush.msra.mxu0 0.0
      %1152 = vmatpush.msra.mxu0 0.0
      %1153 = vmatpush.msra.mxu0 0.0
      %1154 = vmatpush.msra.mxu0 0.0
      %1155 = vmatpush.msra.mxu0 0.0
      %1156 = vmatpush.msra.mxu0 0.0
      %1157 = vmatpush.msra.mxu0 0.0
      %1158 = vmatpush.msra.mxu0 0.0
      %1159 = vmatpush.msra.mxu0 %v1142
      %1160 = vmatmul.f32.gmra.mxu0 %v1061
      %v1161 = vpop.f32.mrf.mxu0
      %v1162 = vadd.f32 0.0, %v1161
      %1163 = vmatmul.f32.gmra.mxu0 %v1064
      %v1164 = vpop.f32.mrf.mxu0
      %v1165 = vadd.f32 0.0, %v1164
      %1166 = vmatmul.f32.gmra.mxu0 %v1066
      %v1167 = vpop.f32.mrf.mxu0
      %v1168 = vadd.f32 0.0, %v1167
      %1169 = vmatmul.f32.gmra.mxu0 %v1069
      %v1170 = vpop.f32.mrf.mxu0
      %v1171 = vadd.f32 0.0, %v1170
      %1172 = vmatmul.f32.gmra.mxu0 %v1071
      %v1173 = vpop.f32.mrf.mxu0
      %v1174 = vadd.f32 0.0, %v1173
      %1175 = vmatmul.f32.gmra.mxu0 %v1074
      %v1176 = vpop.f32.mrf.mxu0
      %v1177 = vadd.f32 0.0, %v1176
      %1178 = vmatmul.f32.gmra.mxu0 %v1076
      %v1179 = vpop.f32.mrf.mxu0
      %v1180 = vadd.f32 0.0, %v1179
      %1181 = vmatmul.f32.gmra.mxu0 %v1079
      %v1182 = vpop.f32.mrf.mxu0
      %v1183 = vadd.f32 0.0, %v1182
      %1184 = vmatmul.f32.gmra.mxu0 %v1081
      %v1185 = vpop.f32.mrf.mxu0
      %v1186 = vadd.f32 0.0, %v1185
      %1187 = vmatmul.f32.gmra.mxu0 %v1084
      %v1188 = vpop.f32.mrf.mxu0
      %v1189 = vadd.f32 0.0, %v1188
      %1190 = vmatmul.f32.gmra.mxu0 %v1086
      %v1191 = vpop.f32.mrf.mxu0
      %v1192 = vadd.f32 0.0, %v1191
      %1193 = vmatmul.f32.gmra.mxu0 %v1089
      %v1194 = vpop.f32.mrf.mxu0
      %v1195 = vadd.f32 0.0, %v1194
      %1196 = vmatmul.f32.gmra.mxu0 %v1091
      %v1197 = vpop.f32.mrf.mxu0
      %v1198 = vadd.f32 0.0, %v1197
      %1199 = vmatmul.f32.gmra.mxu0 %v1094
      %v1200 = vpop.f32.mrf.mxu0
      %v1201 = vadd.f32 0.0, %v1200
      %1202 = vmatmul.f32.gmra.mxu0 %v1096
      %v1203 = vpop.f32.mrf.mxu0
      %v1204 = vadd.f32 0.0, %v1203
      %1205 = vmatmul.f32.gmra.mxu0 %v1099
      %v1206 = vpop.f32.mrf.mxu0
      %v1207 = vadd.f32 0.0, %v1206
      %1208 = vmatmul.f32.gmra.mxu0 %v1101
      %v1209 = vpop.f32.mrf.mxu0
      %v1210 = vadd.f32 0.0, %v1209
      %1211 = vmatmul.f32.gmra.mxu0 %v1104
      %v1212 = vpop.f32.mrf.mxu0
      %v1213 = vadd.f32 0.0, %v1212
      %1214 = vmatmul.f32.gmra.mxu0 %v1106
      %v1215 = vpop.f32.mrf.mxu0
      %v1216 = vadd.f32 0.0, %v1215
      %1217 = vmatmul.f32.gmra.mxu0 %v1109
      %v1218 = vpop.f32.mrf.mxu0
      %v1219 = vadd.f32 0.0, %v1218
      %1220 = vmatmul.f32.gmra.mxu0 %v1111
      %v1221 = vpop.f32.mrf.mxu0
      %v1222 = vadd.f32 0.0, %v1221
      %1223 = vmatmul.f32.gmra.mxu0 %v1114
      %v1224 = vpop.f32.mrf.mxu0
      %v1225 = vadd.f32 0.0, %v1224
      %1226 = vmatmul.f32.gmra.mxu0 %v1116
      %v1227 = vpop.f32.mrf.mxu0
      %v1228 = vadd.f32 0.0, %v1227
      %1229 = vmatmul.f32.gmra.mxu0 %v1119
      %v1230 = vpop.f32.mrf.mxu0
      %v1231 = vadd.f32 0.0, %v1230
      %1232 = vmatmul.f32.gmra.mxu0 %v1121
      %v1233 = vpop.f32.mrf.mxu0
      %v1234 = vadd.f32 0.0, %v1233
      %1235 = vmatmul.f32.gmra.mxu0 %v1124
      %v1236 = vpop.f32.mrf.mxu0
      %v1237 = vadd.f32 0.0, %v1236
      %1238 = vmatmul.f32.gmra.mxu0 %v1126
      %v1239 = vpop.f32.mrf.mxu0
      %v1240 = vadd.f32 0.0, %v1239
      %1241 = vmatmul.f32.gmra.mxu0 %v1129
      %v1242 = vpop.f32.mrf.mxu0
      %v1243 = vadd.f32 0.0, %v1242
      %1244 = vmatmul.f32.gmra.mxu0 %v1131
      %v1245 = vpop.f32.mrf.mxu0
      %v1246 = vadd.f32 0.0, %v1245
      %1247 = vmatmul.f32.gmra.mxu0 %v1134
      %v1248 = vpop.f32.mrf.mxu0
      %v1249 = vadd.f32 0.0, %v1248
      %1250 = vmatmul.f32.gmra.mxu0 %v1136
      %v1251 = vpop.f32.mrf.mxu0
      %v1252 = vadd.f32 0.0, %v1251
      %1253 = vmatmul.f32.gmra.mxu0 %v1139
      %v1254 = vpop.f32.mrf.mxu0
      %v1255 = vadd.f32 0.0, %v1254
      %1256 = vdwg.mxu0
      %v1257 = vadd.f32 %v964, %v1162
      %v1258 = vadd.f32 %v967, %v1165
      %v1259 = vadd.f32 %v970, %v1168
      %v1260 = vadd.f32 %v973, %v1171
      %v1261 = vadd.f32 %v976, %v1174
      %v1262 = vadd.f32 %v979, %v1177
      %v1263 = vadd.f32 %v982, %v1180
      %v1264 = vadd.f32 %v985, %v1183
      %v1265 = vadd.f32 %v988, %v1186
      %v1266 = vadd.f32 %v991, %v1189
      %v1267 = vadd.f32 %v994, %v1192
      %v1268 = vadd.f32 %v997, %v1195
      %v1269 = vadd.f32 %v1000, %v1198
      %v1270 = vadd.f32 %v1003, %v1201
      %v1271 = vadd.f32 %v1006, %v1204
      %v1272 = vadd.f32 %v1009, %v1207
      %v1273 = vadd.f32 %v1012, %v1210
      %v1274 = vadd.f32 %v1015, %v1213
      %v1275 = vadd.f32 %v1018, %v1216
      %v1276 = vadd.f32 %v1021, %v1219
      %v1277 = vadd.f32 %v1024, %v1222
      %v1278 = vadd.f32 %v1027, %v1225
      %v1279 = vadd.f32 %v1030, %v1228
      %v1280 = vadd.f32 %v1033, %v1231
      %v1281 = vadd.f32 %v1036, %v1234
      %v1282 = vadd.f32 %v1039, %v1237
      %v1283 = vadd.f32 %v1042, %v1240
      %v1284 = vadd.f32 %v1045, %v1243
      %v1285 = vadd.f32 %v1048, %v1246
      %v1286 = vadd.f32 %v1051, %v1249
      %v1287 = vadd.f32 %v1054, %v1252
      %v1288 = vadd.f32 %v1057, %v1255
      %s1289 = scalar_lea.vmem %s3, 12
      %v1290 = vld [vmem:[%s1289] sm:$0xf]
      %v1292 = vsel %vm681, %v585, 0
      %v1294 = vsel %vm681, %v547, 0
      %v1297 = vsel %vm746, %v1290, 0
      %1299 = vmatpush.msra.mxu0 0.0
      %1300 = vmatpush.msra.mxu0 0.0
      %1301 = vmatpush.msra.mxu0 0.0
      %1302 = vmatpush.msra.mxu0 0.0
      %1303 = vmatpush.msra.mxu0 0.0
      %1304 = vmatpush.msra.mxu0 0.0
      %1305 = vmatpush.msra.mxu0 0.0
      %1306 = vmatpush.msra.mxu0 0.0
      %1307 = vmatpush.msra.mxu0 0.0
      %1308 = vmatpush.msra.mxu0 0.0
      %1309 = vmatpush.msra.mxu0 0.0
      %1310 = vmatpush.msra.mxu0 0.0
      %1311 = vmatpush.msra.mxu0 0.0
      %1312 = vmatpush.msra.mxu0 0.0
      %1313 = vmatpush.msra.mxu0 0.0
      %1314 = vmatpush.msra.mxu0 %v1297
      %1315 = vmatmul.f32.gmra.mxu0 %v869
      %v1316 = vpop.f32.mrf.mxu0
      %v1317 = vadd.f32 0.0, %v1316
      %1318 = vmatmul.f32.gmra.mxu0 %v871
      %v1319 = vpop.f32.mrf.mxu0
      %v1320 = vadd.f32 0.0, %v1319
      %1321 = vmatmul.f32.gmra.mxu0 %v874
      %v1322 = vpop.f32.mrf.mxu0
      %v1323 = vadd.f32 0.0, %v1322
      %1324 = vmatmul.f32.gmra.mxu0 %v876
      %v1325 = vpop.f32.mrf.mxu0
      %v1326 = vadd.f32 0.0, %v1325
      %1327 = vmatmul.f32.gmra.mxu0 %v879
      %v1328 = vpop.f32.mrf.mxu0
      %v1329 = vadd.f32 0.0, %v1328
      %1330 = vmatmul.f32.gmra.mxu0 %v881
      %v1331 = vpop.f32.mrf.mxu0
      %v1332 = vadd.f32 0.0, %v1331
      %1333 = vmatmul.f32.gmra.mxu0 %v884
      %v1334 = vpop.f32.mrf.mxu0
      %v1335 = vadd.f32 0.0, %v1334
      %1336 = vmatmul.f32.gmra.mxu0 %v886
      %v1337 = vpop.f32.mrf.mxu0
      %v1338 = vadd.f32 0.0, %v1337
      %1339 = vmatmul.f32.gmra.mxu0 %v889
      %v1340 = vpop.f32.mrf.mxu0
      %v1341 = vadd.f32 0.0, %v1340
      %1342 = vmatmul.f32.gmra.mxu0 %v891
      %v1343 = vpop.f32.mrf.mxu0
      %v1344 = vadd.f32 0.0, %v1343
      %1345 = vmatmul.f32.gmra.mxu0 %v894
      %v1346 = vpop.f32.mrf.mxu0
      %v1347 = vadd.f32 0.0, %v1346
      %1348 = vmatmul.f32.gmra.mxu0 %v896
      %v1349 = vpop.f32.mrf.mxu0
      %v1350 = vadd.f32 0.0, %v1349
      %1351 = vmatmul.f32.gmra.mxu0 %v899
      %v1352 = vpop.f32.mrf.mxu0
      %v1353 = vadd.f32 0.0, %v1352
      %1354 = vmatmul.f32.gmra.mxu0 %v901
      %v1355 = vpop.f32.mrf.mxu0
      %v1356 = vadd.f32 0.0, %v1355
      %1357 = vmatmul.f32.gmra.mxu0 %v904
      %v1358 = vpop.f32.mrf.mxu0
      %v1359 = vadd.f32 0.0, %v1358
      %1360 = vmatmul.f32.gmra.mxu0 %v906
      %v1361 = vpop.f32.mrf.mxu0
      %v1362 = vadd.f32 0.0, %v1361
      %1363 = vmatmul.f32.gmra.mxu0 %v909
      %v1364 = vpop.f32.mrf.mxu0
      %v1365 = vadd.f32 0.0, %v1364
      %1366 = vmatmul.f32.gmra.mxu0 %v911
      %v1367 = vpop.f32.mrf.mxu0
      %v1368 = vadd.f32 0.0, %v1367
      %1369 = vmatmul.f32.gmra.mxu0 %v914
      %v1370 = vpop.f32.mrf.mxu0
      %v1371 = vadd.f32 0.0, %v1370
      %1372 = vmatmul.f32.gmra.mxu0 %v916
      %v1373 = vpop.f32.mrf.mxu0
      %v1374 = vadd.f32 0.0, %v1373
      %1375 = vmatmul.f32.gmra.mxu0 %v919
      %v1376 = vpop.f32.mrf.mxu0
      %v1377 = vadd.f32 0.0, %v1376
      %1378 = vmatmul.f32.gmra.mxu0 %v921
      %v1379 = vpop.f32.mrf.mxu0
      %v1380 = vadd.f32 0.0, %v1379
      %1381 = vmatmul.f32.gmra.mxu0 %v924
      %v1382 = vpop.f32.mrf.mxu0
      %v1383 = vadd.f32 0.0, %v1382
      %1384 = vmatmul.f32.gmra.mxu0 %v926
      %v1385 = vpop.f32.mrf.mxu0
      %v1386 = vadd.f32 0.0, %v1385
      %1387 = vmatmul.f32.gmra.mxu0 %v929
      %v1388 = vpop.f32.mrf.mxu0
      %v1389 = vadd.f32 0.0, %v1388
      %1390 = vmatmul.f32.gmra.mxu0 %v931
      %v1391 = vpop.f32.mrf.mxu0
      %v1392 = vadd.f32 0.0, %v1391
      %1393 = vmatmul.f32.gmra.mxu0 %v934
      %v1394 = vpop.f32.mrf.mxu0
      %v1395 = vadd.f32 0.0, %v1394
      %1396 = vmatmul.f32.gmra.mxu0 %v936
      %v1397 = vpop.f32.mrf.mxu0
      %v1398 = vadd.f32 0.0, %v1397
      %1399 = vmatmul.f32.gmra.mxu0 %v939
      %v1400 = vpop.f32.mrf.mxu0
      %v1401 = vadd.f32 0.0, %v1400
      %1402 = vmatmul.f32.gmra.mxu0 %v941
      %v1403 = vpop.f32.mrf.mxu0
      %v1404 = vadd.f32 0.0, %v1403
      %1405 = vmatmul.f32.gmra.mxu0 %v1292
      %v1406 = vpop.f32.mrf.mxu0
      %v1407 = vadd.f32 0.0, %v1406
      %1408 = vmatmul.f32.gmra.mxu0 %v1294
      %v1409 = vpop.f32.mrf.mxu0
      %v1410 = vadd.f32 0.0, %v1409
      %1411 = vdwg.mxu0
      %v1412 = vadd.f32 %v1257, %v1317
      %v1413 = vadd.f32 %v1258, %v1320
      %v1414 = vadd.f32 %v1259, %v1323
      %v1415 = vadd.f32 %v1260, %v1326
      %v1416 = vadd.f32 %v1261, %v1329
      %v1417 = vadd.f32 %v1262, %v1332
      %v1418 = vadd.f32 %v1263, %v1335
      %v1419 = vadd.f32 %v1264, %v1338
      %v1420 = vadd.f32 %v1265, %v1341
      %v1421 = vadd.f32 %v1266, %v1344
      %v1422 = vadd.f32 %v1267, %v1347
      %v1423 = vadd.f32 %v1268, %v1350
      %v1424 = vadd.f32 %v1269, %v1353
      %v1425 = vadd.f32 %v1270, %v1356
      %v1426 = vadd.f32 %v1271, %v1359
      %v1427 = vadd.f32 %v1272, %v1362
      %v1428 = vadd.f32 %v1273, %v1365
      %v1429 = vadd.f32 %v1274, %v1368
      %v1430 = vadd.f32 %v1275, %v1371
      %v1431 = vadd.f32 %v1276, %v1374
      %v1432 = vadd.f32 %v1277, %v1377
      %v1433 = vadd.f32 %v1278, %v1380
      %v1434 = vadd.f32 %v1279, %v1383
      %v1435 = vadd.f32 %v1280, %v1386
      %v1436 = vadd.f32 %v1281, %v1389
      %v1437 = vadd.f32 %v1282, %v1392
      %v1438 = vadd.f32 %v1283, %v1395
      %v1439 = vadd.f32 %v1284, %v1398
      %v1440 = vadd.f32 %v1285, %v1401
      %v1441 = vadd.f32 %v1286, %v1404
      %v1442 = vadd.f32 %v1287, %v1407
      %v1443 = vadd.f32 %v1288, %v1410
      %s1444 = scalar_lea.vmem %s3, 16
      %v1445 = vld [vmem:[%s1444] sm:$0xf]
      %v1446 = vsel %vm681, %v442, 0
      %v1448 = vsel %vm681, %v443, 0
      %v1451 = vsel %vm746, %v1445, 0
      %1453 = vmatpush.msra.mxu0 0.0
      %1454 = vmatpush.msra.mxu0 0.0
      %1455 = vmatpush.msra.mxu0 0.0
      %1456 = vmatpush.msra.mxu0 0.0
      %1457 = vmatpush.msra.mxu0 0.0
      %1458 = vmatpush.msra.mxu0 0.0
      %1459 = vmatpush.msra.mxu0 0.0
      %1460 = vmatpush.msra.mxu0 0.0
      %1461 = vmatpush.msra.mxu0 0.0
      %1462 = vmatpush.msra.mxu0 0.0
      %1463 = vmatpush.msra.mxu0 0.0
      %1464 = vmatpush.msra.mxu0 0.0
      %1465 = vmatpush.msra.mxu0 0.0
      %1466 = vmatpush.msra.mxu0 0.0
      %1467 = vmatpush.msra.mxu0 0.0
      %1468 = vmatpush.msra.mxu0 %v1451
      %1469 = vmatmul.f32.gmra.mxu0 %v686
      %v1470 = vpop.f32.mrf.mxu0
      %v1471 = vadd.f32 0.0, %v1470
      %1472 = vmatmul.f32.gmra.mxu0 %v688
      %v1473 = vpop.f32.mrf.mxu0
      %v1474 = vadd.f32 0.0, %v1473
      %1475 = vmatmul.f32.gmra.mxu0 %v690
      %v1476 = vpop.f32.mrf.mxu0
      %v1477 = vadd.f32 0.0, %v1476
      %1478 = vmatmul.f32.gmra.mxu0 %v692
      %v1479 = vpop.f32.mrf.mxu0
      %v1480 = vadd.f32 0.0, %v1479
      %1481 = vmatmul.f32.gmra.mxu0 %v694
      %v1482 = vpop.f32.mrf.mxu0
      %v1483 = vadd.f32 0.0, %v1482
      %1484 = vmatmul.f32.gmra.mxu0 %v696
      %v1485 = vpop.f32.mrf.mxu0
      %v1486 = vadd.f32 0.0, %v1485
      %1487 = vmatmul.f32.gmra.mxu0 %v698
      %v1488 = vpop.f32.mrf.mxu0
      %v1489 = vadd.f32 0.0, %v1488
      %1490 = vmatmul.f32.gmra.mxu0 %v700
      %v1491 = vpop.f32.mrf.mxu0
      %v1492 = vadd.f32 0.0, %v1491
      %1493 = vmatmul.f32.gmra.mxu0 %v702
      %v1494 = vpop.f32.mrf.mxu0
      %v1495 = vadd.f32 0.0, %v1494
      %1496 = vmatmul.f32.gmra.mxu0 %v704
      %v1497 = vpop.f32.mrf.mxu0
      %v1498 = vadd.f32 0.0, %v1497
      %1499 = vmatmul.f32.gmra.mxu0 %v706
      %v1500 = vpop.f32.mrf.mxu0
      %v1501 = vadd.f32 0.0, %v1500
      %1502 = vmatmul.f32.gmra.mxu0 %v708
      %v1503 = vpop.f32.mrf.mxu0
      %v1504 = vadd.f32 0.0, %v1503
      %1505 = vmatmul.f32.gmra.mxu0 %v710
      %v1506 = vpop.f32.mrf.mxu0
      %v1507 = vadd.f32 0.0, %v1506
      %1508 = vmatmul.f32.gmra.mxu0 %v712
      %v1509 = vpop.f32.mrf.mxu0
      %v1510 = vadd.f32 0.0, %v1509
      %1511 = vmatmul.f32.gmra.mxu0 %v714
      %v1512 = vpop.f32.mrf.mxu0
      %v1513 = vadd.f32 0.0, %v1512
      %1514 = vmatmul.f32.gmra.mxu0 %v716
      %v1515 = vpop.f32.mrf.mxu0
      %v1516 = vadd.f32 0.0, %v1515
      %1517 = vmatmul.f32.gmra.mxu0 %v718
      %v1518 = vpop.f32.mrf.mxu0
      %v1519 = vadd.f32 0.0, %v1518
      %1520 = vmatmul.f32.gmra.mxu0 %v720
      %v1521 = vpop.f32.mrf.mxu0
      %v1522 = vadd.f32 0.0, %v1521
      %1523 = vmatmul.f32.gmra.mxu0 %v722
      %v1524 = vpop.f32.mrf.mxu0
      %v1525 = vadd.f32 0.0, %v1524
      %1526 = vmatmul.f32.gmra.mxu0 %v724
      %v1527 = vpop.f32.mrf.mxu0
      %v1528 = vadd.f32 0.0, %v1527
      %1529 = vmatmul.f32.gmra.mxu0 %v726
      %v1530 = vpop.f32.mrf.mxu0
      %v1531 = vadd.f32 0.0, %v1530
      %1532 = vmatmul.f32.gmra.mxu0 %v728
      %v1533 = vpop.f32.mrf.mxu0
      %v1534 = vadd.f32 0.0, %v1533
      %1535 = vmatmul.f32.gmra.mxu0 %v730
      %v1536 = vpop.f32.mrf.mxu0
      %v1537 = vadd.f32 0.0, %v1536
      %1538 = vmatmul.f32.gmra.mxu0 %v732
      %v1539 = vpop.f32.mrf.mxu0
      %v1540 = vadd.f32 0.0, %v1539
      %1541 = vmatmul.f32.gmra.mxu0 %v734
      %v1542 = vpop.f32.mrf.mxu0
      %v1543 = vadd.f32 0.0, %v1542
      %1544 = vmatmul.f32.gmra.mxu0 %v736
      %v1545 = vpop.f32.mrf.mxu0
      %v1546 = vadd.f32 0.0, %v1545
      %1547 = vmatmul.f32.gmra.mxu0 %v738
      %v1548 = vpop.f32.mrf.mxu0
      %v1549 = vadd.f32 0.0, %v1548
      %1550 = vmatmul.f32.gmra.mxu0 %v740
      %v1551 = vpop.f32.mrf.mxu0
      %v1552 = vadd.f32 0.0, %v1551
      %1553 = vmatmul.f32.gmra.mxu0 %v742
      %v1554 = vpop.f32.mrf.mxu0
      %v1555 = vadd.f32 0.0, %v1554
      %1556 = vmatmul.f32.gmra.mxu0 %v744
      %v1557 = vpop.f32.mrf.mxu0
      %v1558 = vadd.f32 0.0, %v1557
      %1559 = vmatmul.f32.gmra.mxu0 %v1446
      %v1560 = vpop.f32.mrf.mxu0
      %v1561 = vadd.f32 0.0, %v1560
      %1562 = vmatmul.f32.gmra.mxu0 %v1448
      %v1563 = vpop.f32.mrf.mxu0
      %v1564 = vadd.f32 0.0, %v1563
      %1565 = vdwg.mxu0
      %v1566 = vadd.f32 %v1412, %v1471
      %v1567 = vadd.f32 %v1413, %v1474
      %v1568 = vadd.f32 %v1414, %v1477
      %v1569 = vadd.f32 %v1415, %v1480
      %v1570 = vadd.f32 %v1416, %v1483
      %v1571 = vadd.f32 %v1417, %v1486
      %v1572 = vadd.f32 %v1418, %v1489
      %v1573 = vadd.f32 %v1419, %v1492
      %v1574 = vadd.f32 %v1420, %v1495
      %v1575 = vadd.f32 %v1421, %v1498
      %v1576 = vadd.f32 %v1422, %v1501
      %v1577 = vadd.f32 %v1423, %v1504
      %v1578 = vadd.f32 %v1424, %v1507
      %v1579 = vadd.f32 %v1425, %v1510
      %v1580 = vadd.f32 %v1426, %v1513
      %v1581 = vadd.f32 %v1427, %v1516
      %v1582 = vadd.f32 %v1428, %v1519
      %v1583 = vadd.f32 %v1429, %v1522
      %v1584 = vadd.f32 %v1430, %v1525
      %v1585 = vadd.f32 %v1431, %v1528
      %v1586 = vadd.f32 %v1432, %v1531
      %v1587 = vadd.f32 %v1433, %v1534
      %v1588 = vadd.f32 %v1434, %v1537
      %v1589 = vadd.f32 %v1435, %v1540
      %v1590 = vadd.f32 %v1436, %v1543
      %v1591 = vadd.f32 %v1437, %v1546
      %v1592 = vadd.f32 %v1438, %v1549
      %v1593 = vadd.f32 %v1439, %v1552
      %v1594 = vadd.f32 %v1440, %v1555
      %v1595 = vadd.f32 %v1441, %v1558
      %v1596 = vadd.f32 %v1442, %v1561
      %v1597 = vadd.f32 %v1443, %v1564
      %s1598 = scalar_lea.vmem %s3, 20
      %v1599 = vld [vmem:[%s1598] sm:$0xf]
      %v1600 = vsel %vm681, %v638, 0
      %v1603 = vsel %vm681, %v676, 0
      %v1606 = vsel %vm746, %v1599, 0
      %1608 = vmatpush.msra.mxu0 0.0
      %1609 = vmatpush.msra.mxu0 0.0
      %1610 = vmatpush.msra.mxu0 0.0
      %1611 = vmatpush.msra.mxu0 0.0
      %1612 = vmatpush.msra.mxu0 0.0
      %1613 = vmatpush.msra.mxu0 0.0
      %1614 = vmatpush.msra.mxu0 0.0
      %1615 = vmatpush.msra.mxu0 0.0
      %1616 = vmatpush.msra.mxu0 0.0
      %1617 = vmatpush.msra.mxu0 0.0
      %1618 = vmatpush.msra.mxu0 0.0
      %1619 = vmatpush.msra.mxu0 0.0
      %1620 = vmatpush.msra.mxu0 0.0
      %1621 = vmatpush.msra.mxu0 0.0
      %1622 = vmatpush.msra.mxu0 0.0
      %1623 = vmatpush.msra.mxu0 %v1606
      %1624 = vmatmul.f32.gmra.mxu0 %v1066
      %v1625 = vpop.f32.mrf.mxu0
      %v1626 = vadd.f32 0.0, %v1625
      %1627 = vmatmul.f32.gmra.mxu0 %v1069
      %v1628 = vpop.f32.mrf.mxu0
      %v1629 = vadd.f32 0.0, %v1628
      %1630 = vmatmul.f32.gmra.mxu0 %v1071
      %v1631 = vpop.f32.mrf.mxu0
      %v1632 = vadd.f32 0.0, %v1631
      %1633 = vmatmul.f32.gmra.mxu0 %v1074
      %v1634 = vpop.f32.mrf.mxu0
      %v1635 = vadd.f32 0.0, %v1634
      %1636 = vmatmul.f32.gmra.mxu0 %v1076
      %v1637 = vpop.f32.mrf.mxu0
      %v1638 = vadd.f32 0.0, %v1637
      %1639 = vmatmul.f32.gmra.mxu0 %v1079
      %v1640 = vpop.f32.mrf.mxu0
      %v1641 = vadd.f32 0.0, %v1640
      %1642 = vmatmul.f32.gmra.mxu0 %v1081
      %v1643 = vpop.f32.mrf.mxu0
      %v1644 = vadd.f32 0.0, %v1643
      %1645 = vmatmul.f32.gmra.mxu0 %v1084
      %v1646 = vpop.f32.mrf.mxu0
      %v1647 = vadd.f32 0.0, %v1646
      %1648 = vmatmul.f32.gmra.mxu0 %v1086
      %v1649 = vpop.f32.mrf.mxu0
      %v1650 = vadd.f32 0.0, %v1649
      %1651 = vmatmul.f32.gmra.mxu0 %v1089
      %v1652 = vpop.f32.mrf.mxu0
      %v1653 = vadd.f32 0.0, %v1652
      %1654 = vmatmul.f32.gmra.mxu0 %v1091
      %v1655 = vpop.f32.mrf.mxu0
      %v1656 = vadd.f32 0.0, %v1655
      %1657 = vmatmul.f32.gmra.mxu0 %v1094
      %v1658 = vpop.f32.mrf.mxu0
      %v1659 = vadd.f32 0.0, %v1658
      %1660 = vmatmul.f32.gmra.mxu0 %v1096
      %v1661 = vpop.f32.mrf.mxu0
      %v1662 = vadd.f32 0.0, %v1661
      %1663 = vmatmul.f32.gmra.mxu0 %v1099
      %v1664 = vpop.f32.mrf.mxu0
      %v1665 = vadd.f32 0.0, %v1664
      %1666 = vmatmul.f32.gmra.mxu0 %v1101
      %v1667 = vpop.f32.mrf.mxu0
      %v1668 = vadd.f32 0.0, %v1667
      %1669 = vmatmul.f32.gmra.mxu0 %v1104
      %v1670 = vpop.f32.mrf.mxu0
      %v1671 = vadd.f32 0.0, %v1670
      %1672 = vmatmul.f32.gmra.mxu0 %v1106
      %v1673 = vpop.f32.mrf.mxu0
      %v1674 = vadd.f32 0.0, %v1673
      %1675 = vmatmul.f32.gmra.mxu0 %v1109
      %v1676 = vpop.f32.mrf.mxu0
      %v1677 = vadd.f32 0.0, %v1676
      %1678 = vmatmul.f32.gmra.mxu0 %v1111
      %v1679 = vpop.f32.mrf.mxu0
      %v1680 = vadd.f32 0.0, %v1679
      %1681 = vmatmul.f32.gmra.mxu0 %v1114
      %v1682 = vpop.f32.mrf.mxu0
      %v1683 = vadd.f32 0.0, %v1682
      %1684 = vmatmul.f32.gmra.mxu0 %v1116
      %v1685 = vpop.f32.mrf.mxu0
      %v1686 = vadd.f32 0.0, %v1685
      %1687 = vmatmul.f32.gmra.mxu0 %v1119
      %v1688 = vpop.f32.mrf.mxu0
      %v1689 = vadd.f32 0.0, %v1688
      %1690 = vmatmul.f32.gmra.mxu0 %v1121
      %v1691 = vpop.f32.mrf.mxu0
      %v1692 = vadd.f32 0.0, %v1691
      %1693 = vmatmul.f32.gmra.mxu0 %v1124
      %v1694 = vpop.f32.mrf.mxu0
      %v1695 = vadd.f32 0.0, %v1694
      %1696 = vmatmul.f32.gmra.mxu0 %v1126
      %v1697 = vpop.f32.mrf.mxu0
      %v1698 = vadd.f32 0.0, %v1697
      %1699 = vmatmul.f32.gmra.mxu0 %v1129
      %v1700 = vpop.f32.mrf.mxu0
      %v1701 = vadd.f32 0.0, %v1700
      %1702 = vmatmul.f32.gmra.mxu0 %v1131
      %v1703 = vpop.f32.mrf.mxu0
      %v1704 = vadd.f32 0.0, %v1703
      %1705 = vmatmul.f32.gmra.mxu0 %v1134
      %v1706 = vpop.f32.mrf.mxu0
      %v1707 = vadd.f32 0.0, %v1706
      %1708 = vmatmul.f32.gmra.mxu0 %v1136
      %v1709 = vpop.f32.mrf.mxu0
      %v1710 = vadd.f32 0.0, %v1709
      %1711 = vmatmul.f32.gmra.mxu0 %v1139
      %v1712 = vpop.f32.mrf.mxu0
      %v1713 = vadd.f32 0.0, %v1712
      %1714 = vmatmul.f32.gmra.mxu0 %v1600
      %v1715 = vpop.f32.mrf.mxu0
      %v1716 = vadd.f32 0.0, %v1715
      %1717 = vmatmul.f32.gmra.mxu0 %v1603
      %v1718 = vpop.f32.mrf.mxu0
      %v1719 = vadd.f32 0.0, %v1718
      %1720 = vdwg.mxu0
      %v1721 = vadd.f32 %v1566, %v1626
      %v1722 = vadd.f32 %v1567, %v1629
      %v1723 = vadd.f32 %v1568, %v1632
      %v1724 = vadd.f32 %v1569, %v1635
      %v1725 = vadd.f32 %v1570, %v1638
      %v1726 = vadd.f32 %v1571, %v1641
      %v1727 = vadd.f32 %v1572, %v1644
      %v1728 = vadd.f32 %v1573, %v1647
      %v1729 = vadd.f32 %v1574, %v1650
      %v1730 = vadd.f32 %v1575, %v1653
      %v1731 = vadd.f32 %v1576, %v1656
      %v1732 = vadd.f32 %v1577, %v1659
      %v1733 = vadd.f32 %v1578, %v1662
      %v1734 = vadd.f32 %v1579, %v1665
      %v1735 = vadd.f32 %v1580, %v1668
      %v1736 = vadd.f32 %v1581, %v1671
      %v1737 = vadd.f32 %v1582, %v1674
      %v1738 = vadd.f32 %v1583, %v1677
      %v1739 = vadd.f32 %v1584, %v1680
      %v1740 = vadd.f32 %v1585, %v1683
      %v1741 = vadd.f32 %v1586, %v1686
      %v1742 = vadd.f32 %v1587, %v1689
      %v1743 = vadd.f32 %v1588, %v1692
      %v1744 = vadd.f32 %v1589, %v1695
      %v1745 = vadd.f32 %v1590, %v1698
      %v1746 = vadd.f32 %v1591, %v1701
      %v1747 = vadd.f32 %v1592, %v1704
      %v1748 = vadd.f32 %v1593, %v1707
      %v1749 = vadd.f32 %v1594, %v1710
      %v1750 = vadd.f32 %v1595, %v1713
      %v1751 = vadd.f32 %v1596, %v1716
      %v1752 = vadd.f32 %v1597, %v1719
      %s1753 = scalar_lea.vmem %s3, 24
      %v1754 = vld [vmem:[%s1753] sm:$0xf]
      %v1756 = vsel %vm681, %v586, 0
      %v1758 = vsel %vm681, %v550, 0
      %v1761 = vsel %vm746, %v1754, 0
      %1763 = vmatpush.msra.mxu0 0.0
      %1764 = vmatpush.msra.mxu0 0.0
      %1765 = vmatpush.msra.mxu0 0.0
      %1766 = vmatpush.msra.mxu0 0.0
      %1767 = vmatpush.msra.mxu0 0.0
      %1768 = vmatpush.msra.mxu0 0.0
      %1769 = vmatpush.msra.mxu0 0.0
      %1770 = vmatpush.msra.mxu0 0.0
      %1771 = vmatpush.msra.mxu0 0.0
      %1772 = vmatpush.msra.mxu0 0.0
      %1773 = vmatpush.msra.mxu0 0.0
      %1774 = vmatpush.msra.mxu0 0.0
      %1775 = vmatpush.msra.mxu0 0.0
      %1776 = vmatpush.msra.mxu0 0.0
      %1777 = vmatpush.msra.mxu0 0.0
      %1778 = vmatpush.msra.mxu0 %v1761
      %1779 = vmatmul.f32.gmra.mxu0 %v874
      %v1780 = vpop.f32.mrf.mxu0
      %v1781 = vadd.f32 0.0, %v1780
      %1782 = vmatmul.f32.gmra.mxu0 %v876
      %v1783 = vpop.f32.mrf.mxu0
      %v1784 = vadd.f32 0.0, %v1783
      %1785 = vmatmul.f32.gmra.mxu0 %v879
      %v1786 = vpop.f32.mrf.mxu0
      %v1787 = vadd.f32 0.0, %v1786
      %1788 = vmatmul.f32.gmra.mxu0 %v881
      %v1789 = vpop.f32.mrf.mxu0
      %v1790 = vadd.f32 0.0, %v1789
      %1791 = vmatmul.f32.gmra.mxu0 %v884
      %v1792 = vpop.f32.mrf.mxu0
      %v1793 = vadd.f32 0.0, %v1792
      %1794 = vmatmul.f32.gmra.mxu0 %v886
      %v1795 = vpop.f32.mrf.mxu0
      %v1796 = vadd.f32 0.0, %v1795
      %1797 = vmatmul.f32.gmra.mxu0 %v889
      %v1798 = vpop.f32.mrf.mxu0
      %v1799 = vadd.f32 0.0, %v1798
      %1800 = vmatmul.f32.gmra.mxu0 %v891
      %v1801 = vpop.f32.mrf.mxu0
      %v1802 = vadd.f32 0.0, %v1801
      %1803 = vmatmul.f32.gmra.mxu0 %v894
      %v1804 = vpop.f32.mrf.mxu0
      %v1805 = vadd.f32 0.0, %v1804
      %1806 = vmatmul.f32.gmra.mxu0 %v896
      %v1807 = vpop.f32.mrf.mxu0
      %v1808 = vadd.f32 0.0, %v1807
      %1809 = vmatmul.f32.gmra.mxu0 %v899
      %v1810 = vpop.f32.mrf.mxu0
      %v1811 = vadd.f32 0.0, %v1810
      %1812 = vmatmul.f32.gmra.mxu0 %v901
      %v1813 = vpop.f32.mrf.mxu0
      %v1814 = vadd.f32 0.0, %v1813
      %1815 = vmatmul.f32.gmra.mxu0 %v904
      %v1816 = vpop.f32.mrf.mxu0
      %v1817 = vadd.f32 0.0, %v1816
      %1818 = vmatmul.f32.gmra.mxu0 %v906
      %v1819 = vpop.f32.mrf.mxu0
      %v1820 = vadd.f32 0.0, %v1819
      %1821 = vmatmul.f32.gmra.mxu0 %v909
      %v1822 = vpop.f32.mrf.mxu0
      %v1823 = vadd.f32 0.0, %v1822
      %1824 = vmatmul.f32.gmra.mxu0 %v911
      %v1825 = vpop.f32.mrf.mxu0
      %v1826 = vadd.f32 0.0, %v1825
      %1827 = vmatmul.f32.gmra.mxu0 %v914
      %v1828 = vpop.f32.mrf.mxu0
      %v1829 = vadd.f32 0.0, %v1828
      %1830 = vmatmul.f32.gmra.mxu0 %v916
      %v1831 = vpop.f32.mrf.mxu0
      %v1832 = vadd.f32 0.0, %v1831
      %1833 = vmatmul.f32.gmra.mxu0 %v919
      %v1834 = vpop.f32.mrf.mxu0
      %v1835 = vadd.f32 0.0, %v1834
      %1836 = vmatmul.f32.gmra.mxu0 %v921
      %v1837 = vpop.f32.mrf.mxu0
      %v1838 = vadd.f32 0.0, %v1837
      %1839 = vmatmul.f32.gmra.mxu0 %v924
      %v1840 = vpop.f32.mrf.mxu0
      %v1841 = vadd.f32 0.0, %v1840
      %1842 = vmatmul.f32.gmra.mxu0 %v926
      %v1843 = vpop.f32.mrf.mxu0
      %v1844 = vadd.f32 0.0, %v1843
      %1845 = vmatmul.f32.gmra.mxu0 %v929
      %v1846 = vpop.f32.mrf.mxu0
      %v1847 = vadd.f32 0.0, %v1846
      %1848 = vmatmul.f32.gmra.mxu0 %v931
      %v1849 = vpop.f32.mrf.mxu0
      %v1850 = vadd.f32 0.0, %v1849
      %1851 = vmatmul.f32.gmra.mxu0 %v934
      %v1852 = vpop.f32.mrf.mxu0
      %v1853 = vadd.f32 0.0, %v1852
      %1854 = vmatmul.f32.gmra.mxu0 %v936
      %v1855 = vpop.f32.mrf.mxu0
      %v1856 = vadd.f32 0.0, %v1855
      %1857 = vmatmul.f32.gmra.mxu0 %v939
      %v1858 = vpop.f32.mrf.mxu0
      %v1859 = vadd.f32 0.0, %v1858
      %1860 = vmatmul.f32.gmra.mxu0 %v941
      %v1861 = vpop.f32.mrf.mxu0
      %v1862 = vadd.f32 0.0, %v1861
      %1863 = vmatmul.f32.gmra.mxu0 %v1292
      %v1864 = vpop.f32.mrf.mxu0
      %v1865 = vadd.f32 0.0, %v1864
      %1866 = vmatmul.f32.gmra.mxu0 %v1294
      %v1867 = vpop.f32.mrf.mxu0
      %v1868 = vadd.f32 0.0, %v1867
      %1869 = vmatmul.f32.gmra.mxu0 %v1756
      %v1870 = vpop.f32.mrf.mxu0
      %v1871 = vadd.f32 0.0, %v1870
      %1872 = vmatmul.f32.gmra.mxu0 %v1758
      %v1873 = vpop.f32.mrf.mxu0
      %v1874 = vadd.f32 0.0, %v1873
      %1875 = vdwg.mxu0
      %v1876 = vadd.f32 %v1721, %v1781
      %v1877 = vadd.f32 %v1722, %v1784
      %v1878 = vadd.f32 %v1723, %v1787
      %v1879 = vadd.f32 %v1724, %v1790
      %v1880 = vadd.f32 %v1725, %v1793
      %v1881 = vadd.f32 %v1726, %v1796
      %v1882 = vadd.f32 %v1727, %v1799
      %v1883 = vadd.f32 %v1728, %v1802
      %v1884 = vadd.f32 %v1729, %v1805
      %v1885 = vadd.f32 %v1730, %v1808
      %v1886 = vadd.f32 %v1731, %v1811
      %v1887 = vadd.f32 %v1732, %v1814
      %v1888 = vadd.f32 %v1733, %v1817
      %v1889 = vadd.f32 %v1734, %v1820
      %v1890 = vadd.f32 %v1735, %v1823
      %v1891 = vadd.f32 %v1736, %v1826
      %v1892 = vadd.f32 %v1737, %v1829
      %v1893 = vadd.f32 %v1738, %v1832
      %v1894 = vadd.f32 %v1739, %v1835
      %v1895 = vadd.f32 %v1740, %v1838
      %v1896 = vadd.f32 %v1741, %v1841
      %v1897 = vadd.f32 %v1742, %v1844
      %v1898 = vadd.f32 %v1743, %v1847
      %v1899 = vadd.f32 %v1744, %v1850
      %v1900 = vadd.f32 %v1745, %v1853
      %v1901 = vadd.f32 %v1746, %v1856
      %v1902 = vadd.f32 %v1747, %v1859
      %v1903 = vadd.f32 %v1748, %v1862
      %v1904 = vadd.f32 %v1749, %v1865
      %v1905 = vadd.f32 %v1750, %v1868
      %v1906 = vadd.f32 %v1751, %v1871
      %v1907 = vadd.f32 %v1752, %v1874
      %s1908 = scalar_lea.vmem %s3, 28
      %v1909 = vld [vmem:[%s1908] sm:$0xf]
      %v1910 = vsel %vm681, %v458, 0
      %v1912 = vsel %vm681, %v459, 0
      %v1915 = vsel %vm746, %v1909, 0
      %1917 = vmatpush.msra.mxu0 0.0
      %1918 = vmatpush.msra.mxu0 0.0
      %1919 = vmatpush.msra.mxu0 0.0
      %1920 = vmatpush.msra.mxu0 0.0
      %1921 = vmatpush.msra.mxu0 0.0
      %1922 = vmatpush.msra.mxu0 0.0
      %1923 = vmatpush.msra.mxu0 0.0
      %1924 = vmatpush.msra.mxu0 0.0
      %1925 = vmatpush.msra.mxu0 0.0
      %1926 = vmatpush.msra.mxu0 0.0
      %1927 = vmatpush.msra.mxu0 0.0
      %1928 = vmatpush.msra.mxu0 0.0
      %1929 = vmatpush.msra.mxu0 0.0
      %1930 = vmatpush.msra.mxu0 0.0
      %1931 = vmatpush.msra.mxu0 0.0
      %1932 = vmatpush.msra.mxu0 %v1915
      %1933 = vmatmul.f32.gmra.mxu0 %v690
      %v1934 = vpop.f32.mrf.mxu0
      %v1935 = vadd.f32 0.0, %v1934
      %1936 = vmatmul.f32.gmra.mxu0 %v692
      %v1937 = vpop.f32.mrf.mxu0
      %v1938 = vadd.f32 0.0, %v1937
      %1939 = vmatmul.f32.gmra.mxu0 %v694
      %v1940 = vpop.f32.mrf.mxu0
      %v1941 = vadd.f32 0.0, %v1940
      %1942 = vmatmul.f32.gmra.mxu0 %v696
      %v1943 = vpop.f32.mrf.mxu0
      %v1944 = vadd.f32 0.0, %v1943
      %1945 = vmatmul.f32.gmra.mxu0 %v698
      %v1946 = vpop.f32.mrf.mxu0
      %v1947 = vadd.f32 0.0, %v1946
      %1948 = vmatmul.f32.gmra.mxu0 %v700
      %v1949 = vpop.f32.mrf.mxu0
      %v1950 = vadd.f32 0.0, %v1949
      %1951 = vmatmul.f32.gmra.mxu0 %v702
      %v1952 = vpop.f32.mrf.mxu0
      %v1953 = vadd.f32 0.0, %v1952
      %1954 = vmatmul.f32.gmra.mxu0 %v704
      %v1955 = vpop.f32.mrf.mxu0
      %v1956 = vadd.f32 0.0, %v1955
      %1957 = vmatmul.f32.gmra.mxu0 %v706
      %v1958 = vpop.f32.mrf.mxu0
      %v1959 = vadd.f32 0.0, %v1958
      %1960 = vmatmul.f32.gmra.mxu0 %v708
      %v1961 = vpop.f32.mrf.mxu0
      %v1962 = vadd.f32 0.0, %v1961
      %1963 = vmatmul.f32.gmra.mxu0 %v710
      %v1964 = vpop.f32.mrf.mxu0
      %v1965 = vadd.f32 0.0, %v1964
      %1966 = vmatmul.f32.gmra.mxu0 %v712
      %v1967 = vpop.f32.mrf.mxu0
      %v1968 = vadd.f32 0.0, %v1967
      %1969 = vmatmul.f32.gmra.mxu0 %v714
      %v1970 = vpop.f32.mrf.mxu0
      %v1971 = vadd.f32 0.0, %v1970
      %1972 = vmatmul.f32.gmra.mxu0 %v716
      %v1973 = vpop.f32.mrf.mxu0
      %v1974 = vadd.f32 0.0, %v1973
      %1975 = vmatmul.f32.gmra.mxu0 %v718
      %v1976 = vpop.f32.mrf.mxu0
      %v1977 = vadd.f32 0.0, %v1976
      %1978 = vmatmul.f32.gmra.mxu0 %v720
      %v1979 = vpop.f32.mrf.mxu0
      %v1980 = vadd.f32 0.0, %v1979
      %1981 = vmatmul.f32.gmra.mxu0 %v722
      %v1982 = vpop.f32.mrf.mxu0
      %v1983 = vadd.f32 0.0, %v1982
      %1984 = vmatmul.f32.gmra.mxu0 %v724
      %v1985 = vpop.f32.mrf.mxu0
      %v1986 = vadd.f32 0.0, %v1985
      %1987 = vmatmul.f32.gmra.mxu0 %v726
      %v1988 = vpop.f32.mrf.mxu0
      %v1989 = vadd.f32 0.0, %v1988
      %1990 = vmatmul.f32.gmra.mxu0 %v728
      %v1991 = vpop.f32.mrf.mxu0
      %v1992 = vadd.f32 0.0, %v1991
      %1993 = vmatmul.f32.gmra.mxu0 %v730
      %v1994 = vpop.f32.mrf.mxu0
      %v1995 = vadd.f32 0.0, %v1994
      %1996 = vmatmul.f32.gmra.mxu0 %v732
      %v1997 = vpop.f32.mrf.mxu0
      %v1998 = vadd.f32 0.0, %v1997
      %1999 = vmatmul.f32.gmra.mxu0 %v734
      %v2000 = vpop.f32.mrf.mxu0
      %v2001 = vadd.f32 0.0, %v2000
      %2002 = vmatmul.f32.gmra.mxu0 %v736
      %v2003 = vpop.f32.mrf.mxu0
      %v2004 = vadd.f32 0.0, %v2003
      %2005 = vmatmul.f32.gmra.mxu0 %v738
      %v2006 = vpop.f32.mrf.mxu0
      %v2007 = vadd.f32 0.0, %v2006
      %2008 = vmatmul.f32.gmra.mxu0 %v740
      %v2009 = vpop.f32.mrf.mxu0
      %v2010 = vadd.f32 0.0, %v2009
      %2011 = vmatmul.f32.gmra.mxu0 %v742
      %v2012 = vpop.f32.mrf.mxu0
      %v2013 = vadd.f32 0.0, %v2012
      %2014 = vmatmul.f32.gmra.mxu0 %v744
      %v2015 = vpop.f32.mrf.mxu0
      %v2016 = vadd.f32 0.0, %v2015
      %2017 = vmatmul.f32.gmra.mxu0 %v1446
      %v2018 = vpop.f32.mrf.mxu0
      %v2019 = vadd.f32 0.0, %v2018
      %2020 = vmatmul.f32.gmra.mxu0 %v1448
      %v2021 = vpop.f32.mrf.mxu0
      %v2022 = vadd.f32 0.0, %v2021
      %2023 = vmatmul.f32.gmra.mxu0 %v1910
      %v2024 = vpop.f32.mrf.mxu0
      %v2025 = vadd.f32 0.0, %v2024
      %2026 = vmatmul.f32.gmra.mxu0 %v1912
      %v2027 = vpop.f32.mrf.mxu0
      %v2028 = vadd.f32 0.0, %v2027
      %2029 = vdwg.mxu0
      %v2030 = vadd.f32 %v1876, %v1935
      %v2031 = vadd.f32 %v1877, %v1938
      %v2032 = vadd.f32 %v1878, %v1941
      %v2033 = vadd.f32 %v1879, %v1944
      %v2034 = vadd.f32 %v1880, %v1947
      %v2035 = vadd.f32 %v1881, %v1950
      %v2036 = vadd.f32 %v1882, %v1953
      %v2037 = vadd.f32 %v1883, %v1956
      %v2038 = vadd.f32 %v1884, %v1959
      %v2039 = vadd.f32 %v1885, %v1962
      %v2040 = vadd.f32 %v1886, %v1965
      %v2041 = vadd.f32 %v1887, %v1968
      %v2042 = vadd.f32 %v1888, %v1971
      %v2043 = vadd.f32 %v1889, %v1974
      %v2044 = vadd.f32 %v1890, %v1977
      %v2045 = vadd.f32 %v1891, %v1980
      %v2046 = vadd.f32 %v1892, %v1983
      %v2047 = vadd.f32 %v1893, %v1986
      %v2048 = vadd.f32 %v1894, %v1989
      %v2049 = vadd.f32 %v1895, %v1992
      %v2050 = vadd.f32 %v1896, %v1995
      %v2051 = vadd.f32 %v1897, %v1998
      %v2052 = vadd.f32 %v1898, %v2001
      %v2053 = vadd.f32 %v1899, %v2004
      %v2054 = vadd.f32 %v1900, %v2007
      %v2055 = vadd.f32 %v1901, %v2010
      %v2056 = vadd.f32 %v1902, %v2013
      %v2057 = vadd.f32 %v1903, %v2016
      %v2058 = vadd.f32 %v1904, %v2019
      %v2059 = vadd.f32 %v1905, %v2022
      %v2060 = vadd.f32 %v1906, %v2025
      %v2061 = vadd.f32 %v1907, %v2028
      %s2062 = scalar_lea.vmem %s3, 32
      %v2063 = vld [vmem:[%s2062] sm:$0xf]
      %v2064 = vsel %vm681, %v641, 0
      %v2067 = vsel %vm681, %v677, 0
      %v2070 = vsel %vm746, %v2063, 0
      %2072 = vmatpush.msra.mxu0 0.0
      %2073 = vmatpush.msra.mxu0 0.0
      %2074 = vmatpush.msra.mxu0 0.0
      %2075 = vmatpush.msra.mxu0 0.0
      %2076 = vmatpush.msra.mxu0 0.0
      %2077 = vmatpush.msra.mxu0 0.0
      %2078 = vmatpush.msra.mxu0 0.0
      %2079 = vmatpush.msra.mxu0 0.0
      %2080 = vmatpush.msra.mxu0 0.0
      %2081 = vmatpush.msra.mxu0 0.0
      %2082 = vmatpush.msra.mxu0 0.0
      %2083 = vmatpush.msra.mxu0 0.0
      %2084 = vmatpush.msra.mxu0 0.0
      %2085 = vmatpush.msra.mxu0 0.0
      %2086 = vmatpush.msra.mxu0 0.0
      %2087 = vmatpush.msra.mxu0 %v2070
      %2088 = vmatmul.f32.gmra.mxu0 %v1071
      %v2089 = vpop.f32.mrf.mxu0
      %v2090 = vadd.f32 0.0, %v2089
      %2091 = vmatmul.f32.gmra.mxu0 %v1074
      %v2092 = vpop.f32.mrf.mxu0
      %v2093 = vadd.f32 0.0, %v2092
      %2094 = vmatmul.f32.gmra.mxu0 %v1076
      %v2095 = vpop.f32.mrf.mxu0
      %v2096 = vadd.f32 0.0, %v2095
      %2097 = vmatmul.f32.gmra.mxu0 %v1079
      %v2098 = vpop.f32.mrf.mxu0
      %v2099 = vadd.f32 0.0, %v2098
      %2100 = vmatmul.f32.gmra.mxu0 %v1081
      %v2101 = vpop.f32.mrf.mxu0
      %v2102 = vadd.f32 0.0, %v2101
      %2103 = vmatmul.f32.gmra.mxu0 %v1084
      %v2104 = vpop.f32.mrf.mxu0
      %v2105 = vadd.f32 0.0, %v2104
      %2106 = vmatmul.f32.gmra.mxu0 %v1086
      %v2107 = vpop.f32.mrf.mxu0
      %v2108 = vadd.f32 0.0, %v2107
      %2109 = vmatmul.f32.gmra.mxu0 %v1089
      %v2110 = vpop.f32.mrf.mxu0
      %v2111 = vadd.f32 0.0, %v2110
      %2112 = vmatmul.f32.gmra.mxu0 %v1091
      %v2113 = vpop.f32.mrf.mxu0
      %v2114 = vadd.f32 0.0, %v2113
      %2115 = vmatmul.f32.gmra.mxu0 %v1094
      %v2116 = vpop.f32.mrf.mxu0
      %v2117 = vadd.f32 0.0, %v2116
      %2118 = vmatmul.f32.gmra.mxu0 %v1096
      %v2119 = vpop.f32.mrf.mxu0
      %v2120 = vadd.f32 0.0, %v2119
      %2121 = vmatmul.f32.gmra.mxu0 %v1099
      %v2122 = vpop.f32.mrf.mxu0
      %v2123 = vadd.f32 0.0, %v2122
      %2124 = vmatmul.f32.gmra.mxu0 %v1101
      %v2125 = vpop.f32.mrf.mxu0
      %v2126 = vadd.f32 0.0, %v2125
      %2127 = vmatmul.f32.gmra.mxu0 %v1104
      %v2128 = vpop.f32.mrf.mxu0
      %v2129 = vadd.f32 0.0, %v2128
      %2130 = vmatmul.f32.gmra.mxu0 %v1106
      %v2131 = vpop.f32.mrf.mxu0
      %v2132 = vadd.f32 0.0, %v2131
      %2133 = vmatmul.f32.gmra.mxu0 %v1109
      %v2134 = vpop.f32.mrf.mxu0
      %v2135 = vadd.f32 0.0, %v2134
      %2136 = vmatmul.f32.gmra.mxu0 %v1111
      %v2137 = vpop.f32.mrf.mxu0
      %v2138 = vadd.f32 0.0, %v2137
      %2139 = vmatmul.f32.gmra.mxu0 %v1114
      %v2140 = vpop.f32.mrf.mxu0
      %v2141 = vadd.f32 0.0, %v2140
      %2142 = vmatmul.f32.gmra.mxu0 %v1116
      %v2143 = vpop.f32.mrf.mxu0
      %v2144 = vadd.f32 0.0, %v2143
      %2145 = vmatmul.f32.gmra.mxu0 %v1119
      %v2146 = vpop.f32.mrf.mxu0
      %v2147 = vadd.f32 0.0, %v2146
      %2148 = vmatmul.f32.gmra.mxu0 %v1121
      %v2149 = vpop.f32.mrf.mxu0
      %v2150 = vadd.f32 0.0, %v2149
      %2151 = vmatmul.f32.gmra.mxu0 %v1124
      %v2152 = vpop.f32.mrf.mxu0
      %v2153 = vadd.f32 0.0, %v2152
      %2154 = vmatmul.f32.gmra.mxu0 %v1126
      %v2155 = vpop.f32.mrf.mxu0
      %v2156 = vadd.f32 0.0, %v2155
      %2157 = vmatmul.f32.gmra.mxu0 %v1129
      %v2158 = vpop.f32.mrf.mxu0
      %v2159 = vadd.f32 0.0, %v2158
      %2160 = vmatmul.f32.gmra.mxu0 %v1131
      %v2161 = vpop.f32.mrf.mxu0
      %v2162 = vadd.f32 0.0, %v2161
      %2163 = vmatmul.f32.gmra.mxu0 %v1134
      %v2164 = vpop.f32.mrf.mxu0
      %v2165 = vadd.f32 0.0, %v2164
      %2166 = vmatmul.f32.gmra.mxu0 %v1136
      %v2167 = vpop.f32.mrf.mxu0
      %v2168 = vadd.f32 0.0, %v2167
      %2169 = vmatmul.f32.gmra.mxu0 %v1139
      %v2170 = vpop.f32.mrf.mxu0
      %v2171 = vadd.f32 0.0, %v2170
      %2172 = vmatmul.f32.gmra.mxu0 %v1600
      %v2173 = vpop.f32.mrf.mxu0
      %v2174 = vadd.f32 0.0, %v2173
      %2175 = vmatmul.f32.gmra.mxu0 %v1603
      %v2176 = vpop.f32.mrf.mxu0
      %v2177 = vadd.f32 0.0, %v2176
      %2178 = vmatmul.f32.gmra.mxu0 %v2064
      %v2179 = vpop.f32.mrf.mxu0
      %v2180 = vadd.f32 0.0, %v2179
      %2181 = vmatmul.f32.gmra.mxu0 %v2067
      %v2182 = vpop.f32.mrf.mxu0
      %v2183 = vadd.f32 0.0, %v2182
      %2184 = vdwg.mxu0
      %v2185 = vadd.f32 %v2030, %v2090
      %v2186 = vadd.f32 %v2031, %v2093
      %v2187 = vadd.f32 %v2032, %v2096
      %v2188 = vadd.f32 %v2033, %v2099
      %v2189 = vadd.f32 %v2034, %v2102
      %v2190 = vadd.f32 %v2035, %v2105
      %v2191 = vadd.f32 %v2036, %v2108
      %v2192 = vadd.f32 %v2037, %v2111
      %v2193 = vadd.f32 %v2038, %v2114
      %v2194 = vadd.f32 %v2039, %v2117
      %v2195 = vadd.f32 %v2040, %v2120
      %v2196 = vadd.f32 %v2041, %v2123
      %v2197 = vadd.f32 %v2042, %v2126
      %v2198 = vadd.f32 %v2043, %v2129
      %v2199 = vadd.f32 %v2044, %v2132
      %v2200 = vadd.f32 %v2045, %v2135
      %v2201 = vadd.f32 %v2046, %v2138
      %v2202 = vadd.f32 %v2047, %v2141
      %v2203 = vadd.f32 %v2048, %v2144
      %v2204 = vadd.f32 %v2049, %v2147
      %v2205 = vadd.f32 %v2050, %v2150
      %v2206 = vadd.f32 %v2051, %v2153
      %v2207 = vadd.f32 %v2052, %v2156
      %v2208 = vadd.f32 %v2053, %v2159
      %v2209 = vadd.f32 %v2054, %v2162
      %v2210 = vadd.f32 %v2055, %v2165
      %v2211 = vadd.f32 %v2056, %v2168
      %v2212 = vadd.f32 %v2057, %v2171
      %v2213 = vadd.f32 %v2058, %v2174
      %v2214 = vadd.f32 %v2059, %v2177
      %v2215 = vadd.f32 %v2060, %v2180
      %v2216 = vadd.f32 %v2061, %v2183
      %vm2217 = vcmask 64512
      %v2218 = vsel %vm2217, %v2185, 0.0
      %v2219 = vsel %vm2217, %v2186, 0.0
      %v2220 = vadd.f32 %v2218, %v2219
      %v2221 = vsel %vm2217, %v2187, 0.0
      %v2222 = vadd.f32 %v2220, %v2221
      %v2223 = vsel %vm2217, %v2188, 0.0
      %v2224 = vadd.f32 %v2222, %v2223
      %v2225 = vsel %vm2217, %v2189, 0.0
      %v2226 = vadd.f32 %v2224, %v2225
      %v2227 = vsel %vm2217, %v2190, 0.0
      %v2228 = vadd.f32 %v2226, %v2227
      %v2229 = vsel %vm2217, %v2191, 0.0
      %v2230 = vadd.f32 %v2228, %v2229
      %v2231 = vsel %vm2217, %v2192, 0.0
      %v2232 = vadd.f32 %v2230, %v2231
      %v2233 = vsel %vm2217, %v2193, 0.0
      %v2234 = vadd.f32 %v2232, %v2233
      %v2235 = vsel %vm2217, %v2194, 0.0
      %v2236 = vadd.f32 %v2234, %v2235
      %v2237 = vsel %vm2217, %v2195, 0.0
      %v2238 = vadd.f32 %v2236, %v2237
      %v2239 = vsel %vm2217, %v2196, 0.0
      %v2240 = vadd.f32 %v2238, %v2239
      %v2241 = vsel %vm2217, %v2197, 0.0
      %v2242 = vadd.f32 %v2240, %v2241
      %v2243 = vsel %vm2217, %v2198, 0.0
      %v2244 = vadd.f32 %v2242, %v2243
      %v2245 = vsel %vm2217, %v2199, 0.0
      %v2246 = vadd.f32 %v2244, %v2245
      %v2247 = vsel %vm2217, %v2200, 0.0
      %v2248 = vadd.f32 %v2246, %v2247
      %v2249 = vsel %vm2217, %v2201, 0.0
      %v2250 = vadd.f32 %v2248, %v2249
      %v2251 = vsel %vm2217, %v2202, 0.0
      %v2252 = vadd.f32 %v2250, %v2251
      %v2253 = vsel %vm2217, %v2203, 0.0
      %v2254 = vadd.f32 %v2252, %v2253
      %v2255 = vsel %vm2217, %v2204, 0.0
      %v2256 = vadd.f32 %v2254, %v2255
      %v2257 = vsel %vm2217, %v2205, 0.0
      %v2258 = vadd.f32 %v2256, %v2257
      %v2259 = vsel %vm2217, %v2206, 0.0
      %v2260 = vadd.f32 %v2258, %v2259
      %v2261 = vsel %vm2217, %v2207, 0.0
      %v2262 = vadd.f32 %v2260, %v2261
      %v2263 = vsel %vm2217, %v2208, 0.0
      %v2264 = vadd.f32 %v2262, %v2263
      %v2265 = vsel %vm2217, %v2209, 0.0
      %v2266 = vadd.f32 %v2264, %v2265
      %v2267 = vsel %vm2217, %v2210, 0.0
      %v2268 = vadd.f32 %v2266, %v2267
      %v2269 = vsel %vm2217, %v2211, 0.0
      %v2270 = vadd.f32 %v2268, %v2269
      %v2271 = vsel %vm2217, %v2212, 0.0
      %v2272 = vadd.f32 %v2270, %v2271
      %v2273 = vsel %vm2217, %v2213, 0.0
      %v2274 = vadd.f32 %v2272, %v2273
      %v2275 = vsel %vm2217, %v2214, 0.0
      %v2276 = vadd.f32 %v2274, %v2275
      %v2277 = vsel %vm2217, %v2215, 0.0
      %v2278 = vadd.f32 %v2276, %v2277
      %v2279 = vsel %vm2217, %v2216, 0.0
      %v2280 = vadd.f32 %v2278, %v2279
      %v2281 = vrot.slane %v2280, 4
      %v2282 = vadd.f32 %v2280, %v2281
      %v2283 = vrot.slane %v2282, 2
      %v2284 = vadd.f32 %v2282, %v2283
      %v2285 = vrot.slane %v2284, 1
      %v2286 = vadd.f32 %v2284, %v2285
      %vm2287 = vcmask 57344
      %2288 = vst.msk [vmem:[%s411] sm:$0x1] %vm2287, %v2286
      %v2289 = vmul.f32 %v2185, %v2185
      %v2290 = vmul.f32 %v2186, %v2186
      %v2291 = vmul.f32 %v2187, %v2187
      %v2292 = vmul.f32 %v2188, %v2188
      %v2293 = vmul.f32 %v2189, %v2189
      %v2294 = vmul.f32 %v2190, %v2190
      %v2295 = vmul.f32 %v2191, %v2191
      %v2296 = vmul.f32 %v2192, %v2192
      %v2297 = vmul.f32 %v2193, %v2193
      %v2298 = vmul.f32 %v2194, %v2194
      %v2299 = vmul.f32 %v2195, %v2195
      %v2300 = vmul.f32 %v2196, %v2196
      %v2301 = vmul.f32 %v2197, %v2197
      %v2302 = vmul.f32 %v2198, %v2198
      %v2303 = vmul.f32 %v2199, %v2199
      %v2304 = vmul.f32 %v2200, %v2200
      %v2305 = vmul.f32 %v2201, %v2201
      %v2306 = vmul.f32 %v2202, %v2202
      %v2307 = vmul.f32 %v2203, %v2203
      %v2308 = vmul.f32 %v2204, %v2204
      %v2309 = vmul.f32 %v2205, %v2205
      %v2310 = vmul.f32 %v2206, %v2206
      %v2311 = vmul.f32 %v2207, %v2207
      %v2312 = vmul.f32 %v2208, %v2208
      %v2313 = vmul.f32 %v2209, %v2209
      %v2314 = vmul.f32 %v2210, %v2210
      %v2315 = vmul.f32 %v2211, %v2211
      %v2316 = vmul.f32 %v2212, %v2212
      %v2317 = vmul.f32 %v2213, %v2213
      %v2318 = vmul.f32 %v2214, %v2214
      %v2319 = vmul.f32 %v2215, %v2215
      %v2320 = vmul.f32 %v2216, %v2216
      %v2321 = vsel %vm2217, %v2289, 0.0
      %v2322 = vsel %vm2217, %v2290, 0.0
      %v2323 = vadd.f32 %v2321, %v2322
      %v2324 = vsel %vm2217, %v2291, 0.0
      %v2325 = vadd.f32 %v2323, %v2324
      %v2326 = vsel %vm2217, %v2292, 0.0
      %v2327 = vadd.f32 %v2325, %v2326
      %v2328 = vsel %vm2217, %v2293, 0.0
      %v2329 = vadd.f32 %v2327, %v2328
      %v2330 = vsel %vm2217, %v2294, 0.0
      %v2331 = vadd.f32 %v2329, %v2330
      %v2332 = vsel %vm2217, %v2295, 0.0
      %v2333 = vadd.f32 %v2331, %v2332
      %v2334 = vsel %vm2217, %v2296, 0.0
      %v2335 = vadd.f32 %v2333, %v2334
      %v2336 = vsel %vm2217, %v2297, 0.0
      %v2337 = vadd.f32 %v2335, %v2336
      %v2338 = vsel %vm2217, %v2298, 0.0
      %v2339 = vadd.f32 %v2337, %v2338
      %v2340 = vsel %vm2217, %v2299, 0.0
      %v2341 = vadd.f32 %v2339, %v2340
      %v2342 = vsel %vm2217, %v2300, 0.0
      %v2343 = vadd.f32 %v2341, %v2342
      %v2344 = vsel %vm2217, %v2301, 0.0
      %v2345 = vadd.f32 %v2343, %v2344
      %v2346 = vsel %vm2217, %v2302, 0.0
      %v2347 = vadd.f32 %v2345, %v2346
      %v2348 = vsel %vm2217, %v2303, 0.0
      %v2349 = vadd.f32 %v2347, %v2348
      %v2350 = vsel %vm2217, %v2304, 0.0
      %v2351 = vadd.f32 %v2349, %v2350
      %v2352 = vsel %vm2217, %v2305, 0.0
      %v2353 = vadd.f32 %v2351, %v2352
      %v2354 = vsel %vm2217, %v2306, 0.0
      %v2355 = vadd.f32 %v2353, %v2354
      %v2356 = vsel %vm2217, %v2307, 0.0
      %v2357 = vadd.f32 %v2355, %v2356
      %v2358 = vsel %vm2217, %v2308, 0.0
      %v2359 = vadd.f32 %v2357, %v2358
      %v2360 = vsel %vm2217, %v2309, 0.0
      %v2361 = vadd.f32 %v2359, %v2360
      %v2362 = vsel %vm2217, %v2310, 0.0
      %v2363 = vadd.f32 %v2361, %v2362
      %v2364 = vsel %vm2217, %v2311, 0.0
      %v2365 = vadd.f32 %v2363, %v2364
      %v2366 = vsel %vm2217, %v2312, 0.0
      %v2367 = vadd.f32 %v2365, %v2366
      %v2368 = vsel %vm2217, %v2313, 0.0
      %v2369 = vadd.f32 %v2367, %v2368
      %v2370 = vsel %vm2217, %v2314, 0.0
      %v2371 = vadd.f32 %v2369, %v2370
      %v2372 = vsel %vm2217, %v2315, 0.0
      %v2373 = vadd.f32 %v2371, %v2372
      %v2374 = vsel %vm2217, %v2316, 0.0
      %v2375 = vadd.f32 %v2373, %v2374
      %v2376 = vsel %vm2217, %v2317, 0.0
      %v2377 = vadd.f32 %v2375, %v2376
      %v2378 = vsel %vm2217, %v2318, 0.0
      %v2379 = vadd.f32 %v2377, %v2378
      %v2380 = vsel %vm2217, %v2319, 0.0
      %v2381 = vadd.f32 %v2379, %v2380
      %v2382 = vsel %vm2217, %v2320, 0.0
      %v2383 = vadd.f32 %v2381, %v2382
      %v2384 = vrot.slane %v2383, 4
      %v2385 = vadd.f32 %v2383, %v2384
      %v2386 = vrot.slane %v2385, 2
      %v2387 = vadd.f32 %v2385, %v2386
      %v2388 = vrot.slane %v2387, 1
      %v2389 = vadd.f32 %v2387, %v2388
      %2390 = vst.msk [vmem:[%s411 + $0x1] sm:$0x1] %vm2287, %v2389
      %2391 = vst.msk [vmem:[%s403] sm:$0xff] %vm2217, %v2185
      %2392 = vst.msk [vmem:[%s403 + $0x8] sm:$0xff] %vm2217, %v2186
      %2393 = vst.msk [vmem:[%s403 + $0x10] sm:$0xff] %vm2217, %v2187
      %2394 = vst.msk [vmem:[%s403 + $0x18] sm:$0xff] %vm2217, %v2188
      %2395 = vst.msk [vmem:[%s403 + $0x20] sm:$0xff] %vm2217, %v2189
      %2396 = vst.msk [vmem:[%s403 + $0x28] sm:$0xff] %vm2217, %v2190
      %2397 = vst.msk [vmem:[%s403 + $0x30] sm:$0xff] %vm2217, %v2191
      %2398 = vst.msk [vmem:[%s403 + $0x38] sm:$0xff] %vm2217, %v2192
      %2399 = vst.msk [vmem:[%s403 + $0x40] sm:$0xff] %vm2217, %v2193
      %2400 = vst.msk [vmem:[%s403 + $0x48] sm:$0xff] %vm2217, %v2194
      %2401 = vst.msk [vmem:[%s403 + $0x50] sm:$0xff] %vm2217, %v2195
      %2402 = vst.msk [vmem:[%s403 + $0x58] sm:$0xff] %vm2217, %v2196
      %2403 = vst.msk [vmem:[%s403 + $0x60] sm:$0xff] %vm2217, %v2197
      %2404 = vst.msk [vmem:[%s403 + $0x68] sm:$0xff] %vm2217, %v2198
      %2405 = vst.msk [vmem:[%s403 + $0x70] sm:$0xff] %vm2217, %v2199
      %2406 = vst.msk [vmem:[%s403 + $0x78] sm:$0xff] %vm2217, %v2200
      %2407 = vst.msk [vmem:[%s403 + $0x80] sm:$0xff] %vm2217, %v2201
      %2408 = vst.msk [vmem:[%s403 + $0x88] sm:$0xff] %vm2217, %v2202
      %2409 = vst.msk [vmem:[%s403 + $0x90] sm:$0xff] %vm2217, %v2203
      %2410 = vst.msk [vmem:[%s403 + $0x98] sm:$0xff] %vm2217, %v2204
      %2411 = vst.msk [vmem:[%s403 + $0xa0] sm:$0xff] %vm2217, %v2205
      %2412 = vst.msk [vmem:[%s403 + $0xa8] sm:$0xff] %vm2217, %v2206
      %2413 = vst.msk [vmem:[%s403 + $0xb0] sm:$0xff] %vm2217, %v2207
      %2414 = vst.msk [vmem:[%s403 + $0xb8] sm:$0xff] %vm2217, %v2208
      %2415 = vst.msk [vmem:[%s403 + $0xc0] sm:$0xff] %vm2217, %v2209
      %2416 = vst.msk [vmem:[%s403 + $0xc8] sm:$0xff] %vm2217, %v2210
      %2417 = vst.msk [vmem:[%s403 + $0xd0] sm:$0xff] %vm2217, %v2211
      %2418 = vst.msk [vmem:[%s403 + $0xd8] sm:$0xff] %vm2217, %v2212
      %2419 = vst.msk [vmem:[%s403 + $0xe0] sm:$0xff] %vm2217, %v2213
      %2420 = vst.msk [vmem:[%s403 + $0xe8] sm:$0xff] %vm2217, %v2214
      %2421 = vst.msk [vmem:[%s403 + $0xf0] sm:$0xff] %vm2217, %v2215
      %2422 = vst.msk [vmem:[%s403 + $0xf8] sm:$0xff] %vm2217, %v2216
      %s2423 = smul.u32 16, %s22
      %p2424 = scmp.lt.s32.totalorder %s21, 1
      %s2425 = scalar_select %p2424, %s21, 1
      %p2426 = scmp.lt.s32.totalorder %s2423, 15
      %s2427 = scalar_select %p2426, %s2423, 15
      %s2428 = smul.addr %s2427, 2
      %s2429 = smul.addr %s2425, 32
      %s2430 = sadd.s32 %s2428, %s2429
      %s2431 = smul.addr %s2430, 8
      %s2432 = scalar_lea.vmem %s4, %s2431
      %p2433 = scmp.lt.s32.totalorder %s21, 1
      %s2434 = scalar_select %p2433, %s21, 1
      %p2435 = scmp.lt.s32.totalorder %s22, 0
      %s2436 = scalar_select %p2435, %s22, 0
      %s2437 = sadd.s32 %s2436, %s2434
      %s2438 = smul.addr %s2437, 2
      %s2439 = scalar_lea.vmem %s5, %s2438
      // Predicated region
      $region37: #{unet_conv_block.3} parent=35 // pred_check
        %p2440 = pneg %p170
      $region38: #{unet_conv_block.3} parent=35 // pred_check_branch
        %2442 = sbr.rel (%p2440) target = $region40
      $region39: #{unet_conv_block.3} parent=35 // pred_region
        %s2443 = smul.u32 16, %s22
      $region40: #{unet_conv_block.3} parent=35 // pred_fallthru
        _
      // Predicated region
      $region41: #{unet_conv_block.3} parent=35 // pred_check
        %p2444 = pneg %p198
      $region42: #{unet_conv_block.3} parent=35 // pred_check_branch
        %2446 = sbr.rel (%p2444) target = $region44
      $region43: #{unet_conv_block.3} parent=35 // pred_region
        _
      $region44: #{unet_conv_block.3} parent=35 // pred_fallthru
        _
    $region36: #{unet_conv_block.3} parent=5 // pred_fallthru
      _
    %p2447 = scmp.le.s32.totalorder 2, %s12
    // Predicated region
    $region45: #{unet_conv_block.3} parent=5 // pred_check
      %p2448 = pneg %p2447
    $region46: #{unet_conv_block.3} parent=5 // pred_check_branch
      %2450 = sbr.rel (%p2448) target = $region48
    $region47: #{unet_conv_block.3} parent=5 // pred_region
      %s2451 = ssub.s32 %s12, 2
      // Predicated region
      $region49: #{unet_conv_block.3} parent=47 // pred_check
        %p2452 = pneg %p176
      $region50: #{unet_conv_block.3} parent=47 // pred_check_branch
        %2454 = sbr.rel (%p2452) target = $region52
      $region51: #{unet_conv_block.3} parent=47 // pred_region
        %s2455 = smul.u32 16, %s24
        %p2456 = scmp.lt.s32.totalorder %s23, 1
        %s2457 = scalar_select %p2456, %s23, 1
        %p2458 = scmp.lt.s32.totalorder %s2455, 15
        %s2459 = scalar_select %p2458, %s2455, 15
        %s2460 = smul.addr %s2459, 2
        %s2461 = smul.addr %s2457, 32
        %s2462 = sadd.s32 %s2460, %s2461
        %s2463 = smul.addr %s2462, 8
        %s2464 = scalar_lea.vmem %s4, %s2463
      $region52: #{unet_conv_block.3} parent=47 // pred_fallthru
        _
      // Predicated region
      $region53: #{unet_conv_block.3} parent=47 // pred_check
        %p2465 = pneg %p204
      $region54: #{unet_conv_block.3} parent=47 // pred_check_branch
        %2467 = sbr.rel (%p2465) target = $region56
      $region55: #{unet_conv_block.3} parent=47 // pred_region
        %p2468 = scmp.lt.s32.totalorder %s23, 1
        %s2469 = scalar_select %p2468, %s23, 1
        %p2470 = scmp.lt.s32.totalorder %s24, 0
        %s2471 = scalar_select %p2470, %s24, 0
        %s2472 = sadd.s32 %s2471, %s2469
        %s2473 = smul.addr %s2472, 2
        %s2474 = scalar_lea.vmem %s5, %s2473
      $region56: #{unet_conv_block.3} parent=47 // pred_fallthru
        _
    $region48: #{unet_conv_block.3} parent=5 // pred_fallthru
      _
  $region6: #{unet_conv_block.3} parent=0 // loop_footer
    %s16 = sadd.s32 1, %s12
  $region7: #{unet_conv_block.3} parent=0 // loop_footer_branch
    %11 = sbr.rel target = $region3
  $region8: #{unet_conv_block.3} parent=0 // loop_exit
    _

</llo_original>
